<compile_context>
chip_gen: v5e
topology: v5e:2x2
jax: 0.10.0
libtpu: 0.0.40
codegen_flags: <defaults>
</compile_context>

<pallas_src>
import functools

import jax
import jax.numpy as jnp
import numpy as np
from jax import lax
from jax.experimental import pallas as pl
from jax.experimental.pallas import tpu as pltpu


def dual_vlad_kernel(x_ref, ct_ref, c_ref, cb_ref, vwT_ref, vb_ref, ww_ref,
                     wb_ref, o_ref, res_ref, resb_ref, sc_ref, *,
                     num_clusters, dim, frames, batch_tile):
    """Grid = (batch tiles [parallel], V-weight column tiles [arbitrary])."""
    eps2 = 1e-24  # (F.normalize default eps 1e-12)^2, used under rsqrt
    K, D, S, Bt = num_clusters, dim, frames, batch_tile
    Rt = Bt * S
    j = pl.program_id(1)

    # ---- first column step: build the NetVLAD residuals into VMEM scratch ----
    @pl.when(j == 0)
    def _build_residuals():
        x = x_ref[0]                                               # (Rt, D)
        # descriptor-wise L2 normalization (F.normalize(p=2, dim=2))
        xn = x * lax.rsqrt(jnp.maximum(jnp.sum(x * x, axis=-1, keepdims=True),
                                       eps2))
        # cluster assignment: 1x1 conv == xn @ (2*alpha*C)^T + bias; softmax over K
        # (2*alpha is pre-folded into ct by prepare_dual_vlad_params)
        logits = jnp.dot(xn, ct_ref[...],
                         preferred_element_type=jnp.float32) + cb_ref[...]
        m = jnp.max(logits, axis=-1, keepdims=True)
        e = jnp.exp(logits - m)
        a = e * pl.reciprocal(jnp.sum(e, axis=-1, keepdims=True), approx=True)
        C = c_ref[...]                                             # (K, D)
        # residual[r, k*D:(k+1)*D] = a[r, k] * (xn[r, :] - C[k, :])
        for k in range(K):
            r_k = a[:, k:k + 1] * (xn - C[k:k + 1, :])
            res_ref[:, k * D:(k + 1) * D] = r_k                    # f32 copy
            resb_ref[:, k * D:(k + 1) * D] = r_k.astype(jnp.bfloat16)  # MXU LHS
        sc_ref[...] = jnp.zeros_like(sc_ref)

    # ---- every column step: fused V-tile matmul + tanh + w-row reduction ----
    # partial = tanh(res @ VwT[:, tile] + Vb[tile]); sc += sum(partial * ww[tile])
    h = jnp.tanh(jnp.dot(resb_ref[...], vwT_ref[...],
                         preferred_element_type=jnp.float32) + vb_ref[...])
    sc_ref[...] += jnp.sum(h * ww_ref[...], axis=-1, keepdims=True)

    # ---- last column step: frame attention, MXU weighted sum, normalizations --
    @pl.when(j == pl.num_programs(1) - 1)
    def _finalize():
        sc = sc_ref[...] + wb_ref[0]          # (Rt, 1); 1/1.2 prefolded into ww/wb
        # per-batch-element softmax over frames (tiny: S values each)
        att_rows = []
        for b in range(Bt):
            sb = sc[b * S:(b + 1) * S, :]
            mb = jnp.max(sb, axis=0, keepdims=True)
            eb = jnp.exp(sb - mb)
            att_rows.append(
                eb * pl.reciprocal(jnp.sum(eb, axis=0, keepdims=True),
                                   approx=True))
        att = jnp.concatenate(att_rows, axis=0)                    # (Rt, 1)

        # attention-weighted frame sum on the MXU: block-diagonal 0/1 membership
        # mask (Bt, Rt) @ (att * res) (Rt, KD) -> (Bt, KD)
        r_idx = lax.broadcasted_iota(jnp.int32, (Bt, Rt), 1)
        b_idx = lax.broadcasted_iota(jnp.int32, (Bt, Rt), 0)
        member = jnp.logical_and(r_idx >= b_idx * S,
                                 r_idx < (b_idx + 1) * S).astype(jnp.float32)
        vlad = jnp.dot(member, att * res_ref[...],
                       preferred_element_type=jnp.float32)          # (Bt, K*D)

        # intra-normalization per cluster + global L2; store lane-aligned slices
        ssqs = [jnp.sum(vlad[:, k * D:(k + 1) * D] * vlad[:, k * D:(k + 1) * D],
                        axis=-1, keepdims=True) for k in range(K)]
        invs = [lax.rsqrt(jnp.maximum(s, eps2)) for s in ssqs]
        gss = ssqs[0] * invs[0] * invs[0]                # ||normalized cluster||^2
        for k in range(1, K):
            gss = gss + ssqs[k] * invs[k] * invs[k]
        g = lax.rsqrt(jnp.maximum(gss, eps2))                       # (Bt, 1)
        for k in range(K):
            vk = vlad[:, k * D:(k + 1) * D] * (invs[k] * g)
            o_ref[:, :, k * D:(k + 1) * D] = vk.reshape(1, Bt, D)


def prepare_dual_vlad_params(centroids, conv_bias, Vw, Vb, ww, wb, *, alpha=1.0):
    """One-time parameter layout / dtype prep, kept off the per-call path."""
    K, D = centroids.shape
    KD = K * D
    return dict(
        ct=(2.0 * alpha * centroids).T.astype(jnp.float32),  # (D, K) conv weight^T
        c=centroids.astype(jnp.float32),                     # (K, D) residual term
        cb=conv_bias.reshape(1, K).astype(jnp.float32),
        vwT=Vw.T.astype(jnp.bfloat16),                       # (KD, KD) MXU operand
        vb=Vb.reshape(1, KD).astype(jnp.float32),
        ww=(ww.reshape(1, KD) / 1.2).astype(jnp.float32),    # fold /1.2 here
        wb=(wb.reshape(1) / 1.2).astype(jnp.float32),
    )


def dual_vlad(x, params, *, rows_per_step=256, col_tile=None):
    """x: (B, S, D) descriptors. Returns (B, K*D) float32 VLAD vectors.

    rows_per_step: target MXU LHS rows per grid step (Bt*S). ~256 fills the
      256-wide MXU on v6e/v7x; 128 suffices for v5e's 128-wide MXU.
    col_tile: streamed V-weight column-tile width (multiple of 128 dividing
      K*D). Default min(KD, 1024) keeps the bf16 tile <= 16 MiB at KD=8192.
    """
    B, S, D = x.shape
    K, _ = params["c"].shape
    KD = K * D

    # batch elements per grid step; no multiple-of-8 rounding needed because the
    # batch-tile axis is a leading size-1 block dim on both x and the output.
    Bt = max(1, min(B, rows_per_step // max(S, 1)))
    nbt = pl.cdiv(B, Bt)
    Bp = nbt * Bt
    Rt = Bt * S

    if col_tile is None:
        col_tile = min(KD, 1024)
    Nc = min(col_tile, KD)
    assert KD % Nc == 0 and Nc % 128 == 0, \
        "col_tile must divide K*D and be a multiple of 128"
    n_col = KD // Nc

    xf = x.astype(jnp.float32)
    if Bp != B:
        xf = jnp.pad(xf, ((0, Bp - B), (0, 0), (0, 0)))
    x3 = xf.reshape(nbt, Rt, D)               # (batch tiles, rows per tile, D)

    kernel = functools.partial(dual_vlad_kernel, num_clusters=K, dim=D,
                               frames=S, batch_tile=Bt)

    # scoped-VMEM budget (v5e default is only 16 MiB; cap at a v7x-safe 64 MiB)
    est = (2 * Rt * D * 4               # x block, double buffered
           + 2 * KD * Nc * 2            # streamed bf16 V-weight column tile
           + 2 * Bt * KD * 4            # output block
           + Rt * KD * (4 + 2)          # f32 + bf16 residual scratch
           + 2 * 2 * 2 * Nc * 4         # Vb / ww column tiles
           + (D * K + K * D + K) * 4 * 2)
    vmem_limit = int(min(64 * 2**20, max(32 * 2**20, int(1.25 * est))))

    out = pl.pallas_call(
        kernel,
        out_shape=jax.ShapeDtypeStruct((nbt, Bt, KD), jnp.float32),
        grid_spec=pltpu.PrefetchScalarGridSpec(
            num_scalar_prefetch=0,
            grid=(nbt, n_col),
            in_specs=[
                pl.BlockSpec((1, Rt, D), lambda i, j: (i, 0, 0)),   # x batch tile
                pl.BlockSpec((D, K), lambda i, j: (0, 0)),          # (2*alpha*C)^T
                pl.BlockSpec((K, D), lambda i, j: (0, 0)),          # centroids
                pl.BlockSpec((1, K), lambda i, j: (0, 0)),          # conv bias
                pl.BlockSpec((KD, Nc), lambda i, j: (0, j)),        # V weight col tile (bf16)
                pl.BlockSpec((1, Nc), lambda i, j: (0, j)),         # V bias tile
                pl.BlockSpec((1, Nc), lambda i, j: (0, j)),         # w weight tile (pre /1.2)
                pl.BlockSpec(memory_space=pltpu.MemorySpace.SMEM),  # w bias scalar
            ],
            out_specs=pl.BlockSpec((1, Bt, KD), lambda i, j: (i, 0, 0)),
            scratch_shapes=[
                pltpu.VMEM((Rt, KD), jnp.float32),    # residuals (f32, attention sum)
                pltpu.VMEM((Rt, KD), jnp.bfloat16),   # residuals (bf16 MXU LHS, cast once)
                pltpu.VMEM((Rt, 1), jnp.float32),     # fused attention-score accumulator
            ],
        ),
        compiler_params=pltpu.CompilerParams(
            dimension_semantics=("parallel", "arbitrary"),
            vmem_limit_bytes=vmem_limit),
    )(x3, params["ct"], params["c"], params["cb"], params["vwT"],
      params["vb"], params["ww"], params["wb"])

    return out.reshape(Bp, KD)[:B]


def ref_forward(x, centroids, conv_bias, Vw, Vb, ww, wb, alpha=1.0):
    """Pure-JAX reference of the PyTorch forward pass."""
    eps = 1e-12
    B, S, D = x.shape
    K = centroids.shape[0]
    xn = x / jnp.maximum(jnp.linalg.norm(x, axis=2, keepdims=True), eps)
    logits = 2.0 * alpha * jnp.einsum('bsd,kd->bsk', xn, centroids) + conv_bias
    a = jax.nn.softmax(logits, axis=-1)                                   # (B,S,K)
    res = a[..., None] * (xn[:, :, None, :] - centroids[None, None, :, :])
    res = res.reshape(B, S, K * D)
    h = jnp.tanh(res @ Vw.T + Vb)
    sc = (h @ ww.T + wb) / 1.2                                            # (B,S,1)
    att = jax.nn.softmax(sc[..., 0], axis=-1)                             # (B,S)
    vlad = jnp.einsum('bs,bsf->bf', att, res).reshape(B, K, D)
    vlad = vlad / jnp.maximum(jnp.linalg.norm(vlad, axis=2, keepdims=True), eps)
    vlad = vlad.reshape(B, K * D)
    vlad = vlad / jnp.maximum(jnp.linalg.norm(vlad, axis=1, keepdims=True), eps)
    return vlad


if __name__ == "__main__":
    # Small shapes; D=128 keeps lanes aligned.  B=20 with rows_per_step=128
    # forces Bt=16 -> a 2-step parallel batch axis (padded to 32 elements), and
    # col_tile=256 gives a 2-step streamed-weight axis, exercising both the
    # residual-build / score-accumulate and finalize paths.
    B, S, D, K = 20, 8, 128, 4
    alpha = 1.0
    KD = K * D

    key = jax.random.PRNGKey(0)
    kx, kc, kvw, kvb, kww, kwb = jax.random.split(key, 6)

    x = jax.random.normal(kx, (B, S, D), dtype=jnp.float32)
    centroids = jax.random.uniform(kc, (K, D), dtype=jnp.float32)     # torch.rand analogue
    conv_bias = -alpha * jnp.linalg.norm(centroids, axis=1)           # _init_params
    Vw = 0.05 * jax.random.normal(kvw, (KD, KD), dtype=jnp.float32)   # nn.Linear(KD, KD)
    Vb = 0.05 * jax.random.normal(kvb, (KD,), dtype=jnp.float32)
    ww = 0.05 * jax.random.normal(kww, (1, KD), dtype=jnp.float32)    # nn.Linear(KD, 1)
    wb = 0.05 * jax.random.normal(kwb, (1,), dtype=jnp.float32)

    params = prepare_dual_vlad_params(centroids, conv_bias, Vw, Vb, ww, wb,
                                      alpha=alpha)
    out = jax.block_until_ready(
        dual_vlad(x, params, rows_per_step=128, col_tile=256))

    ref = jax.block_until_ready(
        ref_forward(x, centroids, conv_bias, Vw, Vb, ww, wb, alpha))
    # bf16 V weight / residual cast + approx EUP reciprocals -> slightly looser
    # tolerance than pure f32.
    np.testing.assert_allclose(np.asarray(out), np.asarray(ref),
                               rtol=2e-2, atol=2e-2)

    print("KERNEL_OK")
</pallas_src>

<mosaic_0001>
module attributes {stable_mosaic.version = 11 : i64} {
  func.func @dual_vlad_kernel(%arg0: i32, %arg1: i32, %arg2: memref<1x128x128xf32, #tpu.memory_space<vmem>>, %arg3: memref<128x4xf32, #tpu.memory_space<vmem>>, %arg4: memref<4x128xf32, #tpu.memory_space<vmem>>, %arg5: memref<1x4xf32, #tpu.memory_space<vmem>>, %arg6: memref<512x256xbf16, #tpu.memory_space<vmem>>, %arg7: memref<1x256xf32, #tpu.memory_space<vmem>>, %arg8: memref<1x256xf32, #tpu.memory_space<vmem>>, %arg9: memref<1xf32, #tpu.memory_space<smem>>, %arg10: memref<1x16x512xf32, #tpu.memory_space<vmem>>, %arg11: memref<128x512xf32, #tpu.memory_space<vmem>>, %arg12: memref<128x512xbf16, #tpu.memory_space<vmem>>, %arg13: memref<128x1xf32, #tpu.memory_space<vmem>>) attributes {dimension_semantics = [#tpu.dimension_semantics<parallel>, #tpu.dimension_semantics<arbitrary>], iteration_bounds = array<i64: 2, 2>, scalar_prefetch = 0 : i64, scratch_operands = 3 : i64, tpu.core_type = #tpu.core_type<tc>, window_params = [{transform_indices = @transform_0, window_bounds = array<i64: 1, 128, 128>}, {pipeline_mode = #tpu.pipeline_mode<synchronous>, transform_indices = @transform_1, window_bounds = array<i64: 128, 4>}, {pipeline_mode = #tpu.pipeline_mode<synchronous>, transform_indices = @transform_2, window_bounds = array<i64: 4, 128>}, {pipeline_mode = #tpu.pipeline_mode<synchronous>, transform_indices = @transform_3, window_bounds = array<i64: 1, 4>}, {transform_indices = @transform_4, window_bounds = array<i64: 512, 256>}, {transform_indices = @transform_5, window_bounds = array<i64: 1, 256>}, {transform_indices = @transform_6, window_bounds = array<i64: 1, 256>}, {transform_indices = @transform_7, window_bounds = array<i64: 1>}, {transform_indices = @transform_8, window_bounds = array<i64: 1, 16, 512>}]} {
    %c0_i32 = arith.constant 0 : i32
    %0 = arith.cmpi eq, %arg1, %c0_i32 : i32
    %1 = arith.extui %0 : i1 to i32
    %c0_i32_0 = arith.constant 0 : i32
    %2 = arith.cmpi ne, %1, %c0_i32_0 : i32
    scf.if %2 {
      %c0_14 = arith.constant 0 : index
      %c0_15 = arith.constant 0 : index
      %c0_16 = arith.constant 0 : index
      %21 = vector.load %arg2[%c0_14, %c0_15, %c0_16] : memref<1x128x128xf32, #tpu.memory_space<vmem>>, vector<1x128x128xf32>
      %22 = vector.shape_cast %21 : vector<1x128x128xf32> to vector<128x128xf32>
      %23 = arith.mulf %22, %22 : vector<128x128xf32>
      %cst_17 = arith.constant dense<0.000000e+00> : vector<128xf32>
      %24 = vector.multi_reduction <add>, %23, %cst_17 [1] : vector<128x128xf32> to vector<128xf32>
      %25 = vector.shape_cast %24 : vector<128xf32> to vector<128x1xf32>
      %cst_18 = arith.constant 1.000000e-24 : f32
      %26 = vector.broadcast %cst_18 : f32 to vector<128x1xf32>
      %27 = arith.maximumf %25, %26 : vector<128x1xf32>
      %28 = math.rsqrt %27 : vector<128x1xf32>
      %29 = vector.broadcast %28 : vector<128x1xf32> to vector<128x128xf32>
      %30 = arith.mulf %22, %29 : vector<128x128xf32>
      %c0_19 = arith.constant 0 : index
      %c0_20 = arith.constant 0 : index
      %31 = vector.load %arg3[%c0_19, %c0_20] : memref<128x4xf32, #tpu.memory_space<vmem>>, vector<128x4xf32>
      %cst_21 = arith.constant dense<0.000000e+00> : vector<128x4xf32>
      %32 = tpu.matmul %30, %31, %cst_21 {dimension_numbers = #tpu.dot_dimension_numbers<[1], [0], [0], [1], [0, 0, 1, 1], [], []>} : vector<128x128xf32>, vector<128x4xf32>, vector<128x4xf32> -> vector<128x4xf32>
      %c0_22 = arith.constant 0 : index
      %c0_23 = arith.constant 0 : index
      %33 = vector.load %arg5[%c0_22, %c0_23] : memref<1x4xf32, #tpu.memory_space<vmem>>, vector<1x4xf32>
      %34 = vector.broadcast %33 : vector<1x4xf32> to vector<128x4xf32>
      %35 = arith.addf %32, %34 : vector<128x4xf32>
      %cst_24 = arith.constant dense<0xFF800000> : vector<128xf32>
      %36 = vector.multi_reduction <maximumf>, %35, %cst_24 [1] : vector<128x4xf32> to vector<128xf32>
      %37 = vector.shape_cast %36 : vector<128xf32> to vector<128x1xf32>
      %38 = vector.broadcast %37 : vector<128x1xf32> to vector<128x4xf32>
      %39 = arith.subf %35, %38 : vector<128x4xf32>
      %40 = math.exp %39 : vector<128x4xf32>
      %cst_25 = arith.constant dense<0.000000e+00> : vector<128xf32>
      %41 = vector.multi_reduction <add>, %40, %cst_25 [1] : vector<128x4xf32> to vector<128xf32>
      %42 = vector.shape_cast %41 : vector<128xf32> to vector<128x1xf32>
      %43 = tpu.reciprocal %42 {approx = true} : vector<128x1xf32> -> vector<128x1xf32>
      %44 = vector.broadcast %43 : vector<128x1xf32> to vector<128x4xf32>
      %45 = arith.mulf %40, %44 : vector<128x4xf32>
      %c0_26 = arith.constant 0 : index
      %c0_27 = arith.constant 0 : index
      %46 = vector.load %arg4[%c0_26, %c0_27] : memref<4x128xf32, #tpu.memory_space<vmem>>, vector<4x128xf32>
      %47 = vector.extract_strided_slice %45 {offsets = [0, 0], sizes = [128, 1], strides = [1, 1]} : vector<128x4xf32> to vector<128x1xf32>
      %48 = vector.extract_strided_slice %46 {offsets = [0, 0], sizes = [1, 128], strides = [1, 1]} : vector<4x128xf32> to vector<1x128xf32>
      %49 = vector.broadcast %48 : vector<1x128xf32> to vector<128x128xf32>
      %50 = arith.subf %30, %49 : vector<128x128xf32>
      %51 = vector.broadcast %47 : vector<128x1xf32> to vector<128x128xf32>
      %52 = arith.mulf %51, %50 : vector<128x128xf32>
      %c0_28 = arith.constant 0 : index
      %c0_29 = arith.constant 0 : index
      %53 = vector.load %arg11[%c0_28, %c0_29] : memref<128x512xf32, #tpu.memory_space<vmem>>, vector<128x128xf32>
      tpu.vector_store %arg11[%c0_28, %c0_29], %52 {strides = array<i32>} : memref<128x512xf32, #tpu.memory_space<vmem>>, vector<128x128xf32>,
      %54 = arith.truncf %52 : vector<128x128xf32> to vector<128x128xbf16>
      %c0_30 = arith.constant 0 : index
      %c0_31 = arith.constant 0 : index
      %55 = vector.load %arg12[%c0_30, %c0_31] : memref<128x512xbf16, #tpu.memory_space<vmem>>, vector<128x128xbf16>
      tpu.vector_store %arg12[%c0_30, %c0_31], %54 {strides = array<i32>} : memref<128x512xbf16, #tpu.memory_space<vmem>>, vector<128x128xbf16>,
      %56 = vector.extract_strided_slice %45 {offsets = [0, 1], sizes = [128, 1], strides = [1, 1]} : vector<128x4xf32> to vector<128x1xf32>
      %57 = vector.extract_strided_slice %46 {offsets = [1, 0], sizes = [1, 128], strides = [1, 1]} : vector<4x128xf32> to vector<1x128xf32>
      %58 = vector.broadcast %57 : vector<1x128xf32> to vector<128x128xf32>
      %59 = arith.subf %30, %58 : vector<128x128xf32>
      %60 = vector.broadcast %56 : vector<128x1xf32> to vector<128x128xf32>
      %61 = arith.mulf %60, %59 : vector<128x128xf32>
      %c0_32 = arith.constant 0 : index
      %c128 = arith.constant 128 : index
      %62 = vector.load %arg11[%c0_32, %c128] : memref<128x512xf32, #tpu.memory_space<vmem>>, vector<128x128xf32>
      tpu.vector_store %arg11[%c0_32, %c128], %61 {strides = array<i32>} : memref<128x512xf32, #tpu.memory_space<vmem>>, vector<128x128xf32>,
      %63 = arith.truncf %61 : vector<128x128xf32> to vector<128x128xbf16>
      %c0_33 = arith.constant 0 : index
      %c128_34 = arith.constant 128 : index
      %64 = vector.load %arg12[%c0_33, %c128_34] : memref<128x512xbf16, #tpu.memory_space<vmem>>, vector<128x128xbf16>
      tpu.vector_store %arg12[%c0_33, %c128_34], %63 {strides = array<i32>} : memref<128x512xbf16, #tpu.memory_space<vmem>>, vector<128x128xbf16>,
      %65 = vector.extract_strided_slice %45 {offsets = [0, 2], sizes = [128, 1], strides = [1, 1]} : vector<128x4xf32> to vector<128x1xf32>
      %66 = vector.extract_strided_slice %46 {offsets = [2, 0], sizes = [1, 128], strides = [1, 1]} : vector<4x128xf32> to vector<1x128xf32>
      %67 = vector.broadcast %66 : vector<1x128xf32> to vector<128x128xf32>
      %68 = arith.subf %30, %67 : vector<128x128xf32>
      %69 = vector.broadcast %65 : vector<128x1xf32> to vector<128x128xf32>
      %70 = arith.mulf %69, %68 : vector<128x128xf32>
      %c0_35 = arith.constant 0 : index
      %c256 = arith.constant 256 : index
      %71 = vector.load %arg11[%c0_35, %c256] : memref<128x512xf32, #tpu.memory_space<vmem>>, vector<128x128xf32>
      tpu.vector_store %arg11[%c0_35, %c256], %70 {strides = array<i32>} : memref<128x512xf32, #tpu.memory_space<vmem>>, vector<128x128xf32>,
      %72 = arith.truncf %70 : vector<128x128xf32> to vector<128x128xbf16>
      %c0_36 = arith.constant 0 : index
      %c256_37 = arith.constant 256 : index
      %73 = vector.load %arg12[%c0_36, %c256_37] : memref<128x512xbf16, #tpu.memory_space<vmem>>, vector<128x128xbf16>
      tpu.vector_store %arg12[%c0_36, %c256_37], %72 {strides = array<i32>} : memref<128x512xbf16, #tpu.memory_space<vmem>>, vector<128x128xbf16>,
      %74 = vector.extract_strided_slice %45 {offsets = [0, 3], sizes = [128, 1], strides = [1, 1]} : vector<128x4xf32> to vector<128x1xf32>
      %75 = vector.extract_strided_slice %46 {offsets = [3, 0], sizes = [1, 128], strides = [1, 1]} : vector<4x128xf32> to vector<1x128xf32>
      %76 = vector.broadcast %75 : vector<1x128xf32> to vector<128x128xf32>
      %77 = arith.subf %30, %76 : vector<128x128xf32>
      %78 = vector.broadcast %74 : vector<128x1xf32> to vector<128x128xf32>
      %79 = arith.mulf %78, %77 : vector<128x128xf32>
      %c0_38 = arith.constant 0 : index
      %c384 = arith.constant 384 : index
      %80 = vector.load %arg11[%c0_38, %c384] : memref<128x512xf32, #tpu.memory_space<vmem>>, vector<128x128xf32>
      tpu.vector_store %arg11[%c0_38, %c384], %79 {strides = array<i32>} : memref<128x512xf32, #tpu.memory_space<vmem>>, vector<128x128xf32>,
      %81 = arith.truncf %79 : vector<128x128xf32> to vector<128x128xbf16>
      %c0_39 = arith.constant 0 : index
      %c384_40 = arith.constant 384 : index
      %82 = vector.load %arg12[%c0_39, %c384_40] : memref<128x512xbf16, #tpu.memory_space<vmem>>, vector<128x128xbf16>
      tpu.vector_store %arg12[%c0_39, %c384_40], %81 {strides = array<i32>} : memref<128x512xbf16, #tpu.memory_space<vmem>>, vector<128x128xbf16>,
      %cst_41 = arith.constant 0.000000e+00 : f32
      %83 = vector.broadcast %cst_41 : f32 to vector<128x1xf32>
      %c0_42 = arith.constant 0 : index
      %c0_43 = arith.constant 0 : index
      %84 = vector.load %arg13[%c0_42, %c0_43] : memref<128x1xf32, #tpu.memory_space<vmem>>, vector<128x1xf32>
      tpu.vector_store %arg13[%c0_42, %c0_43], %83 {strides = array<i32>} : memref<128x1xf32, #tpu.memory_space<vmem>>, vector<128x1xf32>,
    } else {
    }
    %c0 = arith.constant 0 : index
    %c0_1 = arith.constant 0 : index
    %3 = vector.load %arg12[%c0, %c0_1] : memref<128x512xbf16, #tpu.memory_space<vmem>>, vector<128x512xbf16>
    %c0_2 = arith.constant 0 : index
    %c0_3 = arith.constant 0 : index
    %4 = vector.load %arg6[%c0_2, %c0_3] : memref<512x256xbf16, #tpu.memory_space<vmem>>, vector<512x256xbf16>
    %cst = arith.constant dense<0.000000e+00> : vector<128x256xf32>
    %5 = tpu.matmul %3, %4, %cst {dimension_numbers = #tpu.dot_dimension_numbers<[1], [0], [0], [1], [0, 0, 1, 1], [], []>} : vector<128x512xbf16>, vector<512x256xbf16>, vector<128x256xf32> -> vector<128x256xf32>
    %c0_4 = arith.constant 0 : index
    %c0_5 = arith.constant 0 : index
    %6 = vector.load %arg7[%c0_4, %c0_5] : memref<1x256xf32, #tpu.memory_space<vmem>>, vector<1x256xf32>
    %7 = vector.broadcast %6 : vector<1x256xf32> to vector<128x256xf32>
    %8 = arith.addf %5, %7 : vector<128x256xf32>
    %9 = math.tanh %8 : vector<128x256xf32>
    %c0_6 = arith.constant 0 : index
    %c0_7 = arith.constant 0 : index
    %10 = vector.load %arg13[%c0_6, %c0_7] : memref<128x1xf32, #tpu.memory_space<vmem>>, vector<128x1xf32>
    %c0_8 = arith.constant 0 : index
    %c0_9 = arith.constant 0 : index
    %11 = vector.load %arg8[%c0_8, %c0_9] : memref<1x256xf32, #tpu.memory_space<vmem>>, vector<1x256xf32>
    %12 = vector.broadcast %11 : vector<1x256xf32> to vector<128x256xf32>
    %13 = arith.mulf %9, %12 : vector<128x256xf32>
    %cst_10 = arith.constant dense<0.000000e+00> : vector<128xf32>
    %14 = vector.multi_reduction <add>, %13, %cst_10 [1] : vector<128x256xf32> to vector<128xf32>
    %15 = vector.shape_cast %14 : vector<128xf32> to vector<128x1xf32>
    %16 = arith.addf %10, %15 : vector<128x1xf32>
    %c0_11 = arith.constant 0 : index
    %c0_12 = arith.constant 0 : index
    %17 = vector.load %arg13[%c0_11, %c0_12] : memref<128x1xf32, #tpu.memory_space<vmem>>, vector<128x1xf32>
    tpu.vector_store %arg13[%c0_11, %c0_12], %16 {strides = array<i32>} : memref<128x1xf32, #tpu.memory_space<vmem>>, vector<128x1xf32>,
    %c1_i32 = arith.constant 1 : i32
    %18 = arith.cmpi eq, %arg1, %c1_i32 : i32
    %19 = arith.extui %18 : i1 to i32
    %c0_i32_13 = arith.constant 0 : i32
    %20 = arith.cmpi ne, %19, %c0_i32_13 : i32
    scf.if %20 {
      %c0_14 = arith.constant 0 : index
      %c0_15 = arith.constant 0 : index
      %21 = vector.load %arg13[%c0_14, %c0_15] : memref<128x1xf32, #tpu.memory_space<vmem>>, vector<128x1xf32>
      %c0_16 = arith.constant 0 : index
      %22 = memref.load %arg9[%c0_16] : memref<1xf32, #tpu.memory_space<smem>>
      %23 = vector.broadcast %22 : f32 to vector<128x1xf32>
      %24 = arith.addf %21, %23 : vector<128x1xf32>
      %25 = vector.extract_strided_slice %24 {offsets = [0, 0], sizes = [8, 1], strides = [1, 1]} : vector<128x1xf32> to vector<8x1xf32>
      %cst_17 = arith.constant dense<0xFF800000> : vector<1xf32>
      %26 = vector.multi_reduction <maximumf>, %25, %cst_17 [0] : vector<8x1xf32> to vector<1xf32>
      %27 = vector.shape_cast %26 : vector<1xf32> to vector<1x1xf32>
      %28 = vector.broadcast %27 : vector<1x1xf32> to vector<8x1xf32>
      %29 = arith.subf %25, %28 : vector<8x1xf32>
      %30 = math.exp %29 : vector<8x1xf32>
      %cst_18 = arith.constant dense<0.000000e+00> : vector<1xf32>
      %31 = vector.multi_reduction <add>, %30, %cst_18 [0] : vector<8x1xf32> to vector<1xf32>
      %32 = vector.shape_cast %31 : vector<1xf32> to vector<1x1xf32>
      %33 = tpu.reciprocal %32 {approx = true} : vector<1x1xf32> -> vector<1x1xf32>
      %34 = vector.broadcast %33 : vector<1x1xf32> to vector<8x1xf32>
      %35 = arith.mulf %30, %34 : vector<8x1xf32>
      %36 = vector.extract_strided_slice %24 {offsets = [8, 0], sizes = [8, 1], strides = [1, 1]} : vector<128x1xf32> to vector<8x1xf32>
      %cst_19 = arith.constant dense<0xFF800000> : vector<1xf32>
      %37 = vector.multi_reduction <maximumf>, %36, %cst_19 [0] : vector<8x1xf32> to vector<1xf32>
      %38 = vector.shape_cast %37 : vector<1xf32> to vector<1x1xf32>
      %39 = vector.broadcast %38 : vector<1x1xf32> to vector<8x1xf32>
      %40 = arith.subf %36, %39 : vector<8x1xf32>
      %41 = math.exp %40 : vector<8x1xf32>
      %cst_20 = arith.constant dense<0.000000e+00> : vector<1xf32>
      %42 = vector.multi_reduction <add>, %41, %cst_20 [0] : vector<8x1xf32> to vector<1xf32>
      %43 = vector.shape_cast %42 : vector<1xf32> to vector<1x1xf32>
      %44 = tpu.reciprocal %43 {approx = true} : vector<1x1xf32> -> vector<1x1xf32>
      %45 = vector.broadcast %44 : vector<1x1xf32> to vector<8x1xf32>
      %46 = arith.mulf %41, %45 : vector<8x1xf32>
      %47 = vector.extract_strided_slice %24 {offsets = [16, 0], sizes = [8, 1], strides = [1, 1]} : vector<128x1xf32> to vector<8x1xf32>
      %cst_21 = arith.constant dense<0xFF800000> : vector<1xf32>
      %48 = vector.multi_reduction <maximumf>, %47, %cst_21 [0] : vector<8x1xf32> to vector<1xf32>
      %49 = vector.shape_cast %48 : vector<1xf32> to vector<1x1xf32>
      %50 = vector.broadcast %49 : vector<1x1xf32> to vector<8x1xf32>
      %51 = arith.subf %47, %50 : vector<8x1xf32>
      %52 = math.exp %51 : vector<8x1xf32>
      %cst_22 = arith.constant dense<0.000000e+00> : vector<1xf32>
      %53 = vector.multi_reduction <add>, %52, %cst_22 [0] : vector<8x1xf32> to vector<1xf32>
      %54 = vector.shape_cast %53 : vector<1xf32> to vector<1x1xf32>
      %55 = tpu.reciprocal %54 {approx = true} : vector<1x1xf32> -> vector<1x1xf32>
      %56 = vector.broadcast %55 : vector<1x1xf32> to vector<8x1xf32>
      %57 = arith.mulf %52, %56 : vector<8x1xf32>
      %58 = vector.extract_strided_slice %24 {offsets = [24, 0], sizes = [8, 1], strides = [1, 1]} : vector<128x1xf32> to vector<8x1xf32>
      %cst_23 = arith.constant dense<0xFF800000> : vector<1xf32>
      %59 = vector.multi_reduction <maximumf>, %58, %cst_23 [0] : vector<8x1xf32> to vector<1xf32>
      %60 = vector.shape_cast %59 : vector<1xf32> to vector<1x1xf32>
      %61 = vector.broadcast %60 : vector<1x1xf32> to vector<8x1xf32>
      %62 = arith.subf %58, %61 : vector<8x1xf32>
      %63 = math.exp %62 : vector<8x1xf32>
      %cst_24 = arith.constant dense<0.000000e+00> : vector<1xf32>
      %64 = vector.multi_reduction <add>, %63, %cst_24 [0] : vector<8x1xf32> to vector<1xf32>
      %65 = vector.shape_cast %64 : vector<1xf32> to vector<1x1xf32>
      %66 = tpu.reciprocal %65 {approx = true} : vector<1x1xf32> -> vector<1x1xf32>
      %67 = vector.broadcast %66 : vector<1x1xf32> to vector<8x1xf32>
      %68 = arith.mulf %63, %67 : vector<8x1xf32>
      %69 = vector.extract_strided_slice %24 {offsets = [32, 0], sizes = [8, 1], strides = [1, 1]} : vector<128x1xf32> to vector<8x1xf32>
      %cst_25 = arith.constant dense<0xFF800000> : vector<1xf32>
      %70 = vector.multi_reduction <maximumf>, %69, %cst_25 [0] : vector<8x1xf32> to vector<1xf32>
      %71 = vector.shape_cast %70 : vector<1xf32> to vector<1x1xf32>
      %72 = vector.broadcast %71 : vector<1x1xf32> to vector<8x1xf32>
      %73 = arith.subf %69, %72 : vector<8x1xf32>
      %74 = math.exp %73 : vector<8x1xf32>
      %cst_26 = arith.constant dense<0.000000e+00> : vector<1xf32>
      %75 = vector.multi_reduction <add>, %74, %cst_26 [0] : vector<8x1xf32> to vector<1xf32>
      %76 = vector.shape_cast %75 : vector<1xf32> to vector<1x1xf32>
      %77 = tpu.reciprocal %76 {approx = true} : vector<1x1xf32> -> vector<1x1xf32>
      %78 = vector.broadcast %77 : vector<1x1xf32> to vector<8x1xf32>
      %79 = arith.mulf %74, %78 : vector<8x1xf32>
      %80 = vector.extract_strided_slice %24 {offsets = [40, 0], sizes = [8, 1], strides = [1, 1]} : vector<128x1xf32> to vector<8x1xf32>
      %cst_27 = arith.constant dense<0xFF800000> : vector<1xf32>
      %81 = vector.multi_reduction <maximumf>, %80, %cst_27 [0] : vector<8x1xf32> to vector<1xf32>
      %82 = vector.shape_cast %81 : vector<1xf32> to vector<1x1xf32>
      %83 = vector.broadcast %82 : vector<1x1xf32> to vector<8x1xf32>
      %84 = arith.subf %80, %83 : vector<8x1xf32>
      %85 = math.exp %84 : vector<8x1xf32>
      %cst_28 = arith.constant dense<0.000000e+00> : vector<1xf32>
      %86 = vector.multi_reduction <add>, %85, %cst_28 [0] : vector<8x1xf32> to vector<1xf32>
      %87 = vector.shape_cast %86 : vector<1xf32> to vector<1x1xf32>
      %88 = tpu.reciprocal %87 {approx = true} : vector<1x1xf32> -> vector<1x1xf32>
      %89 = vector.broadcast %88 : vector<1x1xf32> to vector<8x1xf32>
      %90 = arith.mulf %85, %89 : vector<8x1xf32>
      %91 = vector.extract_strided_slice %24 {offsets = [48, 0], sizes = [8, 1], strides = [1, 1]} : vector<128x1xf32> to vector<8x1xf32>
      %cst_29 = arith.constant dense<0xFF800000> : vector<1xf32>
      %92 = vector.multi_reduction <maximumf>, %91, %cst_29 [0] : vector<8x1xf32> to vector<1xf32>
      %93 = vector.shape_cast %92 : vector<1xf32> to vector<1x1xf32>
      %94 = vector.broadcast %93 : vector<1x1xf32> to vector<8x1xf32>
      %95 = arith.subf %91, %94 : vector<8x1xf32>
      %96 = math.exp %95 : vector<8x1xf32>
      %cst_30 = arith.constant dense<0.000000e+00> : vector<1xf32>
      %97 = vector.multi_reduction <add>, %96, %cst_30 [0] : vector<8x1xf32> to vector<1xf32>
      %98 = vector.shape_cast %97 : vector<1xf32> to vector<1x1xf32>
      %99 = tpu.reciprocal %98 {approx = true} : vector<1x1xf32> -> vector<1x1xf32>
      %100 = vector.broadcast %99 : vector<1x1xf32> to vector<8x1xf32>
      %101 = arith.mulf %96, %100 : vector<8x1xf32>
      %102 = vector.extract_strided_slice %24 {offsets = [56, 0], sizes = [8, 1], strides = [1, 1]} : vector<128x1xf32> to vector<8x1xf32>
      %cst_31 = arith.constant dense<0xFF800000> : vector<1xf32>
      %103 = vector.multi_reduction <maximumf>, %102, %cst_31 [0] : vector<8x1xf32> to vector<1xf32>
      %104 = vector.shape_cast %103 : vector<1xf32> to vector<1x1xf32>
      %105 = vector.broadcast %104 : vector<1x1xf32> to vector<8x1xf32>
      %106 = arith.subf %102, %105 : vector<8x1xf32>
      %107 = math.exp %106 : vector<8x1xf32>
      %cst_32 = arith.constant dense<0.000000e+00> : vector<1xf32>
      %108 = vector.multi_reduction <add>, %107, %cst_32 [0] : vector<8x1xf32> to vector<1xf32>
      %109 = vector.shape_cast %108 : vector<1xf32> to vector<1x1xf32>
      %110 = tpu.reciprocal %109 {approx = true} : vector<1x1xf32> -> vector<1x1xf32>
      %111 = vector.broadcast %110 : vector<1x1xf32> to vector<8x1xf32>
      %112 = arith.mulf %107, %111 : vector<8x1xf32>
      %113 = vector.extract_strided_slice %24 {offsets = [64, 0], sizes = [8, 1], strides = [1, 1]} : vector<128x1xf32> to vector<8x1xf32>
      %cst_33 = arith.constant dense<0xFF800000> : vector<1xf32>
      %114 = vector.multi_reduction <maximumf>, %113, %cst_33 [0] : vector<8x1xf32> to vector<1xf32>
      %115 = vector.shape_cast %114 : vector<1xf32> to vector<1x1xf32>
      %116 = vector.broadcast %115 : vector<1x1xf32> to vector<8x1xf32>
      %117 = arith.subf %113, %116 : vector<8x1xf32>
      %118 = math.exp %117 : vector<8x1xf32>
      %cst_34 = arith.constant dense<0.000000e+00> : vector<1xf32>
      %119 = vector.multi_reduction <add>, %118, %cst_34 [0] : vector<8x1xf32> to vector<1xf32>
      %120 = vector.shape_cast %119 : vector<1xf32> to vector<1x1xf32>
      %121 = tpu.reciprocal %120 {approx = true} : vector<1x1xf32> -> vector<1x1xf32>
      %122 = vector.broadcast %121 : vector<1x1xf32> to vector<8x1xf32>
      %123 = arith.mulf %118, %122 : vector<8x1xf32>
      %124 = vector.extract_strided_slice %24 {offsets = [72, 0], sizes = [8, 1], strides = [1, 1]} : vector<128x1xf32> to vector<8x1xf32>
      %cst_35 = arith.constant dense<0xFF800000> : vector<1xf32>
      %125 = vector.multi_reduction <maximumf>, %124, %cst_35 [0] : vector<8x1xf32> to vector<1xf32>
      %126 = vector.shape_cast %125 : vector<1xf32> to vector<1x1xf32>
      %127 = vector.broadcast %126 : vector<1x1xf32> to vector<8x1xf32>
      %128 = arith.subf %124, %127 : vector<8x1xf32>
      %129 = math.exp %128 : vector<8x1xf32>
      %cst_36 = arith.constant dense<0.000000e+00> : vector<1xf32>
      %130 = vector.multi_reduction <add>, %129, %cst_36 [0] : vector<8x1xf32> to vector<1xf32>
      %131 = vector.shape_cast %130 : vector<1xf32> to vector<1x1xf32>
      %132 = tpu.reciprocal %131 {approx = true} : vector<1x1xf32> -> vector<1x1xf32>
      %133 = vector.broadcast %132 : vector<1x1xf32> to vector<8x1xf32>
      %134 = arith.mulf %129, %133 : vector<8x1xf32>
      %135 = vector.extract_strided_slice %24 {offsets = [80, 0], sizes = [8, 1], strides = [1, 1]} : vector<128x1xf32> to vector<8x1xf32>
      %cst_37 = arith.constant dense<0xFF800000> : vector<1xf32>
      %136 = vector.multi_reduction <maximumf>, %135, %cst_37 [0] : vector<8x1xf32> to vector<1xf32>
      %137 = vector.shape_cast %136 : vector<1xf32> to vector<1x1xf32>
      %138 = vector.broadcast %137 : vector<1x1xf32> to vector<8x1xf32>
      %139 = arith.subf %135, %138 : vector<8x1xf32>
      %140 = math.exp %139 : vector<8x1xf32>
      %cst_38 = arith.constant dense<0.000000e+00> : vector<1xf32>
      %141 = vector.multi_reduction <add>, %140, %cst_38 [0] : vector<8x1xf32> to vector<1xf32>
      %142 = vector.shape_cast %141 : vector<1xf32> to vector<1x1xf32>
      %143 = tpu.reciprocal %142 {approx = true} : vector<1x1xf32> -> vector<1x1xf32>
      %144 = vector.broadcast %143 : vector<1x1xf32> to vector<8x1xf32>
      %145 = arith.mulf %140, %144 : vector<8x1xf32>
      %146 = vector.extract_strided_slice %24 {offsets = [88, 0], sizes = [8, 1], strides = [1, 1]} : vector<128x1xf32> to vector<8x1xf32>
      %cst_39 = arith.constant dense<0xFF800000> : vector<1xf32>
      %147 = vector.multi_reduction <maximumf>, %146, %cst_39 [0] : vector<8x1xf32> to vector<1xf32>
      %148 = vector.shape_cast %147 : vector<1xf32> to vector<1x1xf32>
      %149 = vector.broadcast %148 : vector<1x1xf32> to vector<8x1xf32>
      %150 = arith.subf %146, %149 : vector<8x1xf32>
      %151 = math.exp %150 : vector<8x1xf32>
      %cst_40 = arith.constant dense<0.000000e+00> : vector<1xf32>
      %152 = vector.multi_reduction <add>, %151, %cst_40 [0] : vector<8x1xf32> to vector<1xf32>
      %153 = vector.shape_cast %152 : vector<1xf32> to vector<1x1xf32>
      %154 = tpu.reciprocal %153 {approx = true} : vector<1x1xf32> -> vector<1x1xf32>
      %155 = vector.broadcast %154 : vector<1x1xf32> to vector<8x1xf32>
      %156 = arith.mulf %151, %155 : vector<8x1xf32>
      %157 = vector.extract_strided_slice %24 {offsets = [96, 0], sizes = [8, 1], strides = [1, 1]} : vector<128x1xf32> to vector<8x1xf32>
      %cst_41 = arith.constant dense<0xFF800000> : vector<1xf32>
      %158 = vector.multi_reduction <maximumf>, %157, %cst_41 [0] : vector<8x1xf32> to vector<1xf32>
      %159 = vector.shape_cast %158 : vector<1xf32> to vector<1x1xf32>
      %160 = vector.broadcast %159 : vector<1x1xf32> to vector<8x1xf32>
      %161 = arith.subf %157, %160 : vector<8x1xf32>
      %162 = math.exp %161 : vector<8x1xf32>
      %cst_42 = arith.constant dense<0.000000e+00> : vector<1xf32>
      %163 = vector.multi_reduction <add>, %162, %cst_42 [0] : vector<8x1xf32> to vector<1xf32>
      %164 = vector.shape_cast %163 : vector<1xf32> to vector<1x1xf32>
      %165 = tpu.reciprocal %164 {approx = true} : vector<1x1xf32> -> vector<1x1xf32>
      %166 = vector.broadcast %165 : vector<1x1xf32> to vector<8x1xf32>
      %167 = arith.mulf %162, %166 : vector<8x1xf32>
      %168 = vector.extract_strided_slice %24 {offsets = [104, 0], sizes = [8, 1], strides = [1, 1]} : vector<128x1xf32> to vector<8x1xf32>
      %cst_43 = arith.constant dense<0xFF800000> : vector<1xf32>
      %169 = vector.multi_reduction <maximumf>, %168, %cst_43 [0] : vector<8x1xf32> to vector<1xf32>
      %170 = vector.shape_cast %169 : vector<1xf32> to vector<1x1xf32>
      %171 = vector.broadcast %170 : vector<1x1xf32> to vector<8x1xf32>
      %172 = arith.subf %168, %171 : vector<8x1xf32>
      %173 = math.exp %172 : vector<8x1xf32>
      %cst_44 = arith.constant dense<0.000000e+00> : vector<1xf32>
      %174 = vector.multi_reduction <add>, %173, %cst_44 [0] : vector<8x1xf32> to vector<1xf32>
      %175 = vector.shape_cast %174 : vector<1xf32> to vector<1x1xf32>
      %176 = tpu.reciprocal %175 {approx = true} : vector<1x1xf32> -> vector<1x1xf32>
      %177 = vector.broadcast %176 : vector<1x1xf32> to vector<8x1xf32>
      %178 = arith.mulf %173, %177 : vector<8x1xf32>
      %179 = vector.extract_strided_slice %24 {offsets = [112, 0], sizes = [8, 1], strides = [1, 1]} : vector<128x1xf32> to vector<8x1xf32>
      %cst_45 = arith.constant dense<0xFF800000> : vector<1xf32>
      %180 = vector.multi_reduction <maximumf>, %179, %cst_45 [0] : vector<8x1xf32> to vector<1xf32>
      %181 = vector.shape_cast %180 : vector<1xf32> to vector<1x1xf32>
      %182 = vector.broadcast %181 : vector<1x1xf32> to vector<8x1xf32>
      %183 = arith.subf %179, %182 : vector<8x1xf32>
      %184 = math.exp %183 : vector<8x1xf32>
      %cst_46 = arith.constant dense<0.000000e+00> : vector<1xf32>
      %185 = vector.multi_reduction <add>, %184, %cst_46 [0] : vector<8x1xf32> to vector<1xf32>
      %186 = vector.shape_cast %185 : vector<1xf32> to vector<1x1xf32>
      %187 = tpu.reciprocal %186 {approx = true} : vector<1x1xf32> -> vector<1x1xf32>
      %188 = vector.broadcast %187 : vector<1x1xf32> to vector<8x1xf32>
      %189 = arith.mulf %184, %188 : vector<8x1xf32>
      %190 = vector.extract_strided_slice %24 {offsets = [120, 0], sizes = [8, 1], strides = [1, 1]} : vector<128x1xf32> to vector<8x1xf32>
      %cst_47 = arith.constant dense<0xFF800000> : vector<1xf32>
      %191 = vector.multi_reduction <maximumf>, %190, %cst_47 [0] : vector<8x1xf32> to vector<1xf32>
      %192 = vector.shape_cast %191 : vector<1xf32> to vector<1x1xf32>
      %193 = vector.broadcast %192 : vector<1x1xf32> to vector<8x1xf32>
      %194 = arith.subf %190, %193 : vector<8x1xf32>
      %195 = math.exp %194 : vector<8x1xf32>
      %cst_48 = arith.constant dense<0.000000e+00> : vector<1xf32>
      %196 = vector.multi_reduction <add>, %195, %cst_48 [0] : vector<8x1xf32> to vector<1xf32>
      %197 = vector.shape_cast %196 : vector<1xf32> to vector<1x1xf32>
      %198 = tpu.reciprocal %197 {approx = true} : vector<1x1xf32> -> vector<1x1xf32>
      %199 = vector.broadcast %198 : vector<1x1xf32> to vector<8x1xf32>
      %200 = arith.mulf %195, %199 : vector<8x1xf32>
      %201 = tpu.concatenate %35, %46, %57, %68, %79, %90, %101, %112, %123, %134, %145, %156, %167, %178, %189, %200 in 0 : vector<8x1xf32>, vector<8x1xf32>, vector<8x1xf32>, vector<8x1xf32>, vector<8x1xf32>, vector<8x1xf32>, vector<8x1xf32>, vector<8x1xf32>, vector<8x1xf32>, vector<8x1xf32>, vector<8x1xf32>, vector<8x1xf32>, vector<8x1xf32>, vector<8x1xf32>, vector<8x1xf32>, vector<8x1xf32> -> vector<128x1xf32>
      %202 = tpu.iota {dimensions = array<i32: 1>} : vector<16x128xi32>
      %203 = tpu.iota {dimensions = array<i32: 0>} : vector<16x128xi32>
      %c8_i32 = arith.constant 8 : i32
      %204 = vector.broadcast %c8_i32 : i32 to vector<16x128xi32>
      %205 = arith.muli %203, %204 : vector<16x128xi32>
      %206 = arith.cmpi sge, %202, %205 : vector<16x128xi32>
      %c1_i32_49 = arith.constant 1 : i32
      %207 = vector.broadcast %c1_i32_49 : i32 to vector<16x128xi32>
      %208 = arith.addi %203, %207 : vector<16x128xi32>
      %c8_i32_50 = arith.constant 8 : i32
      %209 = vector.broadcast %c8_i32_50 : i32 to vector<16x128xi32>
      %210 = arith.muli %208, %209 : vector<16x128xi32>
      %211 = arith.cmpi slt, %202, %210 : vector<16x128xi32>
      %212 = arith.andi %206, %211 : vector<16x128xi1>
      %213 = arith.extui %212 : vector<16x128xi1> to vector<16x128xi32>
      %214 = arith.sitofp %213 : vector<16x128xi32> to vector<16x128xf32>
      %c0_51 = arith.constant 0 : index
      %c0_52 = arith.constant 0 : index
      %215 = vector.load %arg11[%c0_51, %c0_52] : memref<128x512xf32, #tpu.memory_space<vmem>>, vector<128x512xf32>
      %216 = vector.broadcast %201 : vector<128x1xf32> to vector<128x512xf32>
      %217 = arith.mulf %216, %215 : vector<128x512xf32>
      %cst_53 = arith.constant dense<0.000000e+00> : vector<16x512xf32>
      %218 = tpu.matmul %214, %217, %cst_53 {dimension_numbers = #tpu.dot_dimension_numbers<[1], [0], [0], [1], [0, 0, 1, 1], [], []>} : vector<16x128xf32>, vector<128x512xf32>, vector<16x512xf32> -> vector<16x512xf32>
      %219 = vector.extract_strided_slice %218 {offsets = [0, 0], sizes = [16, 128], strides = [1, 1]} : vector<16x512xf32> to vector<16x128xf32>
      %220 = vector.extract_strided_slice %218 {offsets = [0, 0], sizes = [16, 128], strides = [1, 1]} : vector<16x512xf32> to vector<16x128xf32>
      %221 = arith.mulf %219, %220 : vector<16x128xf32>
      %cst_54 = arith.constant dense<0.000000e+00> : vector<16xf32>
      %222 = vector.multi_reduction <add>, %221, %cst_54 [1] : vector<16x128xf32> to vector<16xf32>
      %223 = vector.shape_cast %222 : vector<16xf32> to vector<16x1xf32>
      %224 = vector.extract_strided_slice %218 {offsets = [0, 128], sizes = [16, 128], strides = [1, 1]} : vector<16x512xf32> to vector<16x128xf32>
      %225 = vector.extract_strided_slice %218 {offsets = [0, 128], sizes = [16, 128], strides = [1, 1]} : vector<16x512xf32> to vector<16x128xf32>
      %226 = arith.mulf %224, %225 : vector<16x128xf32>
      %cst_55 = arith.constant dense<0.000000e+00> : vector<16xf32>
      %227 = vector.multi_reduction <add>, %226, %cst_55 [1] : vector<16x128xf32> to vector<16xf32>
      %228 = vector.shape_cast %227 : vector<16xf32> to vector<16x1xf32>
      %229 = vector.extract_strided_slice %218 {offsets = [0, 256], sizes = [16, 128], strides = [1, 1]} : vector<16x512xf32> to vector<16x128xf32>
      %230 = vector.extract_strided_slice %218 {offsets = [0, 256], sizes = [16, 128], strides = [1, 1]} : vector<16x512xf32> to vector<16x128xf32>
      %231 = arith.mulf %229, %230 : vector<16x128xf32>
      %cst_56 = arith.constant dense<0.000000e+00> : vector<16xf32>
      %232 = vector.multi_reduction <add>, %231, %cst_56 [1] : vector<16x128xf32> to vector<16xf32>
      %233 = vector.shape_cast %232 : vector<16xf32> to vector<16x1xf32>
      %234 = vector.extract_strided_slice %218 {offsets = [0, 384], sizes = [16, 128], strides = [1, 1]} : vector<16x512xf32> to vector<16x128xf32>
      %235 = vector.extract_strided_slice %218 {offsets = [0, 384], sizes = [16, 128], strides = [1, 1]} : vector<16x512xf32> to vector<16x128xf32>
      %236 = arith.mulf %234, %235 : vector<16x128xf32>
      %cst_57 = arith.constant dense<0.000000e+00> : vector<16xf32>
      %237 = vector.multi_reduction <add>, %236, %cst_57 [1] : vector<16x128xf32> to vector<16xf32>
      %238 = vector.shape_cast %237 : vector<16xf32> to vector<16x1xf32>
      %cst_58 = arith.constant 1.000000e-24 : f32
      %239 = vector.broadcast %cst_58 : f32 to vector<16x1xf32>
      %240 = arith.maximumf %223, %239 : vector<16x1xf32>
      %241 = math.rsqrt %240 : vector<16x1xf32>
      %cst_59 = arith.constant 1.000000e-24 : f32
      %242 = vector.broadcast %cst_59 : f32 to vector<16x1xf32>
      %243 = arith.maximumf %228, %242 : vector<16x1xf32>
      %244 = math.rsqrt %243 : vector<16x1xf32>
      %cst_60 = arith.constant 1.000000e-24 : f32
      %245 = vector.broadcast %cst_60 : f32 to vector<16x1xf32>
      %246 = arith.maximumf %233, %245 : vector<16x1xf32>
      %247 = math.rsqrt %246 : vector<16x1xf32>
      %cst_61 = arith.constant 1.000000e-24 : f32
      %248 = vector.broadcast %cst_61 : f32 to vector<16x1xf32>
      %249 = arith.maximumf %238, %248 : vector<16x1xf32>
      %250 = math.rsqrt %249 : vector<16x1xf32>
      %251 = arith.mulf %223, %241 : vector<16x1xf32>
      %252 = arith.mulf %251, %241 : vector<16x1xf32>
      %253 = arith.mulf %228, %244 : vector<16x1xf32>
      %254 = arith.mulf %253, %244 : vector<16x1xf32>
      %255 = arith.addf %252, %254 : vector<16x1xf32>
      %256 = arith.mulf %233, %247 : vector<16x1xf32>
      %257 = arith.mulf %256, %247 : vector<16x1xf32>
      %258 = arith.addf %255, %257 : vector<16x1xf32>
      %259 = arith.mulf %238, %250 : vector<16x1xf32>
      %260 = arith.mulf %259, %250 : vector<16x1xf32>
      %261 = arith.addf %258, %260 : vector<16x1xf32>
      %cst_62 = arith.constant 1.000000e-24 : f32
      %262 = vector.broadcast %cst_62 : f32 to vector<16x1xf32>
      %263 = arith.maximumf %261, %262 : vector<16x1xf32>
      %264 = math.rsqrt %263 : vector<16x1xf32>
      %265 = vector.extract_strided_slice %218 {offsets = [0, 0], sizes = [16, 128], strides = [1, 1]} : vector<16x512xf32> to vector<16x128xf32>
      %266 = arith.mulf %241, %264 : vector<16x1xf32>
      %267 = vector.broadcast %266 : vector<16x1xf32> to vector<16x128xf32>
      %268 = arith.mulf %265, %267 : vector<16x128xf32>
      %269 = vector.shape_cast %268 : vector<16x128xf32> to vector<1x16x128xf32>
      %c0_63 = arith.constant 0 : index
      %c0_64 = arith.constant 0 : index
      %c0_65 = arith.constant 0 : index
      %270 = vector.load %arg10[%c0_63, %c0_64, %c0_65] : memref<1x16x512xf32, #tpu.memory_space<vmem>>, vector<1x16x128xf32>
      tpu.vector_store %arg10[%c0_63, %c0_64, %c0_65], %269 {strides = array<i32>} : memref<1x16x512xf32, #tpu.memory_space<vmem>>, vector<1x16x128xf32>,
      %271 = vector.extract_strided_slice %218 {offsets = [0, 128], sizes = [16, 128], strides = [1, 1]} : vector<16x512xf32> to vector<16x128xf32>
      %272 = arith.mulf %244, %264 : vector<16x1xf32>
      %273 = vector.broadcast %272 : vector<16x1xf32> to vector<16x128xf32>
      %274 = arith.mulf %271, %273 : vector<16x128xf32>
      %275 = vector.shape_cast %274 : vector<16x128xf32> to vector<1x16x128xf32>
      %c0_66 = arith.constant 0 : index
      %c0_67 = arith.constant 0 : index
      %c128 = arith.constant 128 : index
      %276 = vector.load %arg10[%c0_66, %c0_67, %c128] : memref<1x16x512xf32, #tpu.memory_space<vmem>>, vector<1x16x128xf32>
      tpu.vector_store %arg10[%c0_66, %c0_67, %c128], %275 {strides = array<i32>} : memref<1x16x512xf32, #tpu.memory_space<vmem>>, vector<1x16x128xf32>,
      %277 = vector.extract_strided_slice %218 {offsets = [0, 256], sizes = [16, 128], strides = [1, 1]} : vector<16x512xf32> to vector<16x128xf32>
      %278 = arith.mulf %247, %264 : vector<16x1xf32>
      %279 = vector.broadcast %278 : vector<16x1xf32> to vector<16x128xf32>
      %280 = arith.mulf %277, %279 : vector<16x128xf32>
      %281 = vector.shape_cast %280 : vector<16x128xf32> to vector<1x16x128xf32>
      %c0_68 = arith.constant 0 : index
      %c0_69 = arith.constant 0 : index
      %c256 = arith.constant 256 : index
      %282 = vector.load %arg10[%c0_68, %c0_69, %c256] : memref<1x16x512xf32, #tpu.memory_space<vmem>>, vector<1x16x128xf32>
      tpu.vector_store %arg10[%c0_68, %c0_69, %c256], %281 {strides = array<i32>} : memref<1x16x512xf32, #tpu.memory_space<vmem>>, vector<1x16x128xf32>,
      %283 = vector.extract_strided_slice %218 {offsets = [0, 384], sizes = [16, 128], strides = [1, 1]} : vector<16x512xf32> to vector<16x128xf32>
      %284 = arith.mulf %250, %264 : vector<16x1xf32>
      %285 = vector.broadcast %284 : vector<16x1xf32> to vector<16x128xf32>
      %286 = arith.mulf %283, %285 : vector<16x128xf32>
      %287 = vector.shape_cast %286 : vector<16x128xf32> to vector<1x16x128xf32>
      %c0_70 = arith.constant 0 : index
      %c0_71 = arith.constant 0 : index
      %c384 = arith.constant 384 : index
      %288 = vector.load %arg10[%c0_70, %c0_71, %c384] : memref<1x16x512xf32, #tpu.memory_space<vmem>>, vector<1x16x128xf32>
      tpu.vector_store %arg10[%c0_70, %c0_71, %c384], %287 {strides = array<i32>} : memref<1x16x512xf32, #tpu.memory_space<vmem>>, vector<1x16x128xf32>,
    } else {
    }
    return
  }
  func.func @transform_0(%arg0: i32, %arg1: i32) -> (i32, i32, i32) {
    %c0_i32 = arith.constant 0 : i32
    %c0_i32_0 = arith.constant 0 : i32
    %c0_i32_1 = arith.constant 0 : i32
    return %arg0, %c0_i32, %c0_i32_0 : i32, i32, i32
  }
  func.func @transform_1(%arg0: i32, %arg1: i32) -> (i32, i32) {
    %c0_i32 = arith.constant 0 : i32
    %c0_i32_0 = arith.constant 0 : i32
    %c0_i32_1 = arith.constant 0 : i32
    return %c0_i32, %c0_i32_0 : i32, i32
  }
  func.func @transform_2(%arg0: i32, %arg1: i32) -> (i32, i32) {
    %c0_i32 = arith.constant 0 : i32
    %c0_i32_0 = arith.constant 0 : i32
    %c0_i32_1 = arith.constant 0 : i32
    return %c0_i32, %c0_i32_0 : i32, i32
  }
  func.func @transform_3(%arg0: i32, %arg1: i32) -> (i32, i32) {
    %c0_i32 = arith.constant 0 : i32
    %c0_i32_0 = arith.constant 0 : i32
    %c0_i32_1 = arith.constant 0 : i32
    return %c0_i32, %c0_i32_0 : i32, i32
  }
  func.func @transform_4(%arg0: i32, %arg1: i32) -> (i32, i32) {
    %c0_i32 = arith.constant 0 : i32
    %c0_i32_0 = arith.constant 0 : i32
    return %c0_i32, %arg1 : i32, i32
  }
  func.func @transform_5(%arg0: i32, %arg1: i32) -> (i32, i32) {
    %c0_i32 = arith.constant 0 : i32
    %c0_i32_0 = arith.constant 0 : i32
    return %c0_i32, %arg1 : i32, i32
  }
  func.func @transform_6(%arg0: i32, %arg1: i32) -> (i32, i32) {
    %c0_i32 = arith.constant 0 : i32
    %c0_i32_0 = arith.constant 0 : i32
    return %c0_i32, %arg1 : i32, i32
  }
  func.func @transform_7(%arg0: i32, %arg1: i32) -> i32 {
    %c0_i32 = arith.constant 0 : i32
    %c0_i32_0 = arith.constant 0 : i32
    return %c0_i32 : i32
  }
  func.func @transform_8(%arg0: i32, %arg1: i32) -> (i32, i32, i32) {
    %c0_i32 = arith.constant 0 : i32
    %c0_i32_0 = arith.constant 0 : i32
    %c0_i32_1 = arith.constant 0 : i32
    return %arg0, %c0_i32, %c0_i32_0 : i32, i32, i32
  }
}

</mosaic_0001>

<llo_original>
// kernel: tpu_custom_call.1
$region0: #{tpu_custom_call.1}
  #allocation0 [shape = 'u32[]', space=smem, size = 0x4, offset = 0x4, fixed_abs, tag = 'smem constant byte address 0x4 - core index']
  #allocation1 [shape = 'u32[72,128]{1,0:T(1,128)}', space=vmem, size = 0x9000, scoped, tag = 'internal scratch']
  #allocation2 [shape = 'f32[128,512]{1,0:T(8,128)}', space=vmem, size = 0x40000, scoped, tag = 'scratch operand']
  #allocation3 [shape = 'bf16[128,512]{1,0:T(8,128)(2,1)}', space=vmem, size = 0x20000, scoped, tag = 'scratch operand']
  #allocation4 [shape = 'f32[128,1]{1,0:T(8,128)}', space=vmem, size = 0x10000, scoped, tag = 'scratch operand']
  #allocation5 [shape = 'f32[1]{0:T(128)S(6)}', space=smem, size = 0x200, scoped, tag = 'scoped memory for tpu_custom_call.1']
  %s0 = inlined_call_operand.hbm [shape: f32[2,128,128], index: 0, kind: input, shape index: {}]
  %s1 = inlined_call_operand.vmem [shape: f32[128,4], index: 1, kind: input, shape index: {}]
  %s2 = inlined_call_operand.vmem [shape: f32[4,128], index: 2, kind: input, shape index: {}]
  %s3 = inlined_call_operand.vmem [shape: f32[1,4], index: 3, kind: input, shape index: {}]
  %s4 = inlined_call_operand.hbm [shape: bf16[512,512], index: 4, kind: input, shape index: {}]
  %s5 = inlined_call_operand.vmem [shape: f32[1,512], index: 5, kind: input, shape index: {}]
  %s6 = inlined_call_operand.vmem [shape: f32[1,512], index: 6, kind: input, shape index: {}]
  %s7 = inlined_call_operand.<no memory space> [shape: f32[1], index: 7, kind: input, shape index: {}]
  %s8 = inlined_call_operand.hbm [shape: f32[2,16,512], index: 8, kind: output, shape index: {}]
  %s9 = sld [smem:[#allocation0]]
  $region81: #{tpu_custom_call.1} parent=0
    _
  %s11 = ssub.s32 1, %s9
  %s12 = scalar_select 0, %s11, %s9
  %13 = sst [smem:[#allocation5]] %s7
  $region1: #{tpu_custom_call.1} parent=0
    #allocation6 [shape = 'u8[131072]{0}', space=vmem, size = 0x20000, scoped, tag = 'input window, operand 0']
    #allocation7 [shape = 's32[2]{0}', space=sflag, size = 0x8, scoped, tag = 'scoped memory for tpu_custom_call.1']
    #allocation8 [shape = 's32[2]{0}', space=sflag, size = 0x8, scoped, tag = 'scoped memory for tpu_custom_call.1']
    #allocation9 [shape = 'u8[524288]{0}', space=vmem, size = 0x80000, scoped, tag = 'input window, operand 4']
    #allocation10 [shape = 's32[2]{0}', space=sflag, size = 0x8, scoped, tag = 'scoped memory for tpu_custom_call.1']
    #allocation11 [shape = 'u8[65536]{0}', space=vmem, size = 0x10000, scoped, tag = 'output window, operand 0']
    %14 = vsyncpa [#allocation7], 0
    %s15 = scalar_lea.sflag [#allocation7], 1
    %16 = vsyncpa %s15, 0
    %17 = vsyncpa [#allocation10], 0
    %s18 = scalar_lea.sflag [#allocation10], 1
    %19 = vsyncpa %s18, 0
    %20 = vsyncpa [#allocation8], 0
    %s21 = scalar_lea.sflag [#allocation8], 1
    %22 = vsyncpa %s21, 0
    loop: start=0, step=1, limit=6
    $region2: #{tpu_custom_call.1} parent=1 // loop_pre_header
      _
    $region3: #{tpu_custom_call.1} parent=1 // loop_header
      %s24 = sphi 0, %s28
      %p25 = scmp.ge.s32.totalorder %s24, 6
      %s31 = sphi 0, %s43
      %s32 = sphi 0, %s39
      %s33 = sphi 0, %s31
      %s34 = sphi 0, %s32
      %s35 = sphi 0, %s33
      %s36 = sphi 0, %s34
      %s46 = sphi 0, %s48
      %s49 = sphi 0, %s46
      %s50 = sphi 0, %s49
      %s66 = sphi 0, %s50
      %s70 = sphi 0, %s70
      %s72 = sphi 0, %s70
      %s73 = sphi 0, %s72
      %s87 = sphi 0, %s73
      %s91 = sphi 0, %s91
      %s93 = sphi 0, %s91
      %s94 = sphi 0, %s93
      %s108 = sphi 0, %s94
      %s112 = sphi 0, %s112
      %s114 = sphi 0, %s112
      %s115 = sphi 0, %s114
      %s129 = sphi 0, %s115
      %s135 = sphi 0, %s137
      %s138 = sphi 0, %s135
      %s139 = sphi 0, %s138
      %s155 = sphi 0, %s139
      %s161 = sphi 0, %s163
      %s164 = sphi 0, %s161
      %s165 = sphi 0, %s164
      %s181 = sphi 0, %s165
      %s187 = sphi 0, %s189
      %s190 = sphi 0, %s187
      %s191 = sphi 0, %s190
      %s207 = sphi 0, %s191
      %s211 = sphi 0, %s211
      %s213 = sphi 0, %s211
      %s214 = sphi 0, %s213
      %s228 = sphi 0, %s214
      %s234 = sphi 0, %s236
      %s237 = sphi 0, %s234
      %s238 = sphi 0, %s237
      %s254 = sphi 0, %s238
    $region4: #{tpu_custom_call.1} parent=1 // loop_header_branch
      %27 = sbr.rel (%p25) target = $region8
    $region5: #{tpu_custom_call.1} parent=1 // loop_body
      %s29 = ssub.s32 %s24, 1
      %s30 = ssub.s32 %s24, 2
      %s37 = sadd.s32 1, %s32
      %p38 = scmp.ge.s32.totalorder %s37, 2
      %s39 = scalar_select %p38, 0, %s37
      %s40 = sadd.s32 1, %s31
      %s41 = scalar_select %p38, %s40, %s31
      %p42 = scmp.ge.s32.totalorder %s41, 2
      %s43 = scalar_select %p42, 0, %s41
      %s44 = ssub.s32 %s31, %s43
      %p45 = scmp.eq.s32.totalorder %s44, 0
      %s47 = sadd.s32 %s46, 1
      %s48 = scalar_select %p45, %s46, %s47
      %p51 = pneg %p45
      %p52 = scmp.eq.s32.totalorder %s24, 3
      %p53 = por %p51, %p52
      %p54 = scmp.ne.s32.totalorder %s46, %s49
      %p55 = scmp.eq.s32.totalorder %s24, 0
      %p56 = por %p54, %p55
      %p57 = scmp.ne.s32.totalorder %s46, %s49
      %p58 = scmp.eq.s32.totalorder %s29, 3
      %p59 = por %p57, %p58
      %p60 = scmp.ne.s32.totalorder %s49, %s50
      %p61 = scmp.eq.s32.totalorder %s29, 0
      %p62 = por %p60, %p61
      %p63 = scmp.ne.s32.totalorder %s49, %s50
      %p64 = scmp.eq.s32.totalorder %s30, 3
      %p65 = por %p63, %p64
      %p67 = scmp.ne.s32.totalorder %s50, %s66
      %p68 = scmp.eq.s32.totalorder %s30, 0
      %p69 = por %p67, %p68
      %s71 = sadd.s32 %s70, 1
      %p74 = scmp.eq.s32.totalorder %s24, 3
      %p75 = scmp.ne.s32.totalorder %s70, %s72
      %p76 = scmp.eq.s32.totalorder %s24, 0
      %p77 = por %p75, %p76
      %p78 = scmp.ne.s32.totalorder %s70, %s72
      %p79 = scmp.eq.s32.totalorder %s29, 3
      %p80 = por %p78, %p79
      %p81 = scmp.ne.s32.totalorder %s72, %s73
      %p82 = scmp.eq.s32.totalorder %s29, 0
      %p83 = por %p81, %p82
      %p84 = scmp.ne.s32.totalorder %s72, %s73
      %p85 = scmp.eq.s32.totalorder %s30, 3
      %p86 = por %p84, %p85
      %p88 = scmp.ne.s32.totalorder %s73, %s87
      %p89 = scmp.eq.s32.totalorder %s30, 0
      %p90 = por %p88, %p89
      %s92 = sadd.s32 %s91, 1
      %p95 = scmp.eq.s32.totalorder %s24, 3
      %p96 = scmp.ne.s32.totalorder %s91, %s93
      %p97 = scmp.eq.s32.totalorder %s24, 0
      %p98 = por %p96, %p97
      %p99 = scmp.ne.s32.totalorder %s91, %s93
      %p100 = scmp.eq.s32.totalorder %s29, 3
      %p101 = por %p99, %p100
      %p102 = scmp.ne.s32.totalorder %s93, %s94
      %p103 = scmp.eq.s32.totalorder %s29, 0
      %p104 = por %p102, %p103
      %p105 = scmp.ne.s32.totalorder %s93, %s94
      %p106 = scmp.eq.s32.totalorder %s30, 3
      %p107 = por %p105, %p106
      %p109 = scmp.ne.s32.totalorder %s94, %s108
      %p110 = scmp.eq.s32.totalorder %s30, 0
      %p111 = por %p109, %p110
      %s113 = sadd.s32 %s112, 1
      %p116 = scmp.eq.s32.totalorder %s24, 3
      %p117 = scmp.ne.s32.totalorder %s112, %s114
      %p118 = scmp.eq.s32.totalorder %s24, 0
      %p119 = por %p117, %p118
      %p120 = scmp.ne.s32.totalorder %s112, %s114
      %p121 = scmp.eq.s32.totalorder %s29, 3
      %p122 = por %p120, %p121
      %p123 = scmp.ne.s32.totalorder %s114, %s115
      %p124 = scmp.eq.s32.totalorder %s29, 0
      %p125 = por %p123, %p124
      %p126 = scmp.ne.s32.totalorder %s114, %s115
      %p127 = scmp.eq.s32.totalorder %s30, 3
      %p128 = por %p126, %p127
      %p130 = scmp.ne.s32.totalorder %s115, %s129
      %p131 = scmp.eq.s32.totalorder %s30, 0
      %p132 = por %p130, %p131
      %s133 = ssub.s32 %s32, %s39
      %p134 = scmp.eq.s32.totalorder %s133, 0
      %s136 = sadd.s32 %s135, 1
      %s137 = scalar_select %p134, %s135, %s136
      %p140 = pneg %p134
      %p141 = scmp.eq.s32.totalorder %s24, 3
      %p142 = por %p140, %p141
      %p143 = scmp.ne.s32.totalorder %s135, %s138
      %p144 = scmp.eq.s32.totalorder %s24, 0
      %p145 = por %p143, %p144
      %p146 = scmp.ne.s32.totalorder %s135, %s138
      %p147 = scmp.eq.s32.totalorder %s29, 3
      %p148 = por %p146, %p147
      %p149 = scmp.ne.s32.totalorder %s138, %s139
      %p150 = scmp.eq.s32.totalorder %s29, 0
      %p151 = por %p149, %p150
      %p152 = scmp.ne.s32.totalorder %s138, %s139
      %p153 = scmp.eq.s32.totalorder %s30, 3
      %p154 = por %p152, %p153
      %p156 = scmp.ne.s32.totalorder %s139, %s155
      %p157 = scmp.eq.s32.totalorder %s30, 0
      %p158 = por %p156, %p157
      %s159 = ssub.s32 %s32, %s39
      %p160 = scmp.eq.s32.totalorder %s159, 0
      %s162 = sadd.s32 %s161, 1
      %s163 = scalar_select %p160, %s161, %s162
      %p166 = pneg %p160
      %p167 = scmp.eq.s32.totalorder %s24, 3
      %p168 = por %p166, %p167
      %p169 = scmp.ne.s32.totalorder %s161, %s164
      %p170 = scmp.eq.s32.totalorder %s24, 0
      %p171 = por %p169, %p170
      %p172 = scmp.ne.s32.totalorder %s161, %s164
      %p173 = scmp.eq.s32.totalorder %s29, 3
      %p174 = por %p172, %p173
      %p175 = scmp.ne.s32.totalorder %s164, %s165
      %p176 = scmp.eq.s32.totalorder %s29, 0
      %p177 = por %p175, %p176
      %p178 = scmp.ne.s32.totalorder %s164, %s165
      %p179 = scmp.eq.s32.totalorder %s30, 3
      %p180 = por %p178, %p179
      %p182 = scmp.ne.s32.totalorder %s165, %s181
      %p183 = scmp.eq.s32.totalorder %s30, 0
      %p184 = por %p182, %p183
      %s185 = ssub.s32 %s32, %s39
      %p186 = scmp.eq.s32.totalorder %s185, 0
      %s188 = sadd.s32 %s187, 1
      %s189 = scalar_select %p186, %s187, %s188
      %p192 = pneg %p186
      %p193 = scmp.eq.s32.totalorder %s24, 3
      %p194 = por %p192, %p193
      %p195 = scmp.ne.s32.totalorder %s187, %s190
      %p196 = scmp.eq.s32.totalorder %s24, 0
      %p197 = por %p195, %p196
      %p198 = scmp.ne.s32.totalorder %s187, %s190
      %p199 = scmp.eq.s32.totalorder %s29, 3
      %p200 = por %p198, %p199
      %p201 = scmp.ne.s32.totalorder %s190, %s191
      %p202 = scmp.eq.s32.totalorder %s29, 0
      %p203 = por %p201, %p202
      %p204 = scmp.ne.s32.totalorder %s190, %s191
      %p205 = scmp.eq.s32.totalorder %s30, 3
      %p206 = por %p204, %p205
      %p208 = scmp.ne.s32.totalorder %s191, %s207
      %p209 = scmp.eq.s32.totalorder %s30, 0
      %p210 = por %p208, %p209
      %s212 = sadd.s32 %s211, 1
      %p215 = scmp.eq.s32.totalorder %s24, 3
      %p216 = scmp.ne.s32.totalorder %s211, %s213
      %p217 = scmp.eq.s32.totalorder %s24, 0
      %p218 = por %p216, %p217
      %p219 = scmp.ne.s32.totalorder %s211, %s213
      %p220 = scmp.eq.s32.totalorder %s29, 3
      %p221 = por %p219, %p220
      %p222 = scmp.ne.s32.totalorder %s213, %s214
      %p223 = scmp.eq.s32.totalorder %s29, 0
      %p224 = por %p222, %p223
      %p225 = scmp.ne.s32.totalorder %s213, %s214
      %p226 = scmp.eq.s32.totalorder %s30, 3
      %p227 = por %p225, %p226
      %p229 = scmp.ne.s32.totalorder %s214, %s228
      %p230 = scmp.eq.s32.totalorder %s30, 0
      %p231 = por %p229, %p230
      %s232 = ssub.s32 %s31, %s43
      %p233 = scmp.eq.s32.totalorder %s232, 0
      %s235 = sadd.s32 %s234, 1
      %s236 = scalar_select %p233, %s234, %s235
      %p239 = pneg %p233
      %p240 = scmp.eq.s32.totalorder %s24, 3
      %p241 = por %p239, %p240
      %p242 = scmp.ne.s32.totalorder %s234, %s237
      %p243 = scmp.eq.s32.totalorder %s24, 0
      %p244 = por %p242, %p243
      %p245 = scmp.ne.s32.totalorder %s234, %s237
      %p246 = scmp.eq.s32.totalorder %s29, 3
      %p247 = por %p245, %p246
      %p248 = scmp.ne.s32.totalorder %s237, %s238
      %p249 = scmp.eq.s32.totalorder %s29, 0
      %p250 = por %p248, %p249
      %p251 = scmp.ne.s32.totalorder %s237, %s238
      %p252 = scmp.eq.s32.totalorder %s30, 3
      %p253 = por %p251, %p252
      %p255 = scmp.ne.s32.totalorder %s238, %s254
      %p256 = scmp.eq.s32.totalorder %s30, 0
      %p257 = por %p255, %p256
      %p258 = scmp.le.s32.totalorder 1, %s24
      %p259 = scmp.lt.s32.totalorder %s24, 5
      %p260 = pnand %p258, %p259
      %p261 = pneg %p260
      // Predicated region
      $region9: #{tpu_custom_call.1} parent=5 // pred_check
        _
      $region10: #{tpu_custom_call.1} parent=5 // pred_check_branch
        %263 = sbr.rel (%p260) target = $region12
      $region11: #{tpu_custom_call.1} parent=5 // pred_region
        %s264 = ssub.s32 %s24, 1
        // Predicated region
        $region13: #{tpu_custom_call.1} parent=11 // pred_check
          %p265 = pneg %p83
        $region14: #{tpu_custom_call.1} parent=11 // pred_check_branch
          %267 = sbr.rel (%p265) target = $region16
        $region15: #{tpu_custom_call.1} parent=11 // pred_region
          _
        $region16: #{tpu_custom_call.1} parent=11 // pred_fallthru
          _
        // Predicated region
        $region17: #{tpu_custom_call.1} parent=11 // pred_check
          %p268 = pneg %p104
        $region18: #{tpu_custom_call.1} parent=11 // pred_check_branch
          %270 = sbr.rel (%p268) target = $region20
        $region19: #{tpu_custom_call.1} parent=11 // pred_region
          _
        $region20: #{tpu_custom_call.1} parent=11 // pred_fallthru
          _
        // Predicated region
        $region21: #{tpu_custom_call.1} parent=11 // pred_check
          %p271 = pneg %p125
        $region22: #{tpu_custom_call.1} parent=11 // pred_check_branch
          %273 = sbr.rel (%p271) target = $region24
        $region23: #{tpu_custom_call.1} parent=11 // pred_region
          _
        $region24: #{tpu_custom_call.1} parent=11 // pred_fallthru
          _
        // Predicated region
        $region25: #{tpu_custom_call.1} parent=11 // pred_check
          %p274 = pneg %p224
        $region26: #{tpu_custom_call.1} parent=11 // pred_check_branch
          %276 = sbr.rel (%p274) target = $region28
        $region27: #{tpu_custom_call.1} parent=11 // pred_region
          _
        $region28: #{tpu_custom_call.1} parent=11 // pred_fallthru
          _
      $region12: #{tpu_custom_call.1} parent=5 // pred_fallthru
        _
      %p277 = scmp.lt.s32.totalorder %s24, 4
      // Predicated region
      $region29: #{tpu_custom_call.1} parent=5 // pred_check
        %p278 = pneg %p277
      $region30: #{tpu_custom_call.1} parent=5 // pred_check_branch
        %280 = sbr.rel (%p278) target = $region32
      $region31: #{tpu_custom_call.1} parent=5 // pred_region
        // Predicated region
        $region33: #{tpu_custom_call.1} parent=31 // pred_check
          %p281 = pneg %p56
        $region34: #{tpu_custom_call.1} parent=31 // pred_check_branch
          %283 = sbr.rel (%p281) target = $region36
        $region35: #{tpu_custom_call.1} parent=31 // pred_region
          %s284 = sand.u32 %s46, 1
          %s285 = scalar_lea.sflag [#allocation7], %s284
          %s286 = sand.u32 %s46, 1
          %s287 = smul.addr %s286, 128
          %s288 = scalar_lea.vmem [#allocation6], %s287
          %290 = vsyncadd %s285, 0
          %s291 = smul.addr %s31, 16
          %s292 = smul.addr %s291, 8
          %s293 = scalar_lea.hbm %s0, %s292
          %s294 = sshll.u32 %s293, 4
          %s295 = int_to_ptr.hbm [resolvable:$true] %s294
          %s296 = sshll.u32 %s288, 4
          %s297 = int_to_ptr.vmem [resolvable:$true] %s296
          %302 = dma.hbm_to_vmem [thread:$0]  %s295, 2048, %s297, %s285, 128, 128, 8
        $region36: #{tpu_custom_call.1} parent=31 // pred_fallthru
          _
        // Predicated region
        $region37: #{tpu_custom_call.1} parent=31 // pred_check
          %p303 = pneg %p145
        $region38: #{tpu_custom_call.1} parent=31 // pred_check_branch
          %305 = sbr.rel (%p303) target = $region40
        $region39: #{tpu_custom_call.1} parent=31 // pred_region
          %s306 = sand.u32 %s135, 1
          %s307 = scalar_lea.sflag [#allocation10], %s306
          %s308 = sand.u32 %s135, 1
          %s309 = smul.addr %s308, 512
          %s310 = scalar_lea.vmem [#allocation9], %s309
          %s311 = smul.u32 2, %s32
          %313 = vsyncadd %s307, 0
          %s314 = smul.addr %s311, 4
          %s315 = scalar_lea.hbm %s4, %s314
          %s316 = sshll.u32 %s315, 4
          %s317 = int_to_ptr.hbm [resolvable:$true] %s316
          %s318 = sshll.u32 %s310, 4
          %s319 = int_to_ptr.vmem [resolvable:$true] %s318
          %324 = dma.hbm_to_vmem [thread:$0]  %s317, 8192, %s319, %s307, 256, 128, 8
        $region40: #{tpu_custom_call.1} parent=31 // pred_fallthru
          _
        // Predicated region
        $region41: #{tpu_custom_call.1} parent=31 // pred_check
          %p325 = pneg %p171
        $region42: #{tpu_custom_call.1} parent=31 // pred_check_branch
          %327 = sbr.rel (%p325) target = $region44
        $region43: #{tpu_custom_call.1} parent=31 // pred_region
          %s328 = smul.u32 2, %s32
          %p329 = scmp.lt.s32.totalorder %s328, 3
          %s330 = scalar_select %p329, %s328, 3
          %s331 = scalar_lea.vmem %s5, %s330
          %s332 = smul.u32 2, %s32
        $region44: #{tpu_custom_call.1} parent=31 // pred_fallthru
          _
        // Predicated region
        $region45: #{tpu_custom_call.1} parent=31 // pred_check
          %p333 = pneg %p197
        $region46: #{tpu_custom_call.1} parent=31 // pred_check_branch
          %335 = sbr.rel (%p333) target = $region48
        $region47: #{tpu_custom_call.1} parent=31 // pred_region
          %s336 = smul.u32 2, %s32
          %p337 = scmp.lt.s32.totalorder %s336, 3
          %s338 = scalar_select %p337, %s336, 3
          %s339 = scalar_lea.vmem %s6, %s338
          %s340 = smul.u32 2, %s32
        $region48: #{tpu_custom_call.1} parent=31 // pred_fallthru
          _
      $region32: #{tpu_custom_call.1} parent=5 // pred_fallthru
        _
      %p341 = scmp.le.s32.totalorder 1, %s24
      %p342 = scmp.lt.s32.totalorder %s24, 5
      %p343 = pnand %p341, %p342
      %p344 = pneg %p343
      // Predicated region
      $region49: #{tpu_custom_call.1} parent=5 // pred_check
        _
      $region50: #{tpu_custom_call.1} parent=5 // pred_check_branch
        %346 = sbr.rel (%p343) target = $region52
      $region51: #{tpu_custom_call.1} parent=5 // pred_region
        %s347 = ssub.s32 %s24, 1
        %s348 = sand.u32 %s49, 1
        %s349 = scalar_lea.sflag [#allocation7], %s348
        %s350 = sand.u32 %s49, 1
        %s351 = smul.addr %s350, 128
        %s352 = scalar_lea.vmem [#allocation6], %s351
        // Predicated region
        $region53: #{tpu_custom_call.1} parent=51 // pred_check
          %p353 = pneg %p62
        $region54: #{tpu_custom_call.1} parent=51 // pred_check_branch
          %355 = sbr.rel (%p353) target = $region56
        $region55: #{tpu_custom_call.1} parent=51 // pred_region
          %357 = dma.done %s349, 2048
        $region56: #{tpu_custom_call.1} parent=51 // pred_fallthru
          _
        %s358 = sand.u32 %s138, 1
        %s359 = scalar_lea.sflag [#allocation10], %s358
        %s360 = sand.u32 %s138, 1
        %s361 = smul.addr %s360, 512
        %s362 = scalar_lea.vmem [#allocation9], %s361
        // Predicated region
        $region57: #{tpu_custom_call.1} parent=51 // pred_check
          %p363 = pneg %p151
        $region58: #{tpu_custom_call.1} parent=51 // pred_check_branch
          %365 = sbr.rel (%p363) target = $region60
        $region59: #{tpu_custom_call.1} parent=51 // pred_region
          %367 = dma.done %s359, 8192
        $region60: #{tpu_custom_call.1} parent=51 // pred_fallthru
          _
        %s368 = sand.u32 %s49, 1
        %s369 = scalar_lea.sflag [#allocation7], %s368
        %s370 = sand.u32 %s49, 1
        %s371 = smul.addr %s370, 128
        %s372 = scalar_lea.vmem [#allocation6], %s371
        %p373 = pneg %p62
        %p374 = pneg %p59
        %p375 = pneg %p83
        %p376 = pneg %p80
        %p377 = pneg %p104
        %p378 = pneg %p101
        %p379 = pneg %p125
        %p380 = pneg %p122
        %s381 = sand.u32 %s138, 1
        %s382 = scalar_lea.sflag [#allocation10], %s381
        %s383 = sand.u32 %s138, 1
        %s384 = smul.addr %s383, 512
        %s385 = scalar_lea.vmem [#allocation9], %s384
        %p386 = pneg %p151
        %p387 = pneg %p148
        %s388 = smul.u32 2, %s34
        %p389 = scmp.lt.s32.totalorder %s388, 3
        %s390 = scalar_select %p389, %s388, 3
        %s391 = scalar_lea.vmem %s5, %s390
        %p392 = pneg %p177
        %p393 = pneg %p174
        %s394 = smul.u32 2, %s34
        %p395 = scmp.lt.s32.totalorder %s394, 3
        %s396 = scalar_select %p395, %s394, 3
        %s397 = scalar_lea.vmem %s6, %s396
        %p398 = pneg %p203
        %p399 = pneg %p200
        %p400 = pneg %p224
        %p401 = pneg %p221
        %p402 = pneg %p250
        %p403 = pneg %p247
        %s404 = sand.u32 %s237, 1
        %s405 = scalar_lea.sflag [#allocation8], %s404
        %s406 = sand.u32 %s237, 1
        %s407 = smul.addr %s406, 64
        %s408 = scalar_lea.vmem [#allocation11], %s407
        %s409 = smul.u32 2, %s34
        %s410 = smul.u32 2, %s34
        %p411 = scmp.lt.s32.totalorder %s410, 3
        %s412 = scalar_select %p411, %s410, 3
        %s413 = scalar_lea.vmem %s5, %s412
        %s414 = smul.u32 2, %s34
        %s415 = smul.u32 2, %s34
        %p416 = scmp.lt.s32.totalorder %s415, 3
        %s417 = scalar_select %p416, %s415, 3
        %s418 = scalar_lea.vmem %s6, %s417
        %s419 = smul.u32 2, %s34
        %p420 = scmp.eq.s32.totalorder %s34, 0
        // Predicated region
        $region61: #{tpu_custom_call.1} parent=51 // pred_check
          %p421 = pneg %p420
        $region62: #{tpu_custom_call.1} parent=51 // pred_check_branch
          %423 = sbr.rel (%p421) target = $region64
        $region63: #{tpu_custom_call.1} parent=51 // pred_region
          %v424 = vld [vmem:[%s352] sm:$0xff]
          %v425 = vld [vmem:[%s352 + $0x8] sm:$0xff]
          %v426 = vld [vmem:[%s352 + $0x10] sm:$0xff]
          %v427 = vld [vmem:[%s352 + $0x18] sm:$0xff]
          %v428 = vld [vmem:[%s352 + $0x20] sm:$0xff]
          %v429 = vld [vmem:[%s352 + $0x28] sm:$0xff]
          %v430 = vld [vmem:[%s352 + $0x30] sm:$0xff]
          %v431 = vld [vmem:[%s352 + $0x38] sm:$0xff]
          %v432 = vld [vmem:[%s352 + $0x40] sm:$0xff]
          %v433 = vld [vmem:[%s352 + $0x48] sm:$0xff]
          %v434 = vld [vmem:[%s352 + $0x50] sm:$0xff]
          %v435 = vld [vmem:[%s352 + $0x58] sm:$0xff]
          %v436 = vld [vmem:[%s352 + $0x60] sm:$0xff]
          %v437 = vld [vmem:[%s352 + $0x68] sm:$0xff]
          %v438 = vld [vmem:[%s352 + $0x70] sm:$0xff]
          %v439 = vld [vmem:[%s352 + $0x78] sm:$0xff]
          %v440 = vmul.f32 %v424, %v424
          %v441 = vmul.f32 %v425, %v425
          %v442 = vmul.f32 %v426, %v426
          %v443 = vmul.f32 %v427, %v427
          %v444 = vmul.f32 %v428, %v428
          %v445 = vmul.f32 %v429, %v429
          %v446 = vmul.f32 %v430, %v430
          %v447 = vmul.f32 %v431, %v431
          %v448 = vmul.f32 %v432, %v432
          %v449 = vmul.f32 %v433, %v433
          %v450 = vmul.f32 %v434, %v434
          %v451 = vmul.f32 %v435, %v435
          %v452 = vmul.f32 %v436, %v436
          %v453 = vmul.f32 %v437, %v437
          %v454 = vmul.f32 %v438, %v438
          %v455 = vmul.f32 %v439, %v439
          %456 = vadd.xlane.f32.xlu0 %v440
          %v457 = vpop.xlane.xlu0 %456
          %458 = vadd.xlane.f32.xlu0 %v441
          %v459 = vpop.xlane.xlu0 %458
          %460 = vadd.xlane.f32.xlu0 %v442
          %v461 = vpop.xlane.xlu0 %460
          %462 = vadd.xlane.f32.xlu0 %v443
          %v463 = vpop.xlane.xlu0 %462
          %464 = vadd.xlane.f32.xlu0 %v444
          %v465 = vpop.xlane.xlu0 %464
          %466 = vadd.xlane.f32.xlu0 %v445
          %v467 = vpop.xlane.xlu0 %466
          %468 = vadd.xlane.f32.xlu0 %v446
          %v469 = vpop.xlane.xlu0 %468
          %470 = vadd.xlane.f32.xlu0 %v447
          %v471 = vpop.xlane.xlu0 %470
          %472 = vadd.xlane.f32.xlu0 %v448
          %v473 = vpop.xlane.xlu0 %472
          %474 = vadd.xlane.f32.xlu0 %v449
          %v475 = vpop.xlane.xlu0 %474
          %476 = vadd.xlane.f32.xlu0 %v450
          %v477 = vpop.xlane.xlu0 %476
          %478 = vadd.xlane.f32.xlu0 %v451
          %v479 = vpop.xlane.xlu0 %478
          %480 = vadd.xlane.f32.xlu0 %v452
          %v481 = vpop.xlane.xlu0 %480
          %482 = vadd.xlane.f32.xlu0 %v453
          %v483 = vpop.xlane.xlu0 %482
          %484 = vadd.xlane.f32.xlu0 %v454
          %v485 = vpop.xlane.xlu0 %484
          %486 = vadd.xlane.f32.xlu0 %v455
          %v487 = vpop.xlane.xlu0 %486
          %v488 = vmax.f32 %v457, 1e-24
          %v489 = vmax.f32 %v459, 1e-24
          %v490 = vmax.f32 %v461, 1e-24
          %v491 = vmax.f32 %v463, 1e-24
          %v492 = vmax.f32 %v465, 1e-24
          %v493 = vmax.f32 %v467, 1e-24
          %v494 = vmax.f32 %v469, 1e-24
          %v495 = vmax.f32 %v471, 1e-24
          %v496 = vmax.f32 %v473, 1e-24
          %v497 = vmax.f32 %v475, 1e-24
          %v498 = vmax.f32 %v477, 1e-24
          %v499 = vmax.f32 %v479, 1e-24
          %v500 = vmax.f32 %v481, 1e-24
          %v501 = vmax.f32 %v483, 1e-24
          %v502 = vmax.f32 %v485, 1e-24
          %v503 = vmax.f32 %v487, 1e-24
          %v504 = vrsqrt.pop %v488
          %v505 = vmul.f32 %v504, %v488
          %v506 = vmul.f32 %v505, %v504
          %v507 = vmul.f32 0.5, %v506
          %v508 = vsub.f32 1.5, %v507
          %v509 = vmul.f32 %v504, %v508
          %vm510 = vweird.f32 %v488
          %vm511 = vweird.f32 %v504
          %vm512 = vmor %vm510, %vm511
          %v513 = vsel %vm512, %v504, %v509
          %v514 = vrsqrt.pop %v489
          %v515 = vmul.f32 %v514, %v489
          %v516 = vmul.f32 %v515, %v514
          %v517 = vmul.f32 0.5, %v516
          %v518 = vsub.f32 1.5, %v517
          %v519 = vmul.f32 %v514, %v518
          %vm520 = vweird.f32 %v489
          %vm521 = vweird.f32 %v514
          %vm522 = vmor %vm520, %vm521
          %v523 = vsel %vm522, %v514, %v519
          %v524 = vrsqrt.pop %v490
          %v525 = vmul.f32 %v524, %v490
          %v526 = vmul.f32 %v525, %v524
          %v527 = vmul.f32 0.5, %v526
          %v528 = vsub.f32 1.5, %v527
          %v529 = vmul.f32 %v524, %v528
          %vm530 = vweird.f32 %v490
          %vm531 = vweird.f32 %v524
          %vm532 = vmor %vm530, %vm531
          %v533 = vsel %vm532, %v524, %v529
          %v534 = vrsqrt.pop %v491
          %v535 = vmul.f32 %v534, %v491
          %v536 = vmul.f32 %v535, %v534
          %v537 = vmul.f32 0.5, %v536
          %v538 = vsub.f32 1.5, %v537
          %v539 = vmul.f32 %v534, %v538
          %vm540 = vweird.f32 %v491
          %vm541 = vweird.f32 %v534
          %vm542 = vmor %vm540, %vm541
          %v543 = vsel %vm542, %v534, %v539
          %v544 = vrsqrt.pop %v492
          %v545 = vmul.f32 %v544, %v492
          %v546 = vmul.f32 %v545, %v544
          %v547 = vmul.f32 0.5, %v546
          %v548 = vsub.f32 1.5, %v547
          %v549 = vmul.f32 %v544, %v548
          %vm550 = vweird.f32 %v492
          %vm551 = vweird.f32 %v544
          %vm552 = vmor %vm550, %vm551
          %v553 = vsel %vm552, %v544, %v549
          %v554 = vrsqrt.pop %v493
          %v555 = vmul.f32 %v554, %v493
          %v556 = vmul.f32 %v555, %v554
          %v557 = vmul.f32 0.5, %v556
          %v558 = vsub.f32 1.5, %v557
          %v559 = vmul.f32 %v554, %v558
          %vm560 = vweird.f32 %v493
          %vm561 = vweird.f32 %v554
          %vm562 = vmor %vm560, %vm561
          %v563 = vsel %vm562, %v554, %v559
          %v564 = vrsqrt.pop %v494
          %v565 = vmul.f32 %v564, %v494
          %v566 = vmul.f32 %v565, %v564
          %v567 = vmul.f32 0.5, %v566
          %v568 = vsub.f32 1.5, %v567
          %v569 = vmul.f32 %v564, %v568
          %vm570 = vweird.f32 %v494
          %vm571 = vweird.f32 %v564
          %vm572 = vmor %vm570, %vm571
          %v573 = vsel %vm572, %v564, %v569
          %v574 = vrsqrt.pop %v495
          %v575 = vmul.f32 %v574, %v495
          %v576 = vmul.f32 %v575, %v574
          %v577 = vmul.f32 0.5, %v576
          %v578 = vsub.f32 1.5, %v577
          %v579 = vmul.f32 %v574, %v578
          %vm580 = vweird.f32 %v495
          %vm581 = vweird.f32 %v574
          %vm582 = vmor %vm580, %vm581
          %v583 = vsel %vm582, %v574, %v579
          %v584 = vrsqrt.pop %v496
          %v585 = vmul.f32 %v584, %v496
          %v586 = vmul.f32 %v585, %v584
          %v587 = vmul.f32 0.5, %v586
          %v588 = vsub.f32 1.5, %v587
          %v589 = vmul.f32 %v584, %v588
          %vm590 = vweird.f32 %v496
          %vm591 = vweird.f32 %v584
          %vm592 = vmor %vm590, %vm591
          %v593 = vsel %vm592, %v584, %v589
          %v594 = vrsqrt.pop %v497
          %v595 = vmul.f32 %v594, %v497
          %v596 = vmul.f32 %v595, %v594
          %v597 = vmul.f32 0.5, %v596
          %v598 = vsub.f32 1.5, %v597
          %v599 = vmul.f32 %v594, %v598
          %vm600 = vweird.f32 %v497
          %vm601 = vweird.f32 %v594
          %vm602 = vmor %vm600, %vm601
          %v603 = vsel %vm602, %v594, %v599
          %v604 = vrsqrt.pop %v498
          %v605 = vmul.f32 %v604, %v498
          %v606 = vmul.f32 %v605, %v604
          %v607 = vmul.f32 0.5, %v606
          %v608 = vsub.f32 1.5, %v607
          %v609 = vmul.f32 %v604, %v608
          %vm610 = vweird.f32 %v498
          %vm611 = vweird.f32 %v604
          %vm612 = vmor %vm610, %vm611
          %v613 = vsel %vm612, %v604, %v609
          %v614 = vrsqrt.pop %v499
          %v615 = vmul.f32 %v614, %v499
          %v616 = vmul.f32 %v615, %v614
          %v617 = vmul.f32 0.5, %v616
          %v618 = vsub.f32 1.5, %v617
          %v619 = vmul.f32 %v614, %v618
          %vm620 = vweird.f32 %v499
          %vm621 = vweird.f32 %v614
          %vm622 = vmor %vm620, %vm621
          %v623 = vsel %vm622, %v614, %v619
          %v624 = vrsqrt.pop %v500
          %v625 = vmul.f32 %v624, %v500
          %v626 = vmul.f32 %v625, %v624
          %v627 = vmul.f32 0.5, %v626
          %v628 = vsub.f32 1.5, %v627
          %v629 = vmul.f32 %v624, %v628
          %vm630 = vweird.f32 %v500
          %vm631 = vweird.f32 %v624
          %vm632 = vmor %vm630, %vm631
          %v633 = vsel %vm632, %v624, %v629
          %v634 = vrsqrt.pop %v501
          %v635 = vmul.f32 %v634, %v501
          %v636 = vmul.f32 %v635, %v634
          %v637 = vmul.f32 0.5, %v636
          %v638 = vsub.f32 1.5, %v637
          %v639 = vmul.f32 %v634, %v638
          %vm640 = vweird.f32 %v501
          %vm641 = vweird.f32 %v634
          %vm642 = vmor %vm640, %vm641
          %v643 = vsel %vm642, %v634, %v639
          %v644 = vrsqrt.pop %v502
          %v645 = vmul.f32 %v644, %v502
          %v646 = vmul.f32 %v645, %v644
          %v647 = vmul.f32 0.5, %v646
          %v648 = vsub.f32 1.5, %v647
          %v649 = vmul.f32 %v644, %v648
          %vm650 = vweird.f32 %v502
          %vm651 = vweird.f32 %v644
          %vm652 = vmor %vm650, %vm651
          %v653 = vsel %vm652, %v644, %v649
          %v654 = vrsqrt.pop %v503
          %v655 = vmul.f32 %v654, %v503
          %v656 = vmul.f32 %v655, %v654
          %v657 = vmul.f32 0.5, %v656
          %v658 = vsub.f32 1.5, %v657
          %v659 = vmul.f32 %v654, %v658
          %vm660 = vweird.f32 %v503
          %vm661 = vweird.f32 %v654
          %vm662 = vmor %vm660, %vm661
          %v663 = vsel %vm662, %v654, %v659
          %v664 = vmul.f32 %v424, %v513
          %v665 = vmul.f32 %v425, %v523
          %v666 = vmul.f32 %v426, %v533
          %v667 = vmul.f32 %v427, %v543
          %v668 = vmul.f32 %v428, %v553
          %v669 = vmul.f32 %v429, %v563
          %v670 = vmul.f32 %v430, %v573
          %v671 = vmul.f32 %v431, %v583
          %v672 = vmul.f32 %v432, %v593
          %v673 = vmul.f32 %v433, %v603
          %v674 = vmul.f32 %v434, %v613
          %v675 = vmul.f32 %v435, %v623
          %v676 = vmul.f32 %v436, %v633
          %v677 = vmul.f32 %v437, %v643
          %v678 = vmul.f32 %v438, %v653
          %v679 = vmul.f32 %v439, %v663
          %v680 = vld [vmem:[%s1] sm:$0xff]
          %v681 = vld [vmem:[%s1 + $0x8] sm:$0xff]
          %v682 = vld [vmem:[%s1 + $0x10] sm:$0xff]
          %v683 = vld [vmem:[%s1 + $0x18] sm:$0xff]
          %v684 = vld [vmem:[%s1 + $0x20] sm:$0xff]
          %v685 = vld [vmem:[%s1 + $0x28] sm:$0xff]
          %v686 = vld [vmem:[%s1 + $0x30] sm:$0xff]
          %v687 = vld [vmem:[%s1 + $0x38] sm:$0xff]
          %v688 = vld [vmem:[%s1 + $0x40] sm:$0xff]
          %v689 = vld [vmem:[%s1 + $0x48] sm:$0xff]
          %v690 = vld [vmem:[%s1 + $0x50] sm:$0xff]
          %v691 = vld [vmem:[%s1 + $0x58] sm:$0xff]
          %v692 = vld [vmem:[%s1 + $0x60] sm:$0xff]
          %v693 = vld [vmem:[%s1 + $0x68] sm:$0xff]
          %v694 = vld [vmem:[%s1 + $0x70] sm:$0xff]
          %v695 = vld [vmem:[%s1 + $0x78] sm:$0xff]
          %v696 = vld [vmem:[%s3] sm:$0x1]
          %v698 = vperm.slane %v696, 0
          %700 = vmatpush.msra.mxu0 %v695
          %701 = vmatpush.msra.mxu0 %v694
          %702 = vmatpush.msra.mxu0 %v693
          %703 = vmatpush.msra.mxu0 %v692
          %704 = vmatpush.msra.mxu0 %v691
          %705 = vmatpush.msra.mxu0 %v690
          %706 = vmatpush.msra.mxu0 %v689
          %707 = vmatpush.msra.mxu0 %v688
          %708 = vmatpush.msra.mxu0 %v687
          %709 = vmatpush.msra.mxu0 %v686
          %710 = vmatpush.msra.mxu0 %v685
          %711 = vmatpush.msra.mxu0 %v684
          %712 = vmatpush.msra.mxu0 %v683
          %713 = vmatpush.msra.mxu0 %v682
          %714 = vmatpush.msra.mxu0 %v681
          %715 = vmatpush.msra.mxu0 %v680
          %716 = vmatmul.f32.gmra.mxu0 %v664
          %v717 = vpop.f32.mrf.mxu0
          %v718 = vadd.f32 %v698, %v717
          %719 = vmatmul.f32.gmra.mxu0 %v665
          %v720 = vpop.f32.mrf.mxu0
          %v721 = vadd.f32 %v698, %v720
          %722 = vmatmul.f32.gmra.mxu0 %v666
          %v723 = vpop.f32.mrf.mxu0
          %v724 = vadd.f32 %v698, %v723
          %725 = vmatmul.f32.gmra.mxu0 %v667
          %v726 = vpop.f32.mrf.mxu0
          %v727 = vadd.f32 %v698, %v726
          %728 = vmatmul.f32.gmra.mxu0 %v668
          %v729 = vpop.f32.mrf.mxu0
          %v730 = vadd.f32 %v698, %v729
          %731 = vmatmul.f32.gmra.mxu0 %v669
          %v732 = vpop.f32.mrf.mxu0
          %v733 = vadd.f32 %v698, %v732
          %734 = vmatmul.f32.gmra.mxu0 %v670
          %v735 = vpop.f32.mrf.mxu0
          %v736 = vadd.f32 %v698, %v735
          %737 = vmatmul.f32.gmra.mxu0 %v671
          %v738 = vpop.f32.mrf.mxu0
          %v739 = vadd.f32 %v698, %v738
          %740 = vmatmul.f32.gmra.mxu0 %v672
          %v741 = vpop.f32.mrf.mxu0
          %v742 = vadd.f32 %v698, %v741
          %743 = vmatmul.f32.gmra.mxu0 %v673
          %v744 = vpop.f32.mrf.mxu0
          %v745 = vadd.f32 %v698, %v744
          %746 = vmatmul.f32.gmra.mxu0 %v674
          %v747 = vpop.f32.mrf.mxu0
          %v748 = vadd.f32 %v698, %v747
          %749 = vmatmul.f32.gmra.mxu0 %v675
          %v750 = vpop.f32.mrf.mxu0
          %v751 = vadd.f32 %v698, %v750
          %752 = vmatmul.f32.gmra.mxu0 %v676
          %v753 = vpop.f32.mrf.mxu0
          %v754 = vadd.f32 %v698, %v753
          %755 = vmatmul.f32.gmra.mxu0 %v677
          %v756 = vpop.f32.mrf.mxu0
          %v757 = vadd.f32 %v698, %v756
          %758 = vmatmul.f32.gmra.mxu0 %v678
          %v759 = vpop.f32.mrf.mxu0
          %v760 = vadd.f32 %v698, %v759
          %761 = vmatmul.f32.gmra.mxu0 %v679
          %v762 = vpop.f32.mrf.mxu0
          %v763 = vadd.f32 %v698, %v762
          %764 = vdwg.mxu0
          %vm765 = vcmask 31744
          %v766 = vsel %vm765, %v718, -inf
          %767 = vmax.xlane.f32.xlu0 %v766
          %v768 = vpop.xlane.xlu0 %767
          %v769 = vsel %vm765, %v721, -inf
          %770 = vmax.xlane.f32.xlu0 %v769
          %v771 = vpop.xlane.xlu0 %770
          %v772 = vsel %vm765, %v724, -inf
          %773 = vmax.xlane.f32.xlu0 %v772
          %v774 = vpop.xlane.xlu0 %773
          %v775 = vsel %vm765, %v727, -inf
          %776 = vmax.xlane.f32.xlu0 %v775
          %v777 = vpop.xlane.xlu0 %776
          %v778 = vsel %vm765, %v730, -inf
          %779 = vmax.xlane.f32.xlu0 %v778
          %v780 = vpop.xlane.xlu0 %779
          %v781 = vsel %vm765, %v733, -inf
          %782 = vmax.xlane.f32.xlu0 %v781
          %v783 = vpop.xlane.xlu0 %782
          %v784 = vsel %vm765, %v736, -inf
          %785 = vmax.xlane.f32.xlu0 %v784
          %v786 = vpop.xlane.xlu0 %785
          %v787 = vsel %vm765, %v739, -inf
          %788 = vmax.xlane.f32.xlu0 %v787
          %v789 = vpop.xlane.xlu0 %788
          %v790 = vsel %vm765, %v742, -inf
          %791 = vmax.xlane.f32.xlu0 %v790
          %v792 = vpop.xlane.xlu0 %791
          %v793 = vsel %vm765, %v745, -inf
          %794 = vmax.xlane.f32.xlu0 %v793
          %v795 = vpop.xlane.xlu0 %794
          %v796 = vsel %vm765, %v748, -inf
          %797 = vmax.xlane.f32.xlu0 %v796
          %v798 = vpop.xlane.xlu0 %797
          %v799 = vsel %vm765, %v751, -inf
          %800 = vmax.xlane.f32.xlu0 %v799
          %v801 = vpop.xlane.xlu0 %800
          %v802 = vsel %vm765, %v754, -inf
          %803 = vmax.xlane.f32.xlu0 %v802
          %v804 = vpop.xlane.xlu0 %803
          %v805 = vsel %vm765, %v757, -inf
          %806 = vmax.xlane.f32.xlu0 %v805
          %v807 = vpop.xlane.xlu0 %806
          %v808 = vsel %vm765, %v760, -inf
          %809 = vmax.xlane.f32.xlu0 %v808
          %v810 = vpop.xlane.xlu0 %809
          %v811 = vsel %vm765, %v763, -inf
          %812 = vmax.xlane.f32.xlu0 %v811
          %v813 = vpop.xlane.xlu0 %812
          %v814 = vsub.f32 %v718, %v768
          %v815 = vsub.f32 %v721, %v771
          %v816 = vsub.f32 %v724, %v774
          %v817 = vsub.f32 %v727, %v777
          %v818 = vsub.f32 %v730, %v780
          %v819 = vsub.f32 %v733, %v783
          %v820 = vsub.f32 %v736, %v786
          %v821 = vsub.f32 %v739, %v789
          %v822 = vsub.f32 %v742, %v792
          %v823 = vsub.f32 %v745, %v795
          %v824 = vsub.f32 %v748, %v798
          %v825 = vsub.f32 %v751, %v801
          %v826 = vsub.f32 %v754, %v804
          %v827 = vsub.f32 %v757, %v807
          %v828 = vsub.f32 %v760, %v810
          %v829 = vsub.f32 %v763, %v813
          %v830 = vmul.f32 %v814, 1.442695
          %v831 = vpow.pop %v830
          %v832 = vmul.f32 %v815, 1.442695
          %v833 = vpow.pop %v832
          %v834 = vmul.f32 %v816, 1.442695
          %v835 = vpow.pop %v834
          %v836 = vmul.f32 %v817, 1.442695
          %v837 = vpow.pop %v836
          %v838 = vmul.f32 %v818, 1.442695
          %v839 = vpow.pop %v838
          %v840 = vmul.f32 %v819, 1.442695
          %v841 = vpow.pop %v840
          %v842 = vmul.f32 %v820, 1.442695
          %v843 = vpow.pop %v842
          %v844 = vmul.f32 %v821, 1.442695
          %v845 = vpow.pop %v844
          %v846 = vmul.f32 %v822, 1.442695
          %v847 = vpow.pop %v846
          %v848 = vmul.f32 %v823, 1.442695
          %v849 = vpow.pop %v848
          %v850 = vmul.f32 %v824, 1.442695
          %v851 = vpow.pop %v850
          %v852 = vmul.f32 %v825, 1.442695
          %v853 = vpow.pop %v852
          %v854 = vmul.f32 %v826, 1.442695
          %v855 = vpow.pop %v854
          %v856 = vmul.f32 %v827, 1.442695
          %v857 = vpow.pop %v856
          %v858 = vmul.f32 %v828, 1.442695
          %v859 = vpow.pop %v858
          %v860 = vmul.f32 %v829, 1.442695
          %v861 = vpow.pop %v860
          %v862 = vsel %vm765, %v831, 0.0
          %863 = vadd.xlane.f32.xlu0 %v862
          %v864 = vpop.xlane.xlu0 %863
          %v865 = vsel %vm765, %v833, 0.0
          %866 = vadd.xlane.f32.xlu0 %v865
          %v867 = vpop.xlane.xlu0 %866
          %v868 = vsel %vm765, %v835, 0.0
          %869 = vadd.xlane.f32.xlu0 %v868
          %v870 = vpop.xlane.xlu0 %869
          %v871 = vsel %vm765, %v837, 0.0
          %872 = vadd.xlane.f32.xlu0 %v871
          %v873 = vpop.xlane.xlu0 %872
          %v874 = vsel %vm765, %v839, 0.0
          %875 = vadd.xlane.f32.xlu0 %v874
          %v876 = vpop.xlane.xlu0 %875
          %v877 = vsel %vm765, %v841, 0.0
          %878 = vadd.xlane.f32.xlu0 %v877
          %v879 = vpop.xlane.xlu0 %878
          %v880 = vsel %vm765, %v843, 0.0
          %881 = vadd.xlane.f32.xlu0 %v880
          %v882 = vpop.xlane.xlu0 %881
          %v883 = vsel %vm765, %v845, 0.0
          %884 = vadd.xlane.f32.xlu0 %v883
          %v885 = vpop.xlane.xlu0 %884
          %v886 = vsel %vm765, %v847, 0.0
          %887 = vadd.xlane.f32.xlu0 %v886
          %v888 = vpop.xlane.xlu0 %887
          %v889 = vsel %vm765, %v849, 0.0
          %890 = vadd.xlane.f32.xlu0 %v889
          %v891 = vpop.xlane.xlu0 %890
          %v892 = vsel %vm765, %v851, 0.0
          %893 = vadd.xlane.f32.xlu0 %v892
          %v894 = vpop.xlane.xlu0 %893
          %v895 = vsel %vm765, %v853, 0.0
          %896 = vadd.xlane.f32.xlu0 %v895
          %v897 = vpop.xlane.xlu0 %896
          %v898 = vsel %vm765, %v855, 0.0
          %899 = vadd.xlane.f32.xlu0 %v898
          %v900 = vpop.xlane.xlu0 %899
          %v901 = vsel %vm765, %v857, 0.0
          %902 = vadd.xlane.f32.xlu0 %v901
          %v903 = vpop.xlane.xlu0 %902
          %v904 = vsel %vm765, %v859, 0.0
          %905 = vadd.xlane.f32.xlu0 %v904
          %v906 = vpop.xlane.xlu0 %905
          %v907 = vsel %vm765, %v861, 0.0
          %908 = vadd.xlane.f32.xlu0 %v907
          %v909 = vpop.xlane.xlu0 %908
          %v910 = vrcp.pop %v864
          %v911 = vrcp.pop %v867
          %v912 = vrcp.pop %v870
          %v913 = vrcp.pop %v873
          %v914 = vrcp.pop %v876
          %v915 = vrcp.pop %v879
          %v916 = vrcp.pop %v882
          %v917 = vrcp.pop %v885
          %v918 = vrcp.pop %v888
          %v919 = vrcp.pop %v891
          %v920 = vrcp.pop %v894
          %v921 = vrcp.pop %v897
          %v922 = vrcp.pop %v900
          %v923 = vrcp.pop %v903
          %v924 = vrcp.pop %v906
          %v925 = vrcp.pop %v909
          %v926 = vmul.f32 %v831, %v910
          %v927 = vmul.f32 %v833, %v911
          %v928 = vmul.f32 %v835, %v912
          %v929 = vmul.f32 %v837, %v913
          %v930 = vmul.f32 %v839, %v914
          %v931 = vmul.f32 %v841, %v915
          %v932 = vmul.f32 %v843, %v916
          %v933 = vmul.f32 %v845, %v917
          %v934 = vmul.f32 %v847, %v918
          %v935 = vmul.f32 %v849, %v919
          %v936 = vmul.f32 %v851, %v920
          %v937 = vmul.f32 %v853, %v921
          %v938 = vmul.f32 %v855, %v922
          %v939 = vmul.f32 %v857, %v923
          %v940 = vmul.f32 %v859, %v924
          %v941 = vmul.f32 %v861, %v925
          %v942 = vld [vmem:[%s2] sm:$0xf]
          %v943 = vperm.slane %v942, 0
          %v944 = vsub.f32 %v664, %v943
          %v945 = vsub.f32 %v665, %v943
          %v946 = vsub.f32 %v666, %v943
          %v947 = vsub.f32 %v667, %v943
          %v948 = vsub.f32 %v668, %v943
          %v949 = vsub.f32 %v669, %v943
          %v950 = vsub.f32 %v670, %v943
          %v951 = vsub.f32 %v671, %v943
          %v952 = vsub.f32 %v672, %v943
          %v953 = vsub.f32 %v673, %v943
          %v954 = vsub.f32 %v674, %v943
          %v955 = vsub.f32 %v675, %v943
          %v956 = vsub.f32 %v676, %v943
          %v957 = vsub.f32 %v677, %v943
          %v958 = vsub.f32 %v678, %v943
          %v959 = vsub.f32 %v679, %v943
          %961 = vset.pattern.permute.xlu0 0
          %962 = vperm.xlu0 %961, %v926
          %v963 = vpop.permute.xlu0 %962
          %966 = vset.pattern.permute.xlu0 0
          %967 = vperm.xlu0 %966, %v927
          %v968 = vpop.permute.xlu0 %967
          %971 = vset.pattern.permute.xlu0 0
          %972 = vperm.xlu0 %971, %v928
          %v973 = vpop.permute.xlu0 %972
          %976 = vset.pattern.permute.xlu0 0
          %977 = vperm.xlu0 %976, %v929
          %v978 = vpop.permute.xlu0 %977
          %981 = vset.pattern.permute.xlu0 0
          %982 = vperm.xlu0 %981, %v930
          %v983 = vpop.permute.xlu0 %982
          %986 = vset.pattern.permute.xlu0 0
          %987 = vperm.xlu0 %986, %v931
          %v988 = vpop.permute.xlu0 %987
          %991 = vset.pattern.permute.xlu0 0
          %992 = vperm.xlu0 %991, %v932
          %v993 = vpop.permute.xlu0 %992
          %996 = vset.pattern.permute.xlu0 0
          %997 = vperm.xlu0 %996, %v933
          %v998 = vpop.permute.xlu0 %997
          %1001 = vset.pattern.permute.xlu0 0
          %1002 = vperm.xlu0 %1001, %v934
          %v1003 = vpop.permute.xlu0 %1002
          %1006 = vset.pattern.permute.xlu0 0
          %1007 = vperm.xlu0 %1006, %v935
          %v1008 = vpop.permute.xlu0 %1007
          %1011 = vset.pattern.permute.xlu0 0
          %1012 = vperm.xlu0 %1011, %v936
          %v1013 = vpop.permute.xlu0 %1012
          %1016 = vset.pattern.permute.xlu0 0
          %1017 = vperm.xlu0 %1016, %v937
          %v1018 = vpop.permute.xlu0 %1017
          %1021 = vset.pattern.permute.xlu0 0
          %1022 = vperm.xlu0 %1021, %v938
          %v1023 = vpop.permute.xlu0 %1022
          %1026 = vset.pattern.permute.xlu0 0
          %1027 = vperm.xlu0 %1026, %v939
          %v1028 = vpop.permute.xlu0 %1027
          %1031 = vset.pattern.permute.xlu0 0
          %1032 = vperm.xlu0 %1031, %v940
          %v1033 = vpop.permute.xlu0 %1032
          %1036 = vset.pattern.permute.xlu0 0
          %1037 = vperm.xlu0 %1036, %v941
          %v1038 = vpop.permute.xlu0 %1037
          %v1040 = vmul.f32 %v963, %v944
          %v1041 = vmul.f32 %v968, %v945
          %v1042 = vmul.f32 %v973, %v946
          %v1043 = vmul.f32 %v978, %v947
          %v1044 = vmul.f32 %v983, %v948
          %v1045 = vmul.f32 %v988, %v949
          %v1046 = vmul.f32 %v993, %v950
          %v1047 = vmul.f32 %v998, %v951
          %v1048 = vmul.f32 %v1003, %v952
          %v1049 = vmul.f32 %v1008, %v953
          %v1050 = vmul.f32 %v1013, %v954
          %v1051 = vmul.f32 %v1018, %v955
          %v1052 = vmul.f32 %v1023, %v956
          %v1053 = vmul.f32 %v1028, %v957
          %v1054 = vmul.f32 %v1033, %v958
          %v1055 = vmul.f32 %v1038, %v959
          %1056 = vst [vmem:[#allocation2] sm:$0xff] %v1040
          %1057 = vst [vmem:[#allocation2 + $0x20] sm:$0xff] %v1041
          %1058 = vst [vmem:[#allocation2 + $0x40] sm:$0xff] %v1042
          %1059 = vst [vmem:[#allocation2 + $0x60] sm:$0xff] %v1043
          %1060 = vst [vmem:[#allocation2 + $0x80] sm:$0xff] %v1044
          %1061 = vst [vmem:[#allocation2 + $0xa0] sm:$0xff] %v1045
          %1062 = vst [vmem:[#allocation2 + $0xc0] sm:$0xff] %v1046
          %1063 = vst [vmem:[#allocation2 + $0xe0] sm:$0xff] %v1047
          %1064 = vst [vmem:[#allocation2 + $0x100] sm:$0xff] %v1048
          %1065 = vst [vmem:[#allocation2 + $0x120] sm:$0xff] %v1049
          %1066 = vst [vmem:[#allocation2 + $0x140] sm:$0xff] %v1050
          %1067 = vst [vmem:[#allocation2 + $0x160] sm:$0xff] %v1051
          %1068 = vst [vmem:[#allocation2 + $0x180] sm:$0xff] %v1052
          %1069 = vst [vmem:[#allocation2 + $0x1a0] sm:$0xff] %v1053
          %1070 = vst [vmem:[#allocation2 + $0x1c0] sm:$0xff] %v1054
          %1071 = vst [vmem:[#allocation2 + $0x1e0] sm:$0xff] %v1055
          %v1072 = vpack.c.bf16 %v1040, %v1040
          %v1073 = vpack.c.bf16 %v1041, %v1041
          %v1074 = vpack.c.bf16 %v1042, %v1042
          %v1075 = vpack.c.bf16 %v1043, %v1043
          %v1076 = vpack.c.bf16 %v1044, %v1044
          %v1077 = vpack.c.bf16 %v1045, %v1045
          %v1078 = vpack.c.bf16 %v1046, %v1046
          %v1079 = vpack.c.bf16 %v1047, %v1047
          %v1080 = vpack.c.bf16 %v1048, %v1048
          %v1081 = vpack.c.bf16 %v1049, %v1049
          %v1082 = vpack.c.bf16 %v1050, %v1050
          %v1083 = vpack.c.bf16 %v1051, %v1051
          %v1084 = vpack.c.bf16 %v1052, %v1052
          %v1085 = vpack.c.bf16 %v1053, %v1053
          %v1086 = vpack.c.bf16 %v1054, %v1054
          %v1087 = vpack.c.bf16 %v1055, %v1055
          %1088 = vst [vmem:[#allocation3] sm:$0xf] %v1072
          %1089 = vst [vmem:[#allocation3 + $0x10] sm:$0xf] %v1073
          %1090 = vst [vmem:[#allocation3 + $0x20] sm:$0xf] %v1074
          %1091 = vst [vmem:[#allocation3 + $0x30] sm:$0xf] %v1075
          %1092 = vst [vmem:[#allocation3 + $0x40] sm:$0xf] %v1076
          %1093 = vst [vmem:[#allocation3 + $0x50] sm:$0xf] %v1077
          %1094 = vst [vmem:[#allocation3 + $0x60] sm:$0xf] %v1078
          %1095 = vst [vmem:[#allocation3 + $0x70] sm:$0xf] %v1079
          %1096 = vst [vmem:[#allocation3 + $0x80] sm:$0xf] %v1080
          %1097 = vst [vmem:[#allocation3 + $0x90] sm:$0xf] %v1081
          %1098 = vst [vmem:[#allocation3 + $0xa0] sm:$0xf] %v1082
          %1099 = vst [vmem:[#allocation3 + $0xb0] sm:$0xf] %v1083
          %1100 = vst [vmem:[#allocation3 + $0xc0] sm:$0xf] %v1084
          %1101 = vst [vmem:[#allocation3 + $0xd0] sm:$0xf] %v1085
          %1102 = vst [vmem:[#allocation3 + $0xe0] sm:$0xf] %v1086
          %1103 = vst [vmem:[#allocation3 + $0xf0] sm:$0xf] %v1087
          %v1104 = vperm.slane %v942, 1
          %v1105 = vsub.f32 %v664, %v1104
          %v1106 = vsub.f32 %v665, %v1104
          %v1107 = vsub.f32 %v666, %v1104
          %v1108 = vsub.f32 %v667, %v1104
          %v1109 = vsub.f32 %v668, %v1104
          %v1110 = vsub.f32 %v669, %v1104
          %v1111 = vsub.f32 %v670, %v1104
          %v1112 = vsub.f32 %v671, %v1104
          %v1113 = vsub.f32 %v672, %v1104
          %v1114 = vsub.f32 %v673, %v1104
          %v1115 = vsub.f32 %v674, %v1104
          %v1116 = vsub.f32 %v675, %v1104
          %v1117 = vsub.f32 %v676, %v1104
          %v1118 = vsub.f32 %v677, %v1104
          %v1119 = vsub.f32 %v678, %v1104
          %v1120 = vsub.f32 %v679, %v1104
          %1121 = vset.pattern.permute.xlu0 1
          %1122 = vperm.xlu0 %1121, %v926
          %v1123 = vpop.permute.xlu0 %1122
          %1125 = vset.pattern.permute.xlu0 1
          %1126 = vperm.xlu0 %1125, %v927
          %v1127 = vpop.permute.xlu0 %1126
          %1129 = vset.pattern.permute.xlu0 1
          %1130 = vperm.xlu0 %1129, %v928
          %v1131 = vpop.permute.xlu0 %1130
          %1133 = vset.pattern.permute.xlu0 1
          %1134 = vperm.xlu0 %1133, %v929
          %v1135 = vpop.permute.xlu0 %1134
          %1137 = vset.pattern.permute.xlu0 1
          %1138 = vperm.xlu0 %1137, %v930
          %v1139 = vpop.permute.xlu0 %1138
          %1141 = vset.pattern.permute.xlu0 1
          %1142 = vperm.xlu0 %1141, %v931
          %v1143 = vpop.permute.xlu0 %1142
          %1145 = vset.pattern.permute.xlu0 1
          %1146 = vperm.xlu0 %1145, %v932
          %v1147 = vpop.permute.xlu0 %1146
          %1149 = vset.pattern.permute.xlu0 1
          %1150 = vperm.xlu0 %1149, %v933
          %v1151 = vpop.permute.xlu0 %1150
          %1153 = vset.pattern.permute.xlu0 1
          %1154 = vperm.xlu0 %1153, %v934
          %v1155 = vpop.permute.xlu0 %1154
          %1157 = vset.pattern.permute.xlu0 1
          %1158 = vperm.xlu0 %1157, %v935
          %v1159 = vpop.permute.xlu0 %1158
          %1161 = vset.pattern.permute.xlu0 1
          %1162 = vperm.xlu0 %1161, %v936
          %v1163 = vpop.permute.xlu0 %1162
          %1165 = vset.pattern.permute.xlu0 1
          %1166 = vperm.xlu0 %1165, %v937
          %v1167 = vpop.permute.xlu0 %1166
          %1169 = vset.pattern.permute.xlu0 1
          %1170 = vperm.xlu0 %1169, %v938
          %v1171 = vpop.permute.xlu0 %1170
          %1173 = vset.pattern.permute.xlu0 1
          %1174 = vperm.xlu0 %1173, %v939
          %v1175 = vpop.permute.xlu0 %1174
          %1177 = vset.pattern.permute.xlu0 1
          %1178 = vperm.xlu0 %1177, %v940
          %v1179 = vpop.permute.xlu0 %1178
          %1181 = vset.pattern.permute.xlu0 1
          %1182 = vperm.xlu0 %1181, %v941
          %v1183 = vpop.permute.xlu0 %1182
          %v1185 = vmul.f32 %v1123, %v1105
          %v1186 = vmul.f32 %v1127, %v1106
          %v1187 = vmul.f32 %v1131, %v1107
          %v1188 = vmul.f32 %v1135, %v1108
          %v1189 = vmul.f32 %v1139, %v1109
          %v1190 = vmul.f32 %v1143, %v1110
          %v1191 = vmul.f32 %v1147, %v1111
          %v1192 = vmul.f32 %v1151, %v1112
          %v1193 = vmul.f32 %v1155, %v1113
          %v1194 = vmul.f32 %v1159, %v1114
          %v1195 = vmul.f32 %v1163, %v1115
          %v1196 = vmul.f32 %v1167, %v1116
          %v1197 = vmul.f32 %v1171, %v1117
          %v1198 = vmul.f32 %v1175, %v1118
          %v1199 = vmul.f32 %v1179, %v1119
          %v1200 = vmul.f32 %v1183, %v1120
          %1201 = vst [vmem:[#allocation2 + $0x8] sm:$0xff] %v1185
          %1202 = vst [vmem:[#allocation2 + $0x28] sm:$0xff] %v1186
          %1203 = vst [vmem:[#allocation2 + $0x48] sm:$0xff] %v1187
          %1204 = vst [vmem:[#allocation2 + $0x68] sm:$0xff] %v1188
          %1205 = vst [vmem:[#allocation2 + $0x88] sm:$0xff] %v1189
          %1206 = vst [vmem:[#allocation2 + $0xa8] sm:$0xff] %v1190
          %1207 = vst [vmem:[#allocation2 + $0xc8] sm:$0xff] %v1191
          %1208 = vst [vmem:[#allocation2 + $0xe8] sm:$0xff] %v1192
          %1209 = vst [vmem:[#allocation2 + $0x108] sm:$0xff] %v1193
          %1210 = vst [vmem:[#allocation2 + $0x128] sm:$0xff] %v1194
          %1211 = vst [vmem:[#allocation2 + $0x148] sm:$0xff] %v1195
          %1212 = vst [vmem:[#allocation2 + $0x168] sm:$0xff] %v1196
          %1213 = vst [vmem:[#allocation2 + $0x188] sm:$0xff] %v1197
          %1214 = vst [vmem:[#allocation2 + $0x1a8] sm:$0xff] %v1198
          %1215 = vst [vmem:[#allocation2 + $0x1c8] sm:$0xff] %v1199
          %1216 = vst [vmem:[#allocation2 + $0x1e8] sm:$0xff] %v1200
          %v1217 = vpack.c.bf16 %v1185, %v1185
          %v1218 = vpack.c.bf16 %v1186, %v1186
          %v1219 = vpack.c.bf16 %v1187, %v1187
          %v1220 = vpack.c.bf16 %v1188, %v1188
          %v1221 = vpack.c.bf16 %v1189, %v1189
          %v1222 = vpack.c.bf16 %v1190, %v1190
          %v1223 = vpack.c.bf16 %v1191, %v1191
          %v1224 = vpack.c.bf16 %v1192, %v1192
          %v1225 = vpack.c.bf16 %v1193, %v1193
          %v1226 = vpack.c.bf16 %v1194, %v1194
          %v1227 = vpack.c.bf16 %v1195, %v1195
          %v1228 = vpack.c.bf16 %v1196, %v1196
          %v1229 = vpack.c.bf16 %v1197, %v1197
          %v1230 = vpack.c.bf16 %v1198, %v1198
          %v1231 = vpack.c.bf16 %v1199, %v1199
          %v1232 = vpack.c.bf16 %v1200, %v1200
          %1233 = vst [vmem:[#allocation3 + $0x4] sm:$0xf] %v1217
          %1234 = vst [vmem:[#allocation3 + $0x14] sm:$0xf] %v1218
          %1235 = vst [vmem:[#allocation3 + $0x24] sm:$0xf] %v1219
          %1236 = vst [vmem:[#allocation3 + $0x34] sm:$0xf] %v1220
          %1237 = vst [vmem:[#allocation3 + $0x44] sm:$0xf] %v1221
          %1238 = vst [vmem:[#allocation3 + $0x54] sm:$0xf] %v1222
          %1239 = vst [vmem:[#allocation3 + $0x64] sm:$0xf] %v1223
          %1240 = vst [vmem:[#allocation3 + $0x74] sm:$0xf] %v1224
          %1241 = vst [vmem:[#allocation3 + $0x84] sm:$0xf] %v1225
          %1242 = vst [vmem:[#allocation3 + $0x94] sm:$0xf] %v1226
          %1243 = vst [vmem:[#allocation3 + $0xa4] sm:$0xf] %v1227
          %1244 = vst [vmem:[#allocation3 + $0xb4] sm:$0xf] %v1228
          %1245 = vst [vmem:[#allocation3 + $0xc4] sm:$0xf] %v1229
          %1246 = vst [vmem:[#allocation3 + $0xd4] sm:$0xf] %v1230
          %1247 = vst [vmem:[#allocation3 + $0xe4] sm:$0xf] %v1231
          %1248 = vst [vmem:[#allocation3 + $0xf4] sm:$0xf] %v1232
          %v1249 = vperm.slane %v942, 2
          %v1250 = vsub.f32 %v664, %v1249
          %v1251 = vsub.f32 %v665, %v1249
          %v1252 = vsub.f32 %v666, %v1249
          %v1253 = vsub.f32 %v667, %v1249
          %v1254 = vsub.f32 %v668, %v1249
          %v1255 = vsub.f32 %v669, %v1249
          %v1256 = vsub.f32 %v670, %v1249
          %v1257 = vsub.f32 %v671, %v1249
          %v1258 = vsub.f32 %v672, %v1249
          %v1259 = vsub.f32 %v673, %v1249
          %v1260 = vsub.f32 %v674, %v1249
          %v1261 = vsub.f32 %v675, %v1249
          %v1262 = vsub.f32 %v676, %v1249
          %v1263 = vsub.f32 %v677, %v1249
          %v1264 = vsub.f32 %v678, %v1249
          %v1265 = vsub.f32 %v679, %v1249
          %1266 = vset.pattern.permute.xlu0 2
          %1267 = vperm.xlu0 %1266, %v926
          %v1268 = vpop.permute.xlu0 %1267
          %1270 = vset.pattern.permute.xlu0 2
          %1271 = vperm.xlu0 %1270, %v927
          %v1272 = vpop.permute.xlu0 %1271
          %1274 = vset.pattern.permute.xlu0 2
          %1275 = vperm.xlu0 %1274, %v928
          %v1276 = vpop.permute.xlu0 %1275
          %1278 = vset.pattern.permute.xlu0 2
          %1279 = vperm.xlu0 %1278, %v929
          %v1280 = vpop.permute.xlu0 %1279
          %1282 = vset.pattern.permute.xlu0 2
          %1283 = vperm.xlu0 %1282, %v930
          %v1284 = vpop.permute.xlu0 %1283
          %1286 = vset.pattern.permute.xlu0 2
          %1287 = vperm.xlu0 %1286, %v931
          %v1288 = vpop.permute.xlu0 %1287
          %1290 = vset.pattern.permute.xlu0 2
          %1291 = vperm.xlu0 %1290, %v932
          %v1292 = vpop.permute.xlu0 %1291
          %1294 = vset.pattern.permute.xlu0 2
          %1295 = vperm.xlu0 %1294, %v933
          %v1296 = vpop.permute.xlu0 %1295
          %1298 = vset.pattern.permute.xlu0 2
          %1299 = vperm.xlu0 %1298, %v934
          %v1300 = vpop.permute.xlu0 %1299
          %1302 = vset.pattern.permute.xlu0 2
          %1303 = vperm.xlu0 %1302, %v935
          %v1304 = vpop.permute.xlu0 %1303
          %1306 = vset.pattern.permute.xlu0 2
          %1307 = vperm.xlu0 %1306, %v936
          %v1308 = vpop.permute.xlu0 %1307
          %1310 = vset.pattern.permute.xlu0 2
          %1311 = vperm.xlu0 %1310, %v937
          %v1312 = vpop.permute.xlu0 %1311
          %1314 = vset.pattern.permute.xlu0 2
          %1315 = vperm.xlu0 %1314, %v938
          %v1316 = vpop.permute.xlu0 %1315
          %1318 = vset.pattern.permute.xlu0 2
          %1319 = vperm.xlu0 %1318, %v939
          %v1320 = vpop.permute.xlu0 %1319
          %1322 = vset.pattern.permute.xlu0 2
          %1323 = vperm.xlu0 %1322, %v940
          %v1324 = vpop.permute.xlu0 %1323
          %1326 = vset.pattern.permute.xlu0 2
          %1327 = vperm.xlu0 %1326, %v941
          %v1328 = vpop.permute.xlu0 %1327
          %v1330 = vmul.f32 %v1268, %v1250
          %v1331 = vmul.f32 %v1272, %v1251
          %v1332 = vmul.f32 %v1276, %v1252
          %v1333 = vmul.f32 %v1280, %v1253
          %v1334 = vmul.f32 %v1284, %v1254
          %v1335 = vmul.f32 %v1288, %v1255
          %v1336 = vmul.f32 %v1292, %v1256
          %v1337 = vmul.f32 %v1296, %v1257
          %v1338 = vmul.f32 %v1300, %v1258
          %v1339 = vmul.f32 %v1304, %v1259
          %v1340 = vmul.f32 %v1308, %v1260
          %v1341 = vmul.f32 %v1312, %v1261
          %v1342 = vmul.f32 %v1316, %v1262
          %v1343 = vmul.f32 %v1320, %v1263
          %v1344 = vmul.f32 %v1324, %v1264
          %v1345 = vmul.f32 %v1328, %v1265
          %1346 = vst [vmem:[#allocation2 + $0x10] sm:$0xff] %v1330
          %1347 = vst [vmem:[#allocation2 + $0x30] sm:$0xff] %v1331
          %1348 = vst [vmem:[#allocation2 + $0x50] sm:$0xff] %v1332
          %1349 = vst [vmem:[#allocation2 + $0x70] sm:$0xff] %v1333
          %1350 = vst [vmem:[#allocation2 + $0x90] sm:$0xff] %v1334
          %1351 = vst [vmem:[#allocation2 + $0xb0] sm:$0xff] %v1335
          %1352 = vst [vmem:[#allocation2 + $0xd0] sm:$0xff] %v1336
          %1353 = vst [vmem:[#allocation2 + $0xf0] sm:$0xff] %v1337
          %1354 = vst [vmem:[#allocation2 + $0x110] sm:$0xff] %v1338
          %1355 = vst [vmem:[#allocation2 + $0x130] sm:$0xff] %v1339
          %1356 = vst [vmem:[#allocation2 + $0x150] sm:$0xff] %v1340
          %1357 = vst [vmem:[#allocation2 + $0x170] sm:$0xff] %v1341
          %1358 = vst [vmem:[#allocation2 + $0x190] sm:$0xff] %v1342
          %1359 = vst [vmem:[#allocation2 + $0x1b0] sm:$0xff] %v1343
          %1360 = vst [vmem:[#allocation2 + $0x1d0] sm:$0xff] %v1344
          %1361 = vst [vmem:[#allocation2 + $0x1f0] sm:$0xff] %v1345
          %v1362 = vpack.c.bf16 %v1330, %v1330
          %v1363 = vpack.c.bf16 %v1331, %v1331
          %v1364 = vpack.c.bf16 %v1332, %v1332
          %v1365 = vpack.c.bf16 %v1333, %v1333
          %v1366 = vpack.c.bf16 %v1334, %v1334
          %v1367 = vpack.c.bf16 %v1335, %v1335
          %v1368 = vpack.c.bf16 %v1336, %v1336
          %v1369 = vpack.c.bf16 %v1337, %v1337
          %v1370 = vpack.c.bf16 %v1338, %v1338
          %v1371 = vpack.c.bf16 %v1339, %v1339
          %v1372 = vpack.c.bf16 %v1340, %v1340
          %v1373 = vpack.c.bf16 %v1341, %v1341
          %v1374 = vpack.c.bf16 %v1342, %v1342
          %v1375 = vpack.c.bf16 %v1343, %v1343
          %v1376 = vpack.c.bf16 %v1344, %v1344
          %v1377 = vpack.c.bf16 %v1345, %v1345
          %1378 = vst [vmem:[#allocation3 + $0x8] sm:$0xf] %v1362
          %1379 = vst [vmem:[#allocation3 + $0x18] sm:$0xf] %v1363
          %1380 = vst [vmem:[#allocation3 + $0x28] sm:$0xf] %v1364
          %1381 = vst [vmem:[#allocation3 + $0x38] sm:$0xf] %v1365
          %1382 = vst [vmem:[#allocation3 + $0x48] sm:$0xf] %v1366
          %1383 = vst [vmem:[#allocation3 + $0x58] sm:$0xf] %v1367
          %1384 = vst [vmem:[#allocation3 + $0x68] sm:$0xf] %v1368
          %1385 = vst [vmem:[#allocation3 + $0x78] sm:$0xf] %v1369
          %1386 = vst [vmem:[#allocation3 + $0x88] sm:$0xf] %v1370
          %1387 = vst [vmem:[#allocation3 + $0x98] sm:$0xf] %v1371
          %1388 = vst [vmem:[#allocation3 + $0xa8] sm:$0xf] %v1372
          %1389 = vst [vmem:[#allocation3 + $0xb8] sm:$0xf] %v1373
          %1390 = vst [vmem:[#allocation3 + $0xc8] sm:$0xf] %v1374
          %1391 = vst [vmem:[#allocation3 + $0xd8] sm:$0xf] %v1375
          %1392 = vst [vmem:[#allocation3 + $0xe8] sm:$0xf] %v1376
          %1393 = vst [vmem:[#allocation3 + $0xf8] sm:$0xf] %v1377
          %v1394 = vperm.slane %v942, 3
          %v1395 = vsub.f32 %v664, %v1394
          %v1396 = vsub.f32 %v665, %v1394
          %v1397 = vsub.f32 %v666, %v1394
          %v1398 = vsub.f32 %v667, %v1394
          %v1399 = vsub.f32 %v668, %v1394
          %v1400 = vsub.f32 %v669, %v1394
          %v1401 = vsub.f32 %v670, %v1394
          %v1402 = vsub.f32 %v671, %v1394
          %v1403 = vsub.f32 %v672, %v1394
          %v1404 = vsub.f32 %v673, %v1394
          %v1405 = vsub.f32 %v674, %v1394
          %v1406 = vsub.f32 %v675, %v1394
          %v1407 = vsub.f32 %v676, %v1394
          %v1408 = vsub.f32 %v677, %v1394
          %v1409 = vsub.f32 %v678, %v1394
          %v1410 = vsub.f32 %v679, %v1394
          %1411 = vset.pattern.permute.xlu0 3
          %1412 = vperm.xlu0 %1411, %v926
          %v1413 = vpop.permute.xlu0 %1412
          %1415 = vset.pattern.permute.xlu0 3
          %1416 = vperm.xlu0 %1415, %v927
          %v1417 = vpop.permute.xlu0 %1416
          %1419 = vset.pattern.permute.xlu0 3
          %1420 = vperm.xlu0 %1419, %v928
          %v1421 = vpop.permute.xlu0 %1420
          %1423 = vset.pattern.permute.xlu0 3
          %1424 = vperm.xlu0 %1423, %v929
          %v1425 = vpop.permute.xlu0 %1424
          %1427 = vset.pattern.permute.xlu0 3
          %1428 = vperm.xlu0 %1427, %v930
          %v1429 = vpop.permute.xlu0 %1428
          %1431 = vset.pattern.permute.xlu0 3
          %1432 = vperm.xlu0 %1431, %v931
          %v1433 = vpop.permute.xlu0 %1432
          %1435 = vset.pattern.permute.xlu0 3
          %1436 = vperm.xlu0 %1435, %v932
          %v1437 = vpop.permute.xlu0 %1436
          %1439 = vset.pattern.permute.xlu0 3
          %1440 = vperm.xlu0 %1439, %v933
          %v1441 = vpop.permute.xlu0 %1440
          %1443 = vset.pattern.permute.xlu0 3
          %1444 = vperm.xlu0 %1443, %v934
          %v1445 = vpop.permute.xlu0 %1444
          %1447 = vset.pattern.permute.xlu0 3
          %1448 = vperm.xlu0 %1447, %v935
          %v1449 = vpop.permute.xlu0 %1448
          %1451 = vset.pattern.permute.xlu0 3
          %1452 = vperm.xlu0 %1451, %v936
          %v1453 = vpop.permute.xlu0 %1452
          %1455 = vset.pattern.permute.xlu0 3
          %1456 = vperm.xlu0 %1455, %v937
          %v1457 = vpop.permute.xlu0 %1456
          %1459 = vset.pattern.permute.xlu0 3
          %1460 = vperm.xlu0 %1459, %v938
          %v1461 = vpop.permute.xlu0 %1460
          %1463 = vset.pattern.permute.xlu0 3
          %1464 = vperm.xlu0 %1463, %v939
          %v1465 = vpop.permute.xlu0 %1464
          %1467 = vset.pattern.permute.xlu0 3
          %1468 = vperm.xlu0 %1467, %v940
          %v1469 = vpop.permute.xlu0 %1468
          %1471 = vset.pattern.permute.xlu0 3
          %1472 = vperm.xlu0 %1471, %v941
          %v1473 = vpop.permute.xlu0 %1472
          %v1475 = vmul.f32 %v1413, %v1395
          %v1476 = vmul.f32 %v1417, %v1396
          %v1477 = vmul.f32 %v1421, %v1397
          %v1478 = vmul.f32 %v1425, %v1398
          %v1479 = vmul.f32 %v1429, %v1399
          %v1480 = vmul.f32 %v1433, %v1400
          %v1481 = vmul.f32 %v1437, %v1401
          %v1482 = vmul.f32 %v1441, %v1402
          %v1483 = vmul.f32 %v1445, %v1403
          %v1484 = vmul.f32 %v1449, %v1404
          %v1485 = vmul.f32 %v1453, %v1405
          %v1486 = vmul.f32 %v1457, %v1406
          %v1487 = vmul.f32 %v1461, %v1407
          %v1488 = vmul.f32 %v1465, %v1408
          %v1489 = vmul.f32 %v1469, %v1409
          %v1490 = vmul.f32 %v1473, %v1410
          %1491 = vst [vmem:[#allocation2 + $0x18] sm:$0xff] %v1475
          %1492 = vst [vmem:[#allocation2 + $0x38] sm:$0xff] %v1476
          %1493 = vst [vmem:[#allocation2 + $0x58] sm:$0xff] %v1477
          %1494 = vst [vmem:[#allocation2 + $0x78] sm:$0xff] %v1478
          %1495 = vst [vmem:[#allocation2 + $0x98] sm:$0xff] %v1479
          %1496 = vst [vmem:[#allocation2 + $0xb8] sm:$0xff] %v1480
          %1497 = vst [vmem:[#allocation2 + $0xd8] sm:$0xff] %v1481
          %1498 = vst [vmem:[#allocation2 + $0xf8] sm:$0xff] %v1482
          %1499 = vst [vmem:[#allocation2 + $0x118] sm:$0xff] %v1483
          %1500 = vst [vmem:[#allocation2 + $0x138] sm:$0xff] %v1484
          %1501 = vst [vmem:[#allocation2 + $0x158] sm:$0xff] %v1485
          %1502 = vst [vmem:[#allocation2 + $0x178] sm:$0xff] %v1486
          %1503 = vst [vmem:[#allocation2 + $0x198] sm:$0xff] %v1487
          %1504 = vst [vmem:[#allocation2 + $0x1b8] sm:$0xff] %v1488
          %1505 = vst [vmem:[#allocation2 + $0x1d8] sm:$0xff] %v1489
          %1506 = vst [vmem:[#allocation2 + $0x1f8] sm:$0xff] %v1490
          %v1507 = vpack.c.bf16 %v1475, %v1475
          %v1508 = vpack.c.bf16 %v1476, %v1476
          %v1509 = vpack.c.bf16 %v1477, %v1477
          %v1510 = vpack.c.bf16 %v1478, %v1478
          %v1511 = vpack.c.bf16 %v1479, %v1479
          %v1512 = vpack.c.bf16 %v1480, %v1480
          %v1513 = vpack.c.bf16 %v1481, %v1481
          %v1514 = vpack.c.bf16 %v1482, %v1482
          %v1515 = vpack.c.bf16 %v1483, %v1483
          %v1516 = vpack.c.bf16 %v1484, %v1484
          %v1517 = vpack.c.bf16 %v1485, %v1485
          %v1518 = vpack.c.bf16 %v1486, %v1486
          %v1519 = vpack.c.bf16 %v1487, %v1487
          %v1520 = vpack.c.bf16 %v1488, %v1488
          %v1521 = vpack.c.bf16 %v1489, %v1489
          %v1522 = vpack.c.bf16 %v1490, %v1490
          %1523 = vst [vmem:[#allocation3 + $0xc] sm:$0xf] %v1507
          %1524 = vst [vmem:[#allocation3 + $0x1c] sm:$0xf] %v1508
          %1525 = vst [vmem:[#allocation3 + $0x2c] sm:$0xf] %v1509
          %1526 = vst [vmem:[#allocation3 + $0x3c] sm:$0xf] %v1510
          %1527 = vst [vmem:[#allocation3 + $0x4c] sm:$0xf] %v1511
          %1528 = vst [vmem:[#allocation3 + $0x5c] sm:$0xf] %v1512
          %1529 = vst [vmem:[#allocation3 + $0x6c] sm:$0xf] %v1513
          %1530 = vst [vmem:[#allocation3 + $0x7c] sm:$0xf] %v1514
          %1531 = vst [vmem:[#allocation3 + $0x8c] sm:$0xf] %v1515
          %1532 = vst [vmem:[#allocation3 + $0x9c] sm:$0xf] %v1516
          %1533 = vst [vmem:[#allocation3 + $0xac] sm:$0xf] %v1517
          %1534 = vst [vmem:[#allocation3 + $0xbc] sm:$0xf] %v1518
          %1535 = vst [vmem:[#allocation3 + $0xcc] sm:$0xf] %v1519
          %1536 = vst [vmem:[#allocation3 + $0xdc] sm:$0xf] %v1520
          %1537 = vst [vmem:[#allocation3 + $0xec] sm:$0xf] %v1521
          %1538 = vst [vmem:[#allocation3 + $0xfc] sm:$0xf] %v1522
          %vm1539 = vcmask 7168
          %1540 = vst.msk [vmem:[#allocation4] sm:$0xff] %vm1539, 0.0
          %1541 = vst.msk [vmem:[#allocation4 + $0x8] sm:$0xff] %vm1539, 0.0
          %1542 = vst.msk [vmem:[#allocation4 + $0x10] sm:$0xff] %vm1539, 0.0
          %1543 = vst.msk [vmem:[#allocation4 + $0x18] sm:$0xff] %vm1539, 0.0
          %1544 = vst.msk [vmem:[#allocation4 + $0x20] sm:$0xff] %vm1539, 0.0
          %1545 = vst.msk [vmem:[#allocation4 + $0x28] sm:$0xff] %vm1539, 0.0
          %1546 = vst.msk [vmem:[#allocation4 + $0x30] sm:$0xff] %vm1539, 0.0
          %1547 = vst.msk [vmem:[#allocation4 + $0x38] sm:$0xff] %vm1539, 0.0
          %1548 = vst.msk [vmem:[#allocation4 + $0x40] sm:$0xff] %vm1539, 0.0
          %1549 = vst.msk [vmem:[#allocation4 + $0x48] sm:$0xff] %vm1539, 0.0
          %1550 = vst.msk [vmem:[#allocation4 + $0x50] sm:$0xff] %vm1539, 0.0
          %1551 = vst.msk [vmem:[#allocation4 + $0x58] sm:$0xff] %vm1539, 0.0
          %1552 = vst.msk [vmem:[#allocation4 + $0x60] sm:$0xff] %vm1539, 0.0
          %1553 = vst.msk [vmem:[#allocation4 + $0x68] sm:$0xff] %vm1539, 0.0
          %1554 = vst.msk [vmem:[#allocation4 + $0x70] sm:$0xff] %vm1539, 0.0
          %1555 = vst.msk [vmem:[#allocation4 + $0x78] sm:$0xff] %vm1539, 0.0
        $region64: #{tpu_custom_call.1} parent=51 // pred_fallthru
          _
        %v1556 = vld [vmem:[#allocation3] sm:$0xff]
        %v1557 = vld [vmem:[#allocation3 + $0x8] sm:$0xff]
        %v1558 = vld [vmem:[#allocation3 + $0x10] sm:$0xff]
        %v1559 = vld [vmem:[#allocation3 + $0x18] sm:$0xff]
        %v1560 = vld [vmem:[#allocation3 + $0x20] sm:$0xff]
        %v1561 = vld [vmem:[#allocation3 + $0x28] sm:$0xff]
        %v1562 = vld [vmem:[#allocation3 + $0x30] sm:$0xff]
        %v1563 = vld [vmem:[#allocation3 + $0x38] sm:$0xff]
        %v1564 = vld [vmem:[#allocation3 + $0x40] sm:$0xff]
        %v1565 = vld [vmem:[#allocation3 + $0x48] sm:$0xff]
        %v1566 = vld [vmem:[#allocation3 + $0x50] sm:$0xff]
        %v1567 = vld [vmem:[#allocation3 + $0x58] sm:$0xff]
        %v1568 = vld [vmem:[#allocation3 + $0x60] sm:$0xff]
        %v1569 = vld [vmem:[#allocation3 + $0x68] sm:$0xff]
        %v1570 = vld [vmem:[#allocation3 + $0x70] sm:$0xff]
        %v1571 = vld [vmem:[#allocation3 + $0x78] sm:$0xff]
        %v1572 = vld [vmem:[#allocation3 + $0x80] sm:$0xff]
        %v1573 = vld [vmem:[#allocation3 + $0x88] sm:$0xff]
        %v1574 = vld [vmem:[#allocation3 + $0x90] sm:$0xff]
        %v1575 = vld [vmem:[#allocation3 + $0x98] sm:$0xff]
        %v1576 = vld [vmem:[#allocation3 + $0xa0] sm:$0xff]
        %v1577 = vld [vmem:[#allocation3 + $0xa8] sm:$0xff]
        %v1578 = vld [vmem:[#allocation3 + $0xb0] sm:$0xff]
        %v1579 = vld [vmem:[#allocation3 + $0xb8] sm:$0xff]
        %v1580 = vld [vmem:[#allocation3 + $0xc0] sm:$0xff]
        %v1581 = vld [vmem:[#allocation3 + $0xc8] sm:$0xff]
        %v1582 = vld [vmem:[#allocation3 + $0xd0] sm:$0xff]
        %v1583 = vld [vmem:[#allocation3 + $0xd8] sm:$0xff]
        %v1584 = vld [vmem:[#allocation3 + $0xe0] sm:$0xff]
        %v1585 = vld [vmem:[#allocation3 + $0xe8] sm:$0xff]
        %v1586 = vld [vmem:[#allocation3 + $0xf0] sm:$0xff]
        %v1587 = vld [vmem:[#allocation3 + $0xf8] sm:$0xff]
        %v1588 = vld [vmem:[%s362] sm:$0xff]
        %v1589 = vld [vmem:[%s362 + $0x8] sm:$0xff]
        %v1590 = vld [vmem:[%s362 + $0x10] sm:$0xff]
        %v1591 = vld [vmem:[%s362 + $0x18] sm:$0xff]
        %v1592 = vld [vmem:[%s362 + $0x20] sm:$0xff]
        %v1593 = vld [vmem:[%s362 + $0x28] sm:$0xff]
        %v1594 = vld [vmem:[%s362 + $0x30] sm:$0xff]
        %v1595 = vld [vmem:[%s362 + $0x38] sm:$0xff]
        %v1596 = vld [vmem:[%s362 + $0x40] sm:$0xff]
        %v1597 = vld [vmem:[%s362 + $0x48] sm:$0xff]
        %v1598 = vld [vmem:[%s362 + $0x50] sm:$0xff]
        %v1599 = vld [vmem:[%s362 + $0x58] sm:$0xff]
        %v1600 = vld [vmem:[%s362 + $0x60] sm:$0xff]
        %v1601 = vld [vmem:[%s362 + $0x68] sm:$0xff]
        %v1602 = vld [vmem:[%s362 + $0x70] sm:$0xff]
        %v1603 = vld [vmem:[%s362 + $0x78] sm:$0xff]
        %v1604 = vld [vmem:[%s362 + $0x80] sm:$0xff]
        %v1605 = vld [vmem:[%s362 + $0x88] sm:$0xff]
        %v1606 = vld [vmem:[%s362 + $0x90] sm:$0xff]
        %v1607 = vld [vmem:[%s362 + $0x98] sm:$0xff]
        %v1608 = vld [vmem:[%s362 + $0xa0] sm:$0xff]
        %v1609 = vld [vmem:[%s362 + $0xa8] sm:$0xff]
        %v1610 = vld [vmem:[%s362 + $0xb0] sm:$0xff]
        %v1611 = vld [vmem:[%s362 + $0xb8] sm:$0xff]
        %v1612 = vld [vmem:[%s362 + $0xc0] sm:$0xff]
        %v1613 = vld [vmem:[%s362 + $0xc8] sm:$0xff]
        %v1614 = vld [vmem:[%s362 + $0xd0] sm:$0xff]
        %v1615 = vld [vmem:[%s362 + $0xd8] sm:$0xff]
        %v1616 = vld [vmem:[%s362 + $0xe0] sm:$0xff]
        %v1617 = vld [vmem:[%s362 + $0xe8] sm:$0xff]
        %v1618 = vld [vmem:[%s362 + $0xf0] sm:$0xff]
        %v1619 = vld [vmem:[%s362 + $0xf8] sm:$0xff]
        %v1620 = vld [vmem:[%s362 + $0x100] sm:$0xff]
        %v1621 = vld [vmem:[%s362 + $0x108] sm:$0xff]
        %v1622 = vld [vmem:[%s362 + $0x110] sm:$0xff]
        %v1623 = vld [vmem:[%s362 + $0x118] sm:$0xff]
        %v1624 = vld [vmem:[%s362 + $0x120] sm:$0xff]
        %v1625 = vld [vmem:[%s362 + $0x128] sm:$0xff]
        %v1626 = vld [vmem:[%s362 + $0x130] sm:$0xff]
        %v1627 = vld [vmem:[%s362 + $0x138] sm:$0xff]
        %v1628 = vld [vmem:[%s362 + $0x140] sm:$0xff]
        %v1629 = vld [vmem:[%s362 + $0x148] sm:$0xff]
        %v1630 = vld [vmem:[%s362 + $0x150] sm:$0xff]
        %v1631 = vld [vmem:[%s362 + $0x158] sm:$0xff]
        %v1632 = vld [vmem:[%s362 + $0x160] sm:$0xff]
        %v1633 = vld [vmem:[%s362 + $0x168] sm:$0xff]
        %v1634 = vld [vmem:[%s362 + $0x170] sm:$0xff]
        %v1635 = vld [vmem:[%s362 + $0x178] sm:$0xff]
        %v1636 = vld [vmem:[%s362 + $0x180] sm:$0xff]
        %v1637 = vld [vmem:[%s362 + $0x188] sm:$0xff]
        %v1638 = vld [vmem:[%s362 + $0x190] sm:$0xff]
        %v1639 = vld [vmem:[%s362 + $0x198] sm:$0xff]
        %v1640 = vld [vmem:[%s362 + $0x1a0] sm:$0xff]
        %v1641 = vld [vmem:[%s362 + $0x1a8] sm:$0xff]
        %v1642 = vld [vmem:[%s362 + $0x1b0] sm:$0xff]
        %v1643 = vld [vmem:[%s362 + $0x1b8] sm:$0xff]
        %v1644 = vld [vmem:[%s362 + $0x1c0] sm:$0xff]
        %v1645 = vld [vmem:[%s362 + $0x1c8] sm:$0xff]
        %v1646 = vld [vmem:[%s362 + $0x1d0] sm:$0xff]
        %v1647 = vld [vmem:[%s362 + $0x1d8] sm:$0xff]
        %v1648 = vld [vmem:[%s362 + $0x1e0] sm:$0xff]
        %v1649 = vld [vmem:[%s362 + $0x1e8] sm:$0xff]
        %v1650 = vld [vmem:[%s362 + $0x1f0] sm:$0xff]
        %v1651 = vld [vmem:[%s362 + $0x1f8] sm:$0xff]
        %v1652 = vld [vmem:[%s413] sm:$0x3]
        %v1654 = vperm.slane %v1652, 0
        %v1655 = vperm.slane %v1652, 1
        %v1690 = vunpack.c.l.b16 %v1556
        %v1691 = vunpack.c.h.b16 %v1556
        %v1692 = vunpack.c.l.b16 %v1557
        %v1693 = vunpack.c.h.b16 %v1557
        %v1694 = vunpack.c.l.b16 %v1558
        %v1695 = vunpack.c.h.b16 %v1558
        %v1696 = vunpack.c.l.b16 %v1559
        %v1697 = vunpack.c.h.b16 %v1559
        %v1698 = vunpack.c.l.b16 %v1560
        %v1699 = vunpack.c.h.b16 %v1560
        %v1700 = vunpack.c.l.b16 %v1561
        %v1701 = vunpack.c.h.b16 %v1561
        %v1702 = vunpack.c.l.b16 %v1562
        %v1703 = vunpack.c.h.b16 %v1562
        %v1704 = vunpack.c.l.b16 %v1563
        %v1705 = vunpack.c.h.b16 %v1563
        %v1706 = vunpack.c.l.b16 %v1564
        %v1707 = vunpack.c.h.b16 %v1564
        %v1708 = vunpack.c.l.b16 %v1565
        %v1709 = vunpack.c.h.b16 %v1565
        %v1710 = vunpack.c.l.b16 %v1566
        %v1711 = vunpack.c.h.b16 %v1566
        %v1712 = vunpack.c.l.b16 %v1567
        %v1713 = vunpack.c.h.b16 %v1567
        %v1714 = vunpack.c.l.b16 %v1568
        %v1715 = vunpack.c.h.b16 %v1568
        %v1716 = vunpack.c.l.b16 %v1569
        %v1717 = vunpack.c.h.b16 %v1569
        %v1718 = vunpack.c.l.b16 %v1570
        %v1719 = vunpack.c.h.b16 %v1570
        %v1720 = vunpack.c.l.b16 %v1571
        %v1721 = vunpack.c.h.b16 %v1571
        %v1722 = vunpack.c.l.b16 %v1572
        %v1723 = vunpack.c.h.b16 %v1572
        %v1724 = vunpack.c.l.b16 %v1573
        %v1725 = vunpack.c.h.b16 %v1573
        %v1726 = vunpack.c.l.b16 %v1574
        %v1727 = vunpack.c.h.b16 %v1574
        %v1728 = vunpack.c.l.b16 %v1575
        %v1729 = vunpack.c.h.b16 %v1575
        %v1730 = vunpack.c.l.b16 %v1576
        %v1731 = vunpack.c.h.b16 %v1576
        %v1732 = vunpack.c.l.b16 %v1577
        %v1733 = vunpack.c.h.b16 %v1577
        %v1734 = vunpack.c.l.b16 %v1578
        %v1735 = vunpack.c.h.b16 %v1578
        %v1736 = vunpack.c.l.b16 %v1579
        %v1737 = vunpack.c.h.b16 %v1579
        %v1738 = vunpack.c.l.b16 %v1580
        %v1739 = vunpack.c.h.b16 %v1580
        %v1740 = vunpack.c.l.b16 %v1581
        %v1741 = vunpack.c.h.b16 %v1581
        %v1742 = vunpack.c.l.b16 %v1582
        %v1743 = vunpack.c.h.b16 %v1582
        %v1744 = vunpack.c.l.b16 %v1583
        %v1745 = vunpack.c.h.b16 %v1583
        %v1746 = vunpack.c.l.b16 %v1584
        %v1747 = vunpack.c.h.b16 %v1584
        %v1748 = vunpack.c.l.b16 %v1585
        %v1749 = vunpack.c.h.b16 %v1585
        %v1750 = vunpack.c.l.b16 %v1586
        %v1751 = vunpack.c.h.b16 %v1586
        %v1752 = vunpack.c.l.b16 %v1587
        %v1753 = vunpack.c.h.b16 %v1587
        %v1754 = vpack.c.b16 %v1694, %v1690
        %v1755 = vpack.c.b16 %v1695, %v1691
        %v1756 = vpack.c.b16 %v1696, %v1692
        %v1757 = vpack.c.b16 %v1697, %v1693
        %v1758 = vpack.c.b16 %v1702, %v1698
        %v1759 = vpack.c.b16 %v1703, %v1699
        %v1760 = vpack.c.b16 %v1704, %v1700
        %v1761 = vpack.c.b16 %v1705, %v1701
        %v1762 = vpack.c.b16 %v1710, %v1706
        %v1763 = vpack.c.b16 %v1711, %v1707
        %v1764 = vpack.c.b16 %v1712, %v1708
        %v1765 = vpack.c.b16 %v1713, %v1709
        %v1766 = vpack.c.b16 %v1718, %v1714
        %v1767 = vpack.c.b16 %v1719, %v1715
        %v1768 = vpack.c.b16 %v1720, %v1716
        %v1769 = vpack.c.b16 %v1721, %v1717
        %v1770 = vpack.c.b16 %v1726, %v1722
        %v1771 = vpack.c.b16 %v1727, %v1723
        %v1772 = vpack.c.b16 %v1728, %v1724
        %v1773 = vpack.c.b16 %v1729, %v1725
        %v1774 = vpack.c.b16 %v1734, %v1730
        %v1775 = vpack.c.b16 %v1735, %v1731
        %v1776 = vpack.c.b16 %v1736, %v1732
        %v1777 = vpack.c.b16 %v1737, %v1733
        %v1778 = vpack.c.b16 %v1742, %v1738
        %v1779 = vpack.c.b16 %v1743, %v1739
        %v1780 = vpack.c.b16 %v1744, %v1740
        %v1781 = vpack.c.b16 %v1745, %v1741
        %v1782 = vpack.c.b16 %v1750, %v1746
        %v1783 = vpack.c.b16 %v1751, %v1747
        %v1784 = vpack.c.b16 %v1752, %v1748
        %v1785 = vpack.c.b16 %v1753, %v1749
        %v1882 = vunpack.c.l.b16 %v1588
        %v1883 = vunpack.c.h.b16 %v1588
        %v1884 = vunpack.c.l.b16 %v1589
        %v1885 = vunpack.c.h.b16 %v1589
        %v1886 = vunpack.c.l.b16 %v1590
        %v1887 = vunpack.c.h.b16 %v1590
        %v1888 = vunpack.c.l.b16 %v1591
        %v1889 = vunpack.c.h.b16 %v1591
        %v1890 = vunpack.c.l.b16 %v1592
        %v1891 = vunpack.c.h.b16 %v1592
        %v1892 = vunpack.c.l.b16 %v1593
        %v1893 = vunpack.c.h.b16 %v1593
        %v1894 = vunpack.c.l.b16 %v1594
        %v1895 = vunpack.c.h.b16 %v1594
        %v1896 = vunpack.c.l.b16 %v1595
        %v1897 = vunpack.c.h.b16 %v1595
        %v1898 = vunpack.c.l.b16 %v1596
        %v1899 = vunpack.c.h.b16 %v1596
        %v1900 = vunpack.c.l.b16 %v1597
        %v1901 = vunpack.c.h.b16 %v1597
        %v1902 = vunpack.c.l.b16 %v1598
        %v1903 = vunpack.c.h.b16 %v1598
        %v1904 = vunpack.c.l.b16 %v1599
        %v1905 = vunpack.c.h.b16 %v1599
        %v1906 = vunpack.c.l.b16 %v1600
        %v1907 = vunpack.c.h.b16 %v1600
        %v1908 = vunpack.c.l.b16 %v1601
        %v1909 = vunpack.c.h.b16 %v1601
        %v1910 = vunpack.c.l.b16 %v1602
        %v1911 = vunpack.c.h.b16 %v1602
        %v1912 = vunpack.c.l.b16 %v1603
        %v1913 = vunpack.c.h.b16 %v1603
        %v1914 = vunpack.c.l.b16 %v1604
        %v1915 = vunpack.c.h.b16 %v1604
        %v1916 = vunpack.c.l.b16 %v1605
        %v1917 = vunpack.c.h.b16 %v1605
        %v1918 = vunpack.c.l.b16 %v1606
        %v1919 = vunpack.c.h.b16 %v1606
        %v1920 = vunpack.c.l.b16 %v1607
        %v1921 = vunpack.c.h.b16 %v1607
        %v1922 = vunpack.c.l.b16 %v1608
        %v1923 = vunpack.c.h.b16 %v1608
        %v1924 = vunpack.c.l.b16 %v1609
        %v1925 = vunpack.c.h.b16 %v1609
        %v1926 = vunpack.c.l.b16 %v1610
        %v1927 = vunpack.c.h.b16 %v1610
        %v1928 = vunpack.c.l.b16 %v1611
        %v1929 = vunpack.c.h.b16 %v1611
        %v1930 = vunpack.c.l.b16 %v1612
        %v1931 = vunpack.c.h.b16 %v1612
        %v1932 = vunpack.c.l.b16 %v1613
        %v1933 = vunpack.c.h.b16 %v1613
        %v1934 = vunpack.c.l.b16 %v1614
        %v1935 = vunpack.c.h.b16 %v1614
        %v1936 = vunpack.c.l.b16 %v1615
        %v1937 = vunpack.c.h.b16 %v1615
        %v1938 = vunpack.c.l.b16 %v1616
        %v1939 = vunpack.c.h.b16 %v1616
        %v1940 = vunpack.c.l.b16 %v1617
        %v1941 = vunpack.c.h.b16 %v1617
        %v1942 = vunpack.c.l.b16 %v1618
        %v1943 = vunpack.c.h.b16 %v1618
        %v1944 = vunpack.c.l.b16 %v1619
        %v1945 = vunpack.c.h.b16 %v1619
        %v1946 = vunpack.c.l.b16 %v1620
        %v1947 = vunpack.c.h.b16 %v1620
        %v1948 = vunpack.c.l.b16 %v1621
        %v1949 = vunpack.c.h.b16 %v1621
        %v1950 = vunpack.c.l.b16 %v1622
        %v1951 = vunpack.c.h.b16 %v1622
        %v1952 = vunpack.c.l.b16 %v1623
        %v1953 = vunpack.c.h.b16 %v1623
        %v1954 = vunpack.c.l.b16 %v1624
        %v1955 = vunpack.c.h.b16 %v1624
        %v1956 = vunpack.c.l.b16 %v1625
        %v1957 = vunpack.c.h.b16 %v1625
        %v1958 = vunpack.c.l.b16 %v1626
        %v1959 = vunpack.c.h.b16 %v1626
        %v1960 = vunpack.c.l.b16 %v1627
        %v1961 = vunpack.c.h.b16 %v1627
        %v1962 = vunpack.c.l.b16 %v1628
        %v1963 = vunpack.c.h.b16 %v1628
        %v1964 = vunpack.c.l.b16 %v1629
        %v1965 = vunpack.c.h.b16 %v1629
        %v1966 = vunpack.c.l.b16 %v1630
        %v1967 = vunpack.c.h.b16 %v1630
        %v1968 = vunpack.c.l.b16 %v1631
        %v1969 = vunpack.c.h.b16 %v1631
        %v1970 = vunpack.c.l.b16 %v1632
        %v1971 = vunpack.c.h.b16 %v1632
        %v1972 = vunpack.c.l.b16 %v1633
        %v1973 = vunpack.c.h.b16 %v1633
        %v1974 = vunpack.c.l.b16 %v1634
        %v1975 = vunpack.c.h.b16 %v1634
        %v1976 = vunpack.c.l.b16 %v1635
        %v1977 = vunpack.c.h.b16 %v1635
        %v1978 = vunpack.c.l.b16 %v1636
        %v1979 = vunpack.c.h.b16 %v1636
        %v1980 = vunpack.c.l.b16 %v1637
        %v1981 = vunpack.c.h.b16 %v1637
        %v1982 = vunpack.c.l.b16 %v1638
        %v1983 = vunpack.c.h.b16 %v1638
        %v1984 = vunpack.c.l.b16 %v1639
        %v1985 = vunpack.c.h.b16 %v1639
        %v1986 = vunpack.c.l.b16 %v1640
        %v1987 = vunpack.c.h.b16 %v1640
        %v1988 = vunpack.c.l.b16 %v1641
        %v1989 = vunpack.c.h.b16 %v1641
        %v1990 = vunpack.c.l.b16 %v1642
        %v1991 = vunpack.c.h.b16 %v1642
        %v1992 = vunpack.c.l.b16 %v1643
        %v1993 = vunpack.c.h.b16 %v1643
        %v1994 = vunpack.c.l.b16 %v1644
        %v1995 = vunpack.c.h.b16 %v1644
        %v1996 = vunpack.c.l.b16 %v1645
        %v1997 = vunpack.c.h.b16 %v1645
        %v1998 = vunpack.c.l.b16 %v1646
        %v1999 = vunpack.c.h.b16 %v1646
        %v2000 = vunpack.c.l.b16 %v1647
        %v2001 = vunpack.c.h.b16 %v1647
        %v2002 = vunpack.c.l.b16 %v1648
        %v2003 = vunpack.c.h.b16 %v1648
        %v2004 = vunpack.c.l.b16 %v1649
        %v2005 = vunpack.c.h.b16 %v1649
        %v2006 = vunpack.c.l.b16 %v1650
        %v2007 = vunpack.c.h.b16 %v1650
        %v2008 = vunpack.c.l.b16 %v1651
        %v2009 = vunpack.c.h.b16 %v1651
        %v2010 = vpack.c.b16 %v1884, %v1882
        %v2011 = vpack.c.b16 %v1885, %v1883
        %v2012 = vpack.c.b16 %v1888, %v1886
        %v2013 = vpack.c.b16 %v1889, %v1887
        %v2014 = vpack.c.b16 %v1892, %v1890
        %v2015 = vpack.c.b16 %v1893, %v1891
        %v2016 = vpack.c.b16 %v1896, %v1894
        %v2017 = vpack.c.b16 %v1897, %v1895
        %v2018 = vpack.c.b16 %v1900, %v1898
        %v2019 = vpack.c.b16 %v1901, %v1899
        %v2020 = vpack.c.b16 %v1904, %v1902
        %v2021 = vpack.c.b16 %v1905, %v1903
        %v2022 = vpack.c.b16 %v1908, %v1906
        %v2023 = vpack.c.b16 %v1909, %v1907
        %v2024 = vpack.c.b16 %v1912, %v1910
        %v2025 = vpack.c.b16 %v1913, %v1911
        %v2026 = vpack.c.b16 %v1916, %v1914
        %v2027 = vpack.c.b16 %v1917, %v1915
        %v2028 = vpack.c.b16 %v1920, %v1918
        %v2029 = vpack.c.b16 %v1921, %v1919
        %v2030 = vpack.c.b16 %v1924, %v1922
        %v2031 = vpack.c.b16 %v1925, %v1923
        %v2032 = vpack.c.b16 %v1928, %v1926
        %v2033 = vpack.c.b16 %v1929, %v1927
        %v2034 = vpack.c.b16 %v1932, %v1930
        %v2035 = vpack.c.b16 %v1933, %v1931
        %v2036 = vpack.c.b16 %v1936, %v1934
        %v2037 = vpack.c.b16 %v1937, %v1935
        %v2038 = vpack.c.b16 %v1940, %v1938
        %v2039 = vpack.c.b16 %v1941, %v1939
        %v2040 = vpack.c.b16 %v1944, %v1942
        %v2041 = vpack.c.b16 %v1945, %v1943
        %v2042 = vpack.c.b16 %v1948, %v1946
        %v2043 = vpack.c.b16 %v1949, %v1947
        %v2044 = vpack.c.b16 %v1952, %v1950
        %v2045 = vpack.c.b16 %v1953, %v1951
        %v2046 = vpack.c.b16 %v1956, %v1954
        %v2047 = vpack.c.b16 %v1957, %v1955
        %v2048 = vpack.c.b16 %v1960, %v1958
        %v2049 = vpack.c.b16 %v1961, %v1959
        %v2050 = vpack.c.b16 %v1964, %v1962
        %v2051 = vpack.c.b16 %v1965, %v1963
        %v2052 = vpack.c.b16 %v1968, %v1966
        %v2053 = vpack.c.b16 %v1969, %v1967
        %v2054 = vpack.c.b16 %v1972, %v1970
        %v2055 = vpack.c.b16 %v1973, %v1971
        %v2056 = vpack.c.b16 %v1976, %v1974
        %v2057 = vpack.c.b16 %v1977, %v1975
        %v2058 = vpack.c.b16 %v1980, %v1978
        %v2059 = vpack.c.b16 %v1981, %v1979
        %v2060 = vpack.c.b16 %v1984, %v1982
        %v2061 = vpack.c.b16 %v1985, %v1983
        %v2062 = vpack.c.b16 %v1988, %v1986
        %v2063 = vpack.c.b16 %v1989, %v1987
        %v2064 = vpack.c.b16 %v1992, %v1990
        %v2065 = vpack.c.b16 %v1993, %v1991
        %v2066 = vpack.c.b16 %v1996, %v1994
        %v2067 = vpack.c.b16 %v1997, %v1995
        %v2068 = vpack.c.b16 %v2000, %v1998
        %v2069 = vpack.c.b16 %v2001, %v1999
        %v2070 = vpack.c.b16 %v2004, %v2002
        %v2071 = vpack.c.b16 %v2005, %v2003
        %v2072 = vpack.c.b16 %v2008, %v2006
        %v2073 = vpack.c.b16 %v2009, %v2007
        %2138 = vmatpush.bf16.msra.mxu0 %v2024
        %2139 = vmatpush.bf16.msra.mxu0 %v2022
        %2140 = vmatpush.bf16.msra.mxu0 %v2020
        %2141 = vmatpush.bf16.msra.mxu0 %v2018
        %2142 = vmatpush.bf16.msra.mxu0 %v2016
        %2143 = vmatpush.bf16.msra.mxu0 %v2014
        %2144 = vmatpush.bf16.msra.mxu0 %v2012
        %2145 = vmatpush.bf16.msra.mxu0 %v2010
        %2146 = vmatmul.bf16.gmra.mxu0 %v1754
        %v2147 = vpop.f32.mrf.mxu0
        %v2148 = vadd.f32 %v1654, %v2147
        %v2149 = vpop.f32.mrf.mxu0
        %v2150 = vadd.f32 %v1654, %v2149
        %2151 = vmatmul.bf16.gmra.mxu0 %v1758
        %v2152 = vpop.f32.mrf.mxu0
        %v2153 = vadd.f32 %v1654, %v2152
        %v2154 = vpop.f32.mrf.mxu0
        %v2155 = vadd.f32 %v1654, %v2154
        %2156 = vmatmul.bf16.gmra.mxu0 %v1762
        %v2157 = vpop.f32.mrf.mxu0
        %v2158 = vadd.f32 %v1654, %v2157
        %v2159 = vpop.f32.mrf.mxu0
        %v2160 = vadd.f32 %v1654, %v2159
        %2161 = vmatmul.bf16.gmra.mxu0 %v1766
        %v2162 = vpop.f32.mrf.mxu0
        %v2163 = vadd.f32 %v1654, %v2162
        %v2164 = vpop.f32.mrf.mxu0
        %v2165 = vadd.f32 %v1654, %v2164
        %2166 = vmatmul.bf16.gmra.mxu0 %v1770
        %v2167 = vpop.f32.mrf.mxu0
        %v2168 = vadd.f32 %v1654, %v2167
        %v2169 = vpop.f32.mrf.mxu0
        %v2170 = vadd.f32 %v1654, %v2169
        %2171 = vmatmul.bf16.gmra.mxu0 %v1774
        %v2172 = vpop.f32.mrf.mxu0
        %v2173 = vadd.f32 %v1654, %v2172
        %v2174 = vpop.f32.mrf.mxu0
        %v2175 = vadd.f32 %v1654, %v2174
        %2176 = vmatmul.bf16.gmra.mxu0 %v1778
        %v2177 = vpop.f32.mrf.mxu0
        %v2178 = vadd.f32 %v1654, %v2177
        %v2179 = vpop.f32.mrf.mxu0
        %v2180 = vadd.f32 %v1654, %v2179
        %2181 = vmatmul.bf16.gmra.mxu0 %v1782
        %v2182 = vpop.f32.mrf.mxu0
        %v2183 = vadd.f32 %v1654, %v2182
        %v2184 = vpop.f32.mrf.mxu0
        %v2185 = vadd.f32 %v1654, %v2184
        %2186 = vdwg.mxu0
        %2187 = vmatpush.bf16.msra.mxu0 %v2040
        %2188 = vmatpush.bf16.msra.mxu0 %v2038
        %2189 = vmatpush.bf16.msra.mxu0 %v2036
        %2190 = vmatpush.bf16.msra.mxu0 %v2034
        %2191 = vmatpush.bf16.msra.mxu0 %v2032
        %2192 = vmatpush.bf16.msra.mxu0 %v2030
        %2193 = vmatpush.bf16.msra.mxu0 %v2028
        %2194 = vmatpush.bf16.msra.mxu0 %v2026
        %2195 = vmatmul.bf16.gmra.mxu0 %v1755
        %v2196 = vpop.f32.mrf.mxu0
        %v2197 = vadd.f32 %v2148, %v2196
        %v2198 = vpop.f32.mrf.mxu0
        %v2199 = vadd.f32 %v2150, %v2198
        %2200 = vmatmul.bf16.gmra.mxu0 %v1759
        %v2201 = vpop.f32.mrf.mxu0
        %v2202 = vadd.f32 %v2153, %v2201
        %v2203 = vpop.f32.mrf.mxu0
        %v2204 = vadd.f32 %v2155, %v2203
        %2205 = vmatmul.bf16.gmra.mxu0 %v1763
        %v2206 = vpop.f32.mrf.mxu0
        %v2207 = vadd.f32 %v2158, %v2206
        %v2208 = vpop.f32.mrf.mxu0
        %v2209 = vadd.f32 %v2160, %v2208
        %2210 = vmatmul.bf16.gmra.mxu0 %v1767
        %v2211 = vpop.f32.mrf.mxu0
        %v2212 = vadd.f32 %v2163, %v2211
        %v2213 = vpop.f32.mrf.mxu0
        %v2214 = vadd.f32 %v2165, %v2213
        %2215 = vmatmul.bf16.gmra.mxu0 %v1771
        %v2216 = vpop.f32.mrf.mxu0
        %v2217 = vadd.f32 %v2168, %v2216
        %v2218 = vpop.f32.mrf.mxu0
        %v2219 = vadd.f32 %v2170, %v2218
        %2220 = vmatmul.bf16.gmra.mxu0 %v1775
        %v2221 = vpop.f32.mrf.mxu0
        %v2222 = vadd.f32 %v2173, %v2221
        %v2223 = vpop.f32.mrf.mxu0
        %v2224 = vadd.f32 %v2175, %v2223
        %2225 = vmatmul.bf16.gmra.mxu0 %v1779
        %v2226 = vpop.f32.mrf.mxu0
        %v2227 = vadd.f32 %v2178, %v2226
        %v2228 = vpop.f32.mrf.mxu0
        %v2229 = vadd.f32 %v2180, %v2228
        %2230 = vmatmul.bf16.gmra.mxu0 %v1783
        %v2231 = vpop.f32.mrf.mxu0
        %v2232 = vadd.f32 %v2183, %v2231
        %v2233 = vpop.f32.mrf.mxu0
        %v2234 = vadd.f32 %v2185, %v2233
        %2235 = vdwg.mxu0
        %2236 = vmatpush.bf16.msra.mxu0 %v2056
        %2237 = vmatpush.bf16.msra.mxu0 %v2054
        %2238 = vmatpush.bf16.msra.mxu0 %v2052
        %2239 = vmatpush.bf16.msra.mxu0 %v2050
        %2240 = vmatpush.bf16.msra.mxu0 %v2048
        %2241 = vmatpush.bf16.msra.mxu0 %v2046
        %2242 = vmatpush.bf16.msra.mxu0 %v2044
        %2243 = vmatpush.bf16.msra.mxu0 %v2042
        %2244 = vmatmul.bf16.gmra.mxu0 %v1756
        %v2245 = vpop.f32.mrf.mxu0
        %v2246 = vadd.f32 %v2197, %v2245
        %v2247 = vpop.f32.mrf.mxu0
        %v2248 = vadd.f32 %v2199, %v2247
        %2249 = vmatmul.bf16.gmra.mxu0 %v1760
        %v2250 = vpop.f32.mrf.mxu0
        %v2251 = vadd.f32 %v2202, %v2250
        %v2252 = vpop.f32.mrf.mxu0
        %v2253 = vadd.f32 %v2204, %v2252
        %2254 = vmatmul.bf16.gmra.mxu0 %v1764
        %v2255 = vpop.f32.mrf.mxu0
        %v2256 = vadd.f32 %v2207, %v2255
        %v2257 = vpop.f32.mrf.mxu0
        %v2258 = vadd.f32 %v2209, %v2257
        %2259 = vmatmul.bf16.gmra.mxu0 %v1768
        %v2260 = vpop.f32.mrf.mxu0
        %v2261 = vadd.f32 %v2212, %v2260
        %v2262 = vpop.f32.mrf.mxu0
        %v2263 = vadd.f32 %v2214, %v2262
        %2264 = vmatmul.bf16.gmra.mxu0 %v1772
        %v2265 = vpop.f32.mrf.mxu0
        %v2266 = vadd.f32 %v2217, %v2265
        %v2267 = vpop.f32.mrf.mxu0
        %v2268 = vadd.f32 %v2219, %v2267
        %2269 = vmatmul.bf16.gmra.mxu0 %v1776
        %v2270 = vpop.f32.mrf.mxu0
        %v2271 = vadd.f32 %v2222, %v2270
        %v2272 = vpop.f32.mrf.mxu0
        %v2273 = vadd.f32 %v2224, %v2272
        %2274 = vmatmul.bf16.gmra.mxu0 %v1780
        %v2275 = vpop.f32.mrf.mxu0
        %v2276 = vadd.f32 %v2227, %v2275
        %v2277 = vpop.f32.mrf.mxu0
        %v2278 = vadd.f32 %v2229, %v2277
        %2279 = vmatmul.bf16.gmra.mxu0 %v1784
        %v2280 = vpop.f32.mrf.mxu0
        %v2281 = vadd.f32 %v2232, %v2280
        %v2282 = vpop.f32.mrf.mxu0
        %v2283 = vadd.f32 %v2234, %v2282
        %2284 = vdwg.mxu0
        %2285 = vmatpush.bf16.msra.mxu0 %v2072
        %2286 = vmatpush.bf16.msra.mxu0 %v2070
        %2287 = vmatpush.bf16.msra.mxu0 %v2068
        %2288 = vmatpush.bf16.msra.mxu0 %v2066
        %2289 = vmatpush.bf16.msra.mxu0 %v2064
        %2290 = vmatpush.bf16.msra.mxu0 %v2062
        %2291 = vmatpush.bf16.msra.mxu0 %v2060
        %2292 = vmatpush.bf16.msra.mxu0 %v2058
        %2293 = vmatmul.bf16.gmra.mxu0 %v1757
        %v2294 = vpop.f32.mrf.mxu0
        %v2295 = vadd.f32 %v2246, %v2294
        %v2296 = vpop.f32.mrf.mxu0
        %v2297 = vadd.f32 %v2248, %v2296
        %2298 = vmatmul.bf16.gmra.mxu0 %v1761
        %v2299 = vpop.f32.mrf.mxu0
        %v2300 = vadd.f32 %v2251, %v2299
        %v2301 = vpop.f32.mrf.mxu0
        %v2302 = vadd.f32 %v2253, %v2301
        %2303 = vmatmul.bf16.gmra.mxu0 %v1765
        %v2304 = vpop.f32.mrf.mxu0
        %v2305 = vadd.f32 %v2256, %v2304
        %v2306 = vpop.f32.mrf.mxu0
        %v2307 = vadd.f32 %v2258, %v2306
        %2308 = vmatmul.bf16.gmra.mxu0 %v1769
        %v2309 = vpop.f32.mrf.mxu0
        %v2310 = vadd.f32 %v2261, %v2309
        %v2311 = vpop.f32.mrf.mxu0
        %v2312 = vadd.f32 %v2263, %v2311
        %2313 = vmatmul.bf16.gmra.mxu0 %v1773
        %v2314 = vpop.f32.mrf.mxu0
        %v2315 = vadd.f32 %v2266, %v2314
        %v2316 = vpop.f32.mrf.mxu0
        %v2317 = vadd.f32 %v2268, %v2316
        %2318 = vmatmul.bf16.gmra.mxu0 %v1777
        %v2319 = vpop.f32.mrf.mxu0
        %v2320 = vadd.f32 %v2271, %v2319
        %v2321 = vpop.f32.mrf.mxu0
        %v2322 = vadd.f32 %v2273, %v2321
        %2323 = vmatmul.bf16.gmra.mxu0 %v1781
        %v2324 = vpop.f32.mrf.mxu0
        %v2325 = vadd.f32 %v2276, %v2324
        %v2326 = vpop.f32.mrf.mxu0
        %v2327 = vadd.f32 %v2278, %v2326
        %2328 = vmatmul.bf16.gmra.mxu0 %v1785
        %v2329 = vpop.f32.mrf.mxu0
        %v2330 = vadd.f32 %v2281, %v2329
        %v2331 = vpop.f32.mrf.mxu0
        %v2332 = vadd.f32 %v2283, %v2331
        %2333 = vdwg.mxu0
        %2334 = vmatpush.bf16.msra.mxu0 %v2025
        %2335 = vmatpush.bf16.msra.mxu0 %v2023
        %2336 = vmatpush.bf16.msra.mxu0 %v2021
        %2337 = vmatpush.bf16.msra.mxu0 %v2019
        %2338 = vmatpush.bf16.msra.mxu0 %v2017
        %2339 = vmatpush.bf16.msra.mxu0 %v2015
        %2340 = vmatpush.bf16.msra.mxu0 %v2013
        %2341 = vmatpush.bf16.msra.mxu0 %v2011
        %2342 = vmatmul.bf16.gmra.mxu0 %v1754
        %v2343 = vpop.f32.mrf.mxu0
        %v2344 = vadd.f32 %v1655, %v2343
        %v2345 = vpop.f32.mrf.mxu0
        %v2346 = vadd.f32 %v1655, %v2345
        %2347 = vmatmul.bf16.gmra.mxu0 %v1758
        %v2348 = vpop.f32.mrf.mxu0
        %v2349 = vadd.f32 %v1655, %v2348
        %v2350 = vpop.f32.mrf.mxu0
        %v2351 = vadd.f32 %v1655, %v2350
        %2352 = vmatmul.bf16.gmra.mxu0 %v1762
        %v2353 = vpop.f32.mrf.mxu0
        %v2354 = vadd.f32 %v1655, %v2353
        %v2355 = vpop.f32.mrf.mxu0
        %v2356 = vadd.f32 %v1655, %v2355
        %2357 = vmatmul.bf16.gmra.mxu0 %v1766
        %v2358 = vpop.f32.mrf.mxu0
        %v2359 = vadd.f32 %v1655, %v2358
        %v2360 = vpop.f32.mrf.mxu0
        %v2361 = vadd.f32 %v1655, %v2360
        %2362 = vmatmul.bf16.gmra.mxu0 %v1770
        %v2363 = vpop.f32.mrf.mxu0
        %v2364 = vadd.f32 %v1655, %v2363
        %v2365 = vpop.f32.mrf.mxu0
        %v2366 = vadd.f32 %v1655, %v2365
        %2367 = vmatmul.bf16.gmra.mxu0 %v1774
        %v2368 = vpop.f32.mrf.mxu0
        %v2369 = vadd.f32 %v1655, %v2368
        %v2370 = vpop.f32.mrf.mxu0
        %v2371 = vadd.f32 %v1655, %v2370
        %2372 = vmatmul.bf16.gmra.mxu0 %v1778
        %v2373 = vpop.f32.mrf.mxu0
        %v2374 = vadd.f32 %v1655, %v2373
        %v2375 = vpop.f32.mrf.mxu0
        %v2376 = vadd.f32 %v1655, %v2375
        %2377 = vmatmul.bf16.gmra.mxu0 %v1782
        %v2378 = vpop.f32.mrf.mxu0
        %v2379 = vadd.f32 %v1655, %v2378
        %v2380 = vpop.f32.mrf.mxu0
        %v2381 = vadd.f32 %v1655, %v2380
        %2382 = vdwg.mxu0
        %2383 = vmatpush.bf16.msra.mxu0 %v2041
        %2384 = vmatpush.bf16.msra.mxu0 %v2039
        %2385 = vmatpush.bf16.msra.mxu0 %v2037
        %2386 = vmatpush.bf16.msra.mxu0 %v2035
        %2387 = vmatpush.bf16.msra.mxu0 %v2033
        %2388 = vmatpush.bf16.msra.mxu0 %v2031
        %2389 = vmatpush.bf16.msra.mxu0 %v2029
        %2390 = vmatpush.bf16.msra.mxu0 %v2027
        %2391 = vmatmul.bf16.gmra.mxu0 %v1755
        %v2392 = vpop.f32.mrf.mxu0
        %v2393 = vadd.f32 %v2344, %v2392
        %v2394 = vpop.f32.mrf.mxu0
        %v2395 = vadd.f32 %v2346, %v2394
        %2396 = vmatmul.bf16.gmra.mxu0 %v1759
        %v2397 = vpop.f32.mrf.mxu0
        %v2398 = vadd.f32 %v2349, %v2397
        %v2399 = vpop.f32.mrf.mxu0
        %v2400 = vadd.f32 %v2351, %v2399
        %2401 = vmatmul.bf16.gmra.mxu0 %v1763
        %v2402 = vpop.f32.mrf.mxu0
        %v2403 = vadd.f32 %v2354, %v2402
        %v2404 = vpop.f32.mrf.mxu0
        %v2405 = vadd.f32 %v2356, %v2404
        %2406 = vmatmul.bf16.gmra.mxu0 %v1767
        %v2407 = vpop.f32.mrf.mxu0
        %v2408 = vadd.f32 %v2359, %v2407
        %v2409 = vpop.f32.mrf.mxu0
        %v2410 = vadd.f32 %v2361, %v2409
        %2411 = vmatmul.bf16.gmra.mxu0 %v1771
        %v2412 = vpop.f32.mrf.mxu0
        %v2413 = vadd.f32 %v2364, %v2412
        %v2414 = vpop.f32.mrf.mxu0
        %v2415 = vadd.f32 %v2366, %v2414
        %2416 = vmatmul.bf16.gmra.mxu0 %v1775
        %v2417 = vpop.f32.mrf.mxu0
        %v2418 = vadd.f32 %v2369, %v2417
        %v2419 = vpop.f32.mrf.mxu0
        %v2420 = vadd.f32 %v2371, %v2419
        %2421 = vmatmul.bf16.gmra.mxu0 %v1779
        %v2422 = vpop.f32.mrf.mxu0
        %v2423 = vadd.f32 %v2374, %v2422
        %v2424 = vpop.f32.mrf.mxu0
        %v2425 = vadd.f32 %v2376, %v2424
        %2426 = vmatmul.bf16.gmra.mxu0 %v1783
        %v2427 = vpop.f32.mrf.mxu0
        %v2428 = vadd.f32 %v2379, %v2427
        %v2429 = vpop.f32.mrf.mxu0
        %v2430 = vadd.f32 %v2381, %v2429
        %2431 = vdwg.mxu0
        %2432 = vmatpush.bf16.msra.mxu0 %v2057
        %2433 = vmatpush.bf16.msra.mxu0 %v2055
        %2434 = vmatpush.bf16.msra.mxu0 %v2053
        %2435 = vmatpush.bf16.msra.mxu0 %v2051
        %2436 = vmatpush.bf16.msra.mxu0 %v2049
        %2437 = vmatpush.bf16.msra.mxu0 %v2047
        %2438 = vmatpush.bf16.msra.mxu0 %v2045
        %2439 = vmatpush.bf16.msra.mxu0 %v2043
        %2440 = vmatmul.bf16.gmra.mxu0 %v1756
        %v2441 = vpop.f32.mrf.mxu0
        %v2442 = vadd.f32 %v2393, %v2441
        %v2443 = vpop.f32.mrf.mxu0
        %v2444 = vadd.f32 %v2395, %v2443
        %2445 = vmatmul.bf16.gmra.mxu0 %v1760
        %v2446 = vpop.f32.mrf.mxu0
        %v2447 = vadd.f32 %v2398, %v2446
        %v2448 = vpop.f32.mrf.mxu0
        %v2449 = vadd.f32 %v2400, %v2448
        %2450 = vmatmul.bf16.gmra.mxu0 %v1764
        %v2451 = vpop.f32.mrf.mxu0
        %v2452 = vadd.f32 %v2403, %v2451
        %v2453 = vpop.f32.mrf.mxu0
        %v2454 = vadd.f32 %v2405, %v2453
        %2455 = vmatmul.bf16.gmra.mxu0 %v1768
        %v2456 = vpop.f32.mrf.mxu0
        %v2457 = vadd.f32 %v2408, %v2456
        %v2458 = vpop.f32.mrf.mxu0
        %v2459 = vadd.f32 %v2410, %v2458
        %2460 = vmatmul.bf16.gmra.mxu0 %v1772
        %v2461 = vpop.f32.mrf.mxu0
        %v2462 = vadd.f32 %v2413, %v2461
        %v2463 = vpop.f32.mrf.mxu0
        %v2464 = vadd.f32 %v2415, %v2463
        %2465 = vmatmul.bf16.gmra.mxu0 %v1776
        %v2466 = vpop.f32.mrf.mxu0
        %v2467 = vadd.f32 %v2418, %v2466
        %v2468 = vpop.f32.mrf.mxu0
        %v2469 = vadd.f32 %v2420, %v2468
        %2470 = vmatmul.bf16.gmra.mxu0 %v1780
        %v2471 = vpop.f32.mrf.mxu0
        %v2472 = vadd.f32 %v2423, %v2471
        %v2473 = vpop.f32.mrf.mxu0
        %v2474 = vadd.f32 %v2425, %v2473
        %2475 = vmatmul.bf16.gmra.mxu0 %v1784
        %v2476 = vpop.f32.mrf.mxu0
        %v2477 = vadd.f32 %v2428, %v2476
        %v2478 = vpop.f32.mrf.mxu0
        %v2479 = vadd.f32 %v2430, %v2478
        %2480 = vdwg.mxu0
        %2481 = vmatpush.bf16.msra.mxu0 %v2073
        %2482 = vmatpush.bf16.msra.mxu0 %v2071
        %2483 = vmatpush.bf16.msra.mxu0 %v2069
        %2484 = vmatpush.bf16.msra.mxu0 %v2067
        %2485 = vmatpush.bf16.msra.mxu0 %v2065
        %2486 = vmatpush.bf16.msra.mxu0 %v2063
        %2487 = vmatpush.bf16.msra.mxu0 %v2061
        %2488 = vmatpush.bf16.msra.mxu0 %v2059
        %2489 = vmatmul.bf16.gmra.mxu0 %v1757
        %v2490 = vpop.f32.mrf.mxu0
        %v2491 = vadd.f32 %v2442, %v2490
        %v2492 = vpop.f32.mrf.mxu0
        %v2493 = vadd.f32 %v2444, %v2492
        %2494 = vmatmul.bf16.gmra.mxu0 %v1761
        %v2495 = vpop.f32.mrf.mxu0
        %v2496 = vadd.f32 %v2447, %v2495
        %v2497 = vpop.f32.mrf.mxu0
        %v2498 = vadd.f32 %v2449, %v2497
        %2499 = vmatmul.bf16.gmra.mxu0 %v1765
        %v2500 = vpop.f32.mrf.mxu0
        %v2501 = vadd.f32 %v2452, %v2500
        %v2502 = vpop.f32.mrf.mxu0
        %v2503 = vadd.f32 %v2454, %v2502
        %2504 = vmatmul.bf16.gmra.mxu0 %v1769
        %v2505 = vpop.f32.mrf.mxu0
        %v2506 = vadd.f32 %v2457, %v2505
        %v2507 = vpop.f32.mrf.mxu0
        %v2508 = vadd.f32 %v2459, %v2507
        %2509 = vmatmul.bf16.gmra.mxu0 %v1773
        %v2510 = vpop.f32.mrf.mxu0
        %v2511 = vadd.f32 %v2462, %v2510
        %v2512 = vpop.f32.mrf.mxu0
        %v2513 = vadd.f32 %v2464, %v2512
        %2514 = vmatmul.bf16.gmra.mxu0 %v1777
        %v2515 = vpop.f32.mrf.mxu0
        %v2516 = vadd.f32 %v2467, %v2515
        %v2517 = vpop.f32.mrf.mxu0
        %v2518 = vadd.f32 %v2469, %v2517
        %2519 = vmatmul.bf16.gmra.mxu0 %v1781
        %v2520 = vpop.f32.mrf.mxu0
        %v2521 = vadd.f32 %v2472, %v2520
        %v2522 = vpop.f32.mrf.mxu0
        %v2523 = vadd.f32 %v2474, %v2522
        %2524 = vmatmul.bf16.gmra.mxu0 %v1785
        %v2525 = vpop.f32.mrf.mxu0
        %v2526 = vadd.f32 %v2477, %v2525
        %v2527 = vpop.f32.mrf.mxu0
        %v2528 = vadd.f32 %v2479, %v2527
        %2529 = vdwg.mxu0
        %v2530 = vtanh.pop %v2295
        %v2531 = vtanh.pop %v2491
        %v2532 = vtanh.pop %v2297
        %v2533 = vtanh.pop %v2493
        %v2534 = vtanh.pop %v2300
        %v2535 = vtanh.pop %v2496
        %v2536 = vtanh.pop %v2302
        %v2537 = vtanh.pop %v2498
        %v2538 = vtanh.pop %v2305
        %v2539 = vtanh.pop %v2501
        %v2540 = vtanh.pop %v2307
        %v2541 = vtanh.pop %v2503
        %v2542 = vtanh.pop %v2310
        %v2543 = vtanh.pop %v2506
        %v2544 = vtanh.pop %v2312
        %v2545 = vtanh.pop %v2508
        %v2546 = vtanh.pop %v2315
        %v2547 = vtanh.pop %v2511
        %v2548 = vtanh.pop %v2317
        %v2549 = vtanh.pop %v2513
        %v2550 = vtanh.pop %v2320
        %v2551 = vtanh.pop %v2516
        %v2552 = vtanh.pop %v2322
        %v2553 = vtanh.pop %v2518
        %v2554 = vtanh.pop %v2325
        %v2555 = vtanh.pop %v2521
        %v2556 = vtanh.pop %v2327
        %v2557 = vtanh.pop %v2523
        %v2558 = vtanh.pop %v2330
        %v2559 = vtanh.pop %v2526
        %v2560 = vtanh.pop %v2332
        %v2561 = vtanh.pop %v2528
        %v2562 = vld [vmem:[#allocation4] sm:$0xff]
        %v2563 = vld [vmem:[#allocation4 + $0x8] sm:$0xff]
        %v2564 = vld [vmem:[#allocation4 + $0x10] sm:$0xff]
        %v2565 = vld [vmem:[#allocation4 + $0x18] sm:$0xff]
        %v2566 = vld [vmem:[#allocation4 + $0x20] sm:$0xff]
        %v2567 = vld [vmem:[#allocation4 + $0x28] sm:$0xff]
        %v2568 = vld [vmem:[#allocation4 + $0x30] sm:$0xff]
        %v2569 = vld [vmem:[#allocation4 + $0x38] sm:$0xff]
        %v2570 = vld [vmem:[#allocation4 + $0x40] sm:$0xff]
        %v2571 = vld [vmem:[#allocation4 + $0x48] sm:$0xff]
        %v2572 = vld [vmem:[#allocation4 + $0x50] sm:$0xff]
        %v2573 = vld [vmem:[#allocation4 + $0x58] sm:$0xff]
        %v2574 = vld [vmem:[#allocation4 + $0x60] sm:$0xff]
        %v2575 = vld [vmem:[#allocation4 + $0x68] sm:$0xff]
        %v2576 = vld [vmem:[#allocation4 + $0x70] sm:$0xff]
        %v2577 = vld [vmem:[#allocation4 + $0x78] sm:$0xff]
        %v2578 = vld [vmem:[%s418] sm:$0x3]
        %v2580 = vperm.slane %v2578, 0
        %v2581 = vperm.slane %v2578, 1
        %v2584 = vmul.f32 %v2530, %v2580
        %v2585 = vmul.f32 %v2531, %v2581
        %v2586 = vmul.f32 %v2532, %v2580
        %v2587 = vmul.f32 %v2533, %v2581
        %v2588 = vmul.f32 %v2534, %v2580
        %v2589 = vmul.f32 %v2535, %v2581
        %v2590 = vmul.f32 %v2536, %v2580
        %v2591 = vmul.f32 %v2537, %v2581
        %v2592 = vmul.f32 %v2538, %v2580
        %v2593 = vmul.f32 %v2539, %v2581
        %v2594 = vmul.f32 %v2540, %v2580
        %v2595 = vmul.f32 %v2541, %v2581
        %v2596 = vmul.f32 %v2542, %v2580
        %v2597 = vmul.f32 %v2543, %v2581
        %v2598 = vmul.f32 %v2544, %v2580
        %v2599 = vmul.f32 %v2545, %v2581
        %v2600 = vmul.f32 %v2546, %v2580
        %v2601 = vmul.f32 %v2547, %v2581
        %v2602 = vmul.f32 %v2548, %v2580
        %v2603 = vmul.f32 %v2549, %v2581
        %v2604 = vmul.f32 %v2550, %v2580
        %v2605 = vmul.f32 %v2551, %v2581
        %v2606 = vmul.f32 %v2552, %v2580
        %v2607 = vmul.f32 %v2553, %v2581
        %v2608 = vmul.f32 %v2554, %v2580
        %v2609 = vmul.f32 %v2555, %v2581
        %v2610 = vmul.f32 %v2556, %v2580
        %v2611 = vmul.f32 %v2557, %v2581
        %v2612 = vmul.f32 %v2558, %v2580
        %v2613 = vmul.f32 %v2559, %v2581
        %v2614 = vmul.f32 %v2560, %v2580
        %v2615 = vmul.f32 %v2561, %v2581
        %v2616 = vadd.f32 %v2584, %v2585
        %2617 = vadd.xlane.f32.xlu0 %v2616
        %v2618 = vpop.xlane.xlu0 %2617
        %v2619 = vadd.f32 %v2586, %v2587
        %2620 = vadd.xlane.f32.xlu0 %v2619
        %v2621 = vpop.xlane.xlu0 %2620
        %v2622 = vadd.f32 %v2588, %v2589
        %2623 = vadd.xlane.f32.xlu0 %v2622
        %v2624 = vpop.xlane.xlu0 %2623
        %v2625 = vadd.f32 %v2590, %v2591
        %2626 = vadd.xlane.f32.xlu0 %v2625
        %v2627 = vpop.xlane.xlu0 %2626
        %v2628 = vadd.f32 %v2592, %v2593
        %2629 = vadd.xlane.f32.xlu0 %v2628
        %v2630 = vpop.xlane.xlu0 %2629
        %v2631 = vadd.f32 %v2594, %v2595
        %2632 = vadd.xlane.f32.xlu0 %v2631
        %v2633 = vpop.xlane.xlu0 %2632
        %v2634 = vadd.f32 %v2596, %v2597
        %2635 = vadd.xlane.f32.xlu0 %v2634
        %v2636 = vpop.xlane.xlu0 %2635
        %v2637 = vadd.f32 %v2598, %v2599
        %2638 = vadd.xlane.f32.xlu0 %v2637
        %v2639 = vpop.xlane.xlu0 %2638
        %v2640 = vadd.f32 %v2600, %v2601
        %2641 = vadd.xlane.f32.xlu0 %v2640
        %v2642 = vpop.xlane.xlu0 %2641
        %v2643 = vadd.f32 %v2602, %v2603
        %2644 = vadd.xlane.f32.xlu0 %v2643
        %v2645 = vpop.xlane.xlu0 %2644
        %v2646 = vadd.f32 %v2604, %v2605
        %2647 = vadd.xlane.f32.xlu0 %v2646
        %v2648 = vpop.xlane.xlu0 %2647
        %v2649 = vadd.f32 %v2606, %v2607
        %2650 = vadd.xlane.f32.xlu0 %v2649
        %v2651 = vpop.xlane.xlu0 %2650
        %v2652 = vadd.f32 %v2608, %v2609
        %2653 = vadd.xlane.f32.xlu0 %v2652
        %v2654 = vpop.xlane.xlu0 %2653
        %v2655 = vadd.f32 %v2610, %v2611
        %2656 = vadd.xlane.f32.xlu0 %v2655
        %v2657 = vpop.xlane.xlu0 %2656
        %v2658 = vadd.f32 %v2612, %v2613
        %2659 = vadd.xlane.f32.xlu0 %v2658
        %v2660 = vpop.xlane.xlu0 %2659
        %v2661 = vadd.f32 %v2614, %v2615
        %2662 = vadd.xlane.f32.xlu0 %v2661
        %v2663 = vpop.xlane.xlu0 %2662
        %v2664 = vadd.f32 %v2562, %v2618
        %v2665 = vadd.f32 %v2563, %v2621
        %v2666 = vadd.f32 %v2564, %v2624
        %v2667 = vadd.f32 %v2565, %v2627
        %v2668 = vadd.f32 %v2566, %v2630
        %v2669 = vadd.f32 %v2567, %v2633
        %v2670 = vadd.f32 %v2568, %v2636
        %v2671 = vadd.f32 %v2569, %v2639
        %v2672 = vadd.f32 %v2570, %v2642
        %v2673 = vadd.f32 %v2571, %v2645
        %v2674 = vadd.f32 %v2572, %v2648
        %v2675 = vadd.f32 %v2573, %v2651
        %v2676 = vadd.f32 %v2574, %v2654
        %v2677 = vadd.f32 %v2575, %v2657
        %v2678 = vadd.f32 %v2576, %v2660
        %v2679 = vadd.f32 %v2577, %v2663
        %vm2680 = vcmask 7168
        %2681 = vst.msk [vmem:[#allocation4] sm:$0xff] %vm2680, %v2664
        %2682 = vst.msk [vmem:[#allocation4 + $0x8] sm:$0xff] %vm2680, %v2665
        %2683 = vst.msk [vmem:[#allocation4 + $0x10] sm:$0xff] %vm2680, %v2666
        %2684 = vst.msk [vmem:[#allocation4 + $0x18] sm:$0xff] %vm2680, %v2667
        %2685 = vst.msk [vmem:[#allocation4 + $0x20] sm:$0xff] %vm2680, %v2668
        %2686 = vst.msk [vmem:[#allocation4 + $0x28] sm:$0xff] %vm2680, %v2669
        %2687 = vst.msk [vmem:[#allocation4 + $0x30] sm:$0xff] %vm2680, %v2670
        %2688 = vst.msk [vmem:[#allocation4 + $0x38] sm:$0xff] %vm2680, %v2671
        %2689 = vst.msk [vmem:[#allocation4 + $0x40] sm:$0xff] %vm2680, %v2672
        %2690 = vst.msk [vmem:[#allocation4 + $0x48] sm:$0xff] %vm2680, %v2673
        %2691 = vst.msk [vmem:[#allocation4 + $0x50] sm:$0xff] %vm2680, %v2674
        %2692 = vst.msk [vmem:[#allocation4 + $0x58] sm:$0xff] %vm2680, %v2675
        %2693 = vst.msk [vmem:[#allocation4 + $0x60] sm:$0xff] %vm2680, %v2676
        %2694 = vst.msk [vmem:[#allocation4 + $0x68] sm:$0xff] %vm2680, %v2677
        %2695 = vst.msk [vmem:[#allocation4 + $0x70] sm:$0xff] %vm2680, %v2678
        %2696 = vst.msk [vmem:[#allocation4 + $0x78] sm:$0xff] %vm2680, %v2679
        %p2697 = scmp.eq.s32.totalorder %s34, 1
        // Predicated region
        $region65: #{tpu_custom_call.1} parent=51 // pred_check
          %p2698 = pneg %p2697
        $region66: #{tpu_custom_call.1} parent=51 // pred_check_branch
          %2700 = sbr.rel (%p2698) target = $region68
        $region67: #{tpu_custom_call.1} parent=51 // pred_region
          %v2701 = vld [vmem:[#allocation4] sm:$0xff]
          %v2702 = vld [vmem:[#allocation4 + $0x8] sm:$0xff]
          %v2703 = vld [vmem:[#allocation4 + $0x10] sm:$0xff]
          %v2704 = vld [vmem:[#allocation4 + $0x18] sm:$0xff]
          %v2705 = vld [vmem:[#allocation4 + $0x20] sm:$0xff]
          %v2706 = vld [vmem:[#allocation4 + $0x28] sm:$0xff]
          %v2707 = vld [vmem:[#allocation4 + $0x30] sm:$0xff]
          %v2708 = vld [vmem:[#allocation4 + $0x38] sm:$0xff]
          %v2709 = vld [vmem:[#allocation4 + $0x40] sm:$0xff]
          %v2710 = vld [vmem:[#allocation4 + $0x48] sm:$0xff]
          %v2711 = vld [vmem:[#allocation4 + $0x50] sm:$0xff]
          %v2712 = vld [vmem:[#allocation4 + $0x58] sm:$0xff]
          %v2713 = vld [vmem:[#allocation4 + $0x60] sm:$0xff]
          %v2714 = vld [vmem:[#allocation4 + $0x68] sm:$0xff]
          %v2715 = vld [vmem:[#allocation4 + $0x70] sm:$0xff]
          %v2716 = vld [vmem:[#allocation4 + $0x78] sm:$0xff]
          %s2717 = sld [smem:[#allocation5]]
          %v2718 = vstv %s2717
          %v2719 = vadd.f32 %v2701, %v2718
          %v2720 = vadd.f32 %v2702, %v2718
          %v2721 = vadd.f32 %v2703, %v2718
          %v2722 = vadd.f32 %v2704, %v2718
          %v2723 = vadd.f32 %v2705, %v2718
          %v2724 = vadd.f32 %v2706, %v2718
          %v2725 = vadd.f32 %v2707, %v2718
          %v2726 = vadd.f32 %v2708, %v2718
          %v2727 = vadd.f32 %v2709, %v2718
          %v2728 = vadd.f32 %v2710, %v2718
          %v2729 = vadd.f32 %v2711, %v2718
          %v2730 = vadd.f32 %v2712, %v2718
          %v2731 = vadd.f32 %v2713, %v2718
          %v2732 = vadd.f32 %v2714, %v2718
          %v2733 = vadd.f32 %v2715, %v2718
          %v2734 = vadd.f32 %v2716, %v2718
          %v2735 = vsel %vm2680, %v2719, -inf
          %v2736 = vrot.slane %v2735, 4
          %v2737 = vmax.f32 %v2735, %v2736
          %v2738 = vrot.slane %v2737, 2
          %v2739 = vmax.f32 %v2737, %v2738
          %v2740 = vrot.slane %v2739, 1
          %v2741 = vmax.f32 %v2739, %v2740
          %v2742 = vsub.f32 %v2719, %v2741
          %v2743 = vmul.f32 %v2742, 1.442695
          %v2744 = vpow.pop %v2743
          %v2745 = vsel %vm2680, %v2744, 0.0
          %v2746 = vrot.slane %v2745, 4
          %v2747 = vadd.f32 %v2745, %v2746
          %v2748 = vrot.slane %v2747, 2
          %v2749 = vadd.f32 %v2747, %v2748
          %v2750 = vrot.slane %v2749, 1
          %v2751 = vadd.f32 %v2749, %v2750
          %v2752 = vrcp.pop %v2751
          %v2753 = vmul.f32 %v2744, %v2752
          %v2754 = vsel %vm2680, %v2720, -inf
          %v2755 = vrot.slane %v2754, 4
          %v2756 = vmax.f32 %v2754, %v2755
          %v2757 = vrot.slane %v2756, 2
          %v2758 = vmax.f32 %v2756, %v2757
          %v2759 = vrot.slane %v2758, 1
          %v2760 = vmax.f32 %v2758, %v2759
          %v2761 = vsub.f32 %v2720, %v2760
          %v2762 = vmul.f32 %v2761, 1.442695
          %v2763 = vpow.pop %v2762
          %v2764 = vsel %vm2680, %v2763, 0.0
          %v2765 = vrot.slane %v2764, 4
          %v2766 = vadd.f32 %v2764, %v2765
          %v2767 = vrot.slane %v2766, 2
          %v2768 = vadd.f32 %v2766, %v2767
          %v2769 = vrot.slane %v2768, 1
          %v2770 = vadd.f32 %v2768, %v2769
          %v2771 = vrcp.pop %v2770
          %v2772 = vmul.f32 %v2763, %v2771
          %v2773 = vsel %vm2680, %v2721, -inf
          %v2774 = vrot.slane %v2773, 4
          %v2775 = vmax.f32 %v2773, %v2774
          %v2776 = vrot.slane %v2775, 2
          %v2777 = vmax.f32 %v2775, %v2776
          %v2778 = vrot.slane %v2777, 1
          %v2779 = vmax.f32 %v2777, %v2778
          %v2780 = vsub.f32 %v2721, %v2779
          %v2781 = vmul.f32 %v2780, 1.442695
          %v2782 = vpow.pop %v2781
          %v2783 = vsel %vm2680, %v2782, 0.0
          %v2784 = vrot.slane %v2783, 4
          %v2785 = vadd.f32 %v2783, %v2784
          %v2786 = vrot.slane %v2785, 2
          %v2787 = vadd.f32 %v2785, %v2786
          %v2788 = vrot.slane %v2787, 1
          %v2789 = vadd.f32 %v2787, %v2788
          %v2790 = vrcp.pop %v2789
          %v2791 = vmul.f32 %v2782, %v2790
          %v2792 = vsel %vm2680, %v2722, -inf
          %v2793 = vrot.slane %v2792, 4
          %v2794 = vmax.f32 %v2792, %v2793
          %v2795 = vrot.slane %v2794, 2
          %v2796 = vmax.f32 %v2794, %v2795
          %v2797 = vrot.slane %v2796, 1
          %v2798 = vmax.f32 %v2796, %v2797
          %v2799 = vsub.f32 %v2722, %v2798
          %v2800 = vmul.f32 %v2799, 1.442695
          %v2801 = vpow.pop %v2800
          %v2802 = vsel %vm2680, %v2801, 0.0
          %v2803 = vrot.slane %v2802, 4
          %v2804 = vadd.f32 %v2802, %v2803
          %v2805 = vrot.slane %v2804, 2
          %v2806 = vadd.f32 %v2804, %v2805
          %v2807 = vrot.slane %v2806, 1
          %v2808 = vadd.f32 %v2806, %v2807
          %v2809 = vrcp.pop %v2808
          %v2810 = vmul.f32 %v2801, %v2809
          %v2811 = vsel %vm2680, %v2723, -inf
          %v2812 = vrot.slane %v2811, 4
          %v2813 = vmax.f32 %v2811, %v2812
          %v2814 = vrot.slane %v2813, 2
          %v2815 = vmax.f32 %v2813, %v2814
          %v2816 = vrot.slane %v2815, 1
          %v2817 = vmax.f32 %v2815, %v2816
          %v2818 = vsub.f32 %v2723, %v2817
          %v2819 = vmul.f32 %v2818, 1.442695
          %v2820 = vpow.pop %v2819
          %v2821 = vsel %vm2680, %v2820, 0.0
          %v2822 = vrot.slane %v2821, 4
          %v2823 = vadd.f32 %v2821, %v2822
          %v2824 = vrot.slane %v2823, 2
          %v2825 = vadd.f32 %v2823, %v2824
          %v2826 = vrot.slane %v2825, 1
          %v2827 = vadd.f32 %v2825, %v2826
          %v2828 = vrcp.pop %v2827
          %v2829 = vmul.f32 %v2820, %v2828
          %v2830 = vsel %vm2680, %v2724, -inf
          %v2831 = vrot.slane %v2830, 4
          %v2832 = vmax.f32 %v2830, %v2831
          %v2833 = vrot.slane %v2832, 2
          %v2834 = vmax.f32 %v2832, %v2833
          %v2835 = vrot.slane %v2834, 1
          %v2836 = vmax.f32 %v2834, %v2835
          %v2837 = vsub.f32 %v2724, %v2836
          %v2838 = vmul.f32 %v2837, 1.442695
          %v2839 = vpow.pop %v2838
          %v2840 = vsel %vm2680, %v2839, 0.0
          %v2841 = vrot.slane %v2840, 4
          %v2842 = vadd.f32 %v2840, %v2841
          %v2843 = vrot.slane %v2842, 2
          %v2844 = vadd.f32 %v2842, %v2843
          %v2845 = vrot.slane %v2844, 1
          %v2846 = vadd.f32 %v2844, %v2845
          %v2847 = vrcp.pop %v2846
          %v2848 = vmul.f32 %v2839, %v2847
          %v2849 = vsel %vm2680, %v2725, -inf
          %v2850 = vrot.slane %v2849, 4
          %v2851 = vmax.f32 %v2849, %v2850
          %v2852 = vrot.slane %v2851, 2
          %v2853 = vmax.f32 %v2851, %v2852
          %v2854 = vrot.slane %v2853, 1
          %v2855 = vmax.f32 %v2853, %v2854
          %v2856 = vsub.f32 %v2725, %v2855
          %v2857 = vmul.f32 %v2856, 1.442695
          %v2858 = vpow.pop %v2857
          %v2859 = vsel %vm2680, %v2858, 0.0
          %v2860 = vrot.slane %v2859, 4
          %v2861 = vadd.f32 %v2859, %v2860
          %v2862 = vrot.slane %v2861, 2
          %v2863 = vadd.f32 %v2861, %v2862
          %v2864 = vrot.slane %v2863, 1
          %v2865 = vadd.f32 %v2863, %v2864
          %v2866 = vrcp.pop %v2865
          %v2867 = vmul.f32 %v2858, %v2866
          %v2868 = vsel %vm2680, %v2726, -inf
          %v2869 = vrot.slane %v2868, 4
          %v2870 = vmax.f32 %v2868, %v2869
          %v2871 = vrot.slane %v2870, 2
          %v2872 = vmax.f32 %v2870, %v2871
          %v2873 = vrot.slane %v2872, 1
          %v2874 = vmax.f32 %v2872, %v2873
          %v2875 = vsub.f32 %v2726, %v2874
          %v2876 = vmul.f32 %v2875, 1.442695
          %v2877 = vpow.pop %v2876
          %v2878 = vsel %vm2680, %v2877, 0.0
          %v2879 = vrot.slane %v2878, 4
          %v2880 = vadd.f32 %v2878, %v2879
          %v2881 = vrot.slane %v2880, 2
          %v2882 = vadd.f32 %v2880, %v2881
          %v2883 = vrot.slane %v2882, 1
          %v2884 = vadd.f32 %v2882, %v2883
          %v2885 = vrcp.pop %v2884
          %v2886 = vmul.f32 %v2877, %v2885
          %v2887 = vsel %vm2680, %v2727, -inf
          %v2888 = vrot.slane %v2887, 4
          %v2889 = vmax.f32 %v2887, %v2888
          %v2890 = vrot.slane %v2889, 2
          %v2891 = vmax.f32 %v2889, %v2890
          %v2892 = vrot.slane %v2891, 1
          %v2893 = vmax.f32 %v2891, %v2892
          %v2894 = vsub.f32 %v2727, %v2893
          %v2895 = vmul.f32 %v2894, 1.442695
          %v2896 = vpow.pop %v2895
          %v2897 = vsel %vm2680, %v2896, 0.0
          %v2898 = vrot.slane %v2897, 4
          %v2899 = vadd.f32 %v2897, %v2898
          %v2900 = vrot.slane %v2899, 2
          %v2901 = vadd.f32 %v2899, %v2900
          %v2902 = vrot.slane %v2901, 1
          %v2903 = vadd.f32 %v2901, %v2902
          %v2904 = vrcp.pop %v2903
          %v2905 = vmul.f32 %v2896, %v2904
          %v2906 = vsel %vm2680, %v2728, -inf
          %v2907 = vrot.slane %v2906, 4
          %v2908 = vmax.f32 %v2906, %v2907
          %v2909 = vrot.slane %v2908, 2
          %v2910 = vmax.f32 %v2908, %v2909
          %v2911 = vrot.slane %v2910, 1
          %v2912 = vmax.f32 %v2910, %v2911
          %v2913 = vsub.f32 %v2728, %v2912
          %v2914 = vmul.f32 %v2913, 1.442695
          %v2915 = vpow.pop %v2914
          %v2916 = vsel %vm2680, %v2915, 0.0
          %v2917 = vrot.slane %v2916, 4
          %v2918 = vadd.f32 %v2916, %v2917
          %v2919 = vrot.slane %v2918, 2
          %v2920 = vadd.f32 %v2918, %v2919
          %v2921 = vrot.slane %v2920, 1
          %v2922 = vadd.f32 %v2920, %v2921
          %v2923 = vrcp.pop %v2922
          %v2924 = vmul.f32 %v2915, %v2923
          %v2925 = vsel %vm2680, %v2729, -inf
          %v2926 = vrot.slane %v2925, 4
          %v2927 = vmax.f32 %v2925, %v2926
          %v2928 = vrot.slane %v2927, 2
          %v2929 = vmax.f32 %v2927, %v2928
          %v2930 = vrot.slane %v2929, 1
          %v2931 = vmax.f32 %v2929, %v2930
          %v2932 = vsub.f32 %v2729, %v2931
          %v2933 = vmul.f32 %v2932, 1.442695
          %v2934 = vpow.pop %v2933
          %v2935 = vsel %vm2680, %v2934, 0.0
          %v2936 = vrot.slane %v2935, 4
          %v2937 = vadd.f32 %v2935, %v2936
          %v2938 = vrot.slane %v2937, 2
          %v2939 = vadd.f32 %v2937, %v2938
          %v2940 = vrot.slane %v2939, 1
          %v2941 = vadd.f32 %v2939, %v2940
          %v2942 = vrcp.pop %v2941
          %v2943 = vmul.f32 %v2934, %v2942
          %v2944 = vsel %vm2680, %v2730, -inf
          %v2945 = vrot.slane %v2944, 4
          %v2946 = vmax.f32 %v2944, %v2945
          %v2947 = vrot.slane %v2946, 2
          %v2948 = vmax.f32 %v2946, %v2947
          %v2949 = vrot.slane %v2948, 1
          %v2950 = vmax.f32 %v2948, %v2949
          %v2951 = vsub.f32 %v2730, %v2950
          %v2952 = vmul.f32 %v2951, 1.442695
          %v2953 = vpow.pop %v2952
          %v2954 = vsel %vm2680, %v2953, 0.0
          %v2955 = vrot.slane %v2954, 4
          %v2956 = vadd.f32 %v2954, %v2955
          %v2957 = vrot.slane %v2956, 2
          %v2958 = vadd.f32 %v2956, %v2957
          %v2959 = vrot.slane %v2958, 1
          %v2960 = vadd.f32 %v2958, %v2959
          %v2961 = vrcp.pop %v2960
          %v2962 = vmul.f32 %v2953, %v2961
          %v2963 = vsel %vm2680, %v2731, -inf
          %v2964 = vrot.slane %v2963, 4
          %v2965 = vmax.f32 %v2963, %v2964
          %v2966 = vrot.slane %v2965, 2
          %v2967 = vmax.f32 %v2965, %v2966
          %v2968 = vrot.slane %v2967, 1
          %v2969 = vmax.f32 %v2967, %v2968
          %v2970 = vsub.f32 %v2731, %v2969
          %v2971 = vmul.f32 %v2970, 1.442695
          %v2972 = vpow.pop %v2971
          %v2973 = vsel %vm2680, %v2972, 0.0
          %v2974 = vrot.slane %v2973, 4
          %v2975 = vadd.f32 %v2973, %v2974
          %v2976 = vrot.slane %v2975, 2
          %v2977 = vadd.f32 %v2975, %v2976
          %v2978 = vrot.slane %v2977, 1
          %v2979 = vadd.f32 %v2977, %v2978
          %v2980 = vrcp.pop %v2979
          %v2981 = vmul.f32 %v2972, %v2980
          %v2982 = vsel %vm2680, %v2732, -inf
          %v2983 = vrot.slane %v2982, 4
          %v2984 = vmax.f32 %v2982, %v2983
          %v2985 = vrot.slane %v2984, 2
          %v2986 = vmax.f32 %v2984, %v2985
          %v2987 = vrot.slane %v2986, 1
          %v2988 = vmax.f32 %v2986, %v2987
          %v2989 = vsub.f32 %v2732, %v2988
          %v2990 = vmul.f32 %v2989, 1.442695
          %v2991 = vpow.pop %v2990
          %v2992 = vsel %vm2680, %v2991, 0.0
          %v2993 = vrot.slane %v2992, 4
          %v2994 = vadd.f32 %v2992, %v2993
          %v2995 = vrot.slane %v2994, 2
          %v2996 = vadd.f32 %v2994, %v2995
          %v2997 = vrot.slane %v2996, 1
          %v2998 = vadd.f32 %v2996, %v2997
          %v2999 = vrcp.pop %v2998
          %v3000 = vmul.f32 %v2991, %v2999
          %v3001 = vsel %vm2680, %v2733, -inf
          %v3002 = vrot.slane %v3001, 4
          %v3003 = vmax.f32 %v3001, %v3002
          %v3004 = vrot.slane %v3003, 2
          %v3005 = vmax.f32 %v3003, %v3004
          %v3006 = vrot.slane %v3005, 1
          %v3007 = vmax.f32 %v3005, %v3006
          %v3008 = vsub.f32 %v2733, %v3007
          %v3009 = vmul.f32 %v3008, 1.442695
          %v3010 = vpow.pop %v3009
          %v3011 = vsel %vm2680, %v3010, 0.0
          %v3012 = vrot.slane %v3011, 4
          %v3013 = vadd.f32 %v3011, %v3012
          %v3014 = vrot.slane %v3013, 2
          %v3015 = vadd.f32 %v3013, %v3014
          %v3016 = vrot.slane %v3015, 1
          %v3017 = vadd.f32 %v3015, %v3016
          %v3018 = vrcp.pop %v3017
          %v3019 = vmul.f32 %v3010, %v3018
          %v3020 = vsel %vm2680, %v2734, -inf
          %v3021 = vrot.slane %v3020, 4
          %v3022 = vmax.f32 %v3020, %v3021
          %v3023 = vrot.slane %v3022, 2
          %v3024 = vmax.f32 %v3022, %v3023
          %v3025 = vrot.slane %v3024, 1
          %v3026 = vmax.f32 %v3024, %v3025
          %v3027 = vsub.f32 %v2734, %v3026
          %v3028 = vmul.f32 %v3027, 1.442695
          %v3029 = vpow.pop %v3028
          %v3030 = vsel %vm2680, %v3029, 0.0
          %v3031 = vrot.slane %v3030, 4
          %v3032 = vadd.f32 %v3030, %v3031
          %v3033 = vrot.slane %v3032, 2
          %v3034 = vadd.f32 %v3032, %v3033
          %v3035 = vrot.slane %v3034, 1
          %v3036 = vadd.f32 %v3034, %v3035
          %v3037 = vrcp.pop %v3036
          %v3038 = vmul.f32 %v3029, %v3037
          %v3039 = vlaneseq
          %v3040 = vand.u32 %v3039, 127
          %v3041 = vlaneseq
          %v3042 = vshrl.u32 %v3041, 7
          %v3043 = vadd.s32 %v3042, 8
          %v3044 = vmul.u32 %v3042, 8
          %v3045 = vmul.u32 %v3043, 8
          %vm3046 = vcmp.ge.s32.totalorder %v3040, %v3044
          %vm3047 = vcmp.ge.s32.totalorder %v3040, %v3045
          %v3048 = vadd.s32 %v3042, 1
          %v3049 = vadd.s32 %v3043, 1
          %v3050 = vmul.u32 %v3048, 8
          %v3051 = vmul.u32 %v3049, 8
          %vm3052 = vcmp.lt.s32.totalorder %v3040, %v3050
          %vm3053 = vcmp.lt.s32.totalorder %v3040, %v3051
          %vm3054 = vmand %vm3046, %vm3052
          %vm3055 = vmand %vm3047, %vm3053
          %v3056 = vsel %vm3054, 1, 0
          %v3057 = vsel %vm3055, 1, 0
          %v3058 = vcvt.s32.f32 %v3056
          %v3059 = vcvt.s32.f32 %v3057
          %v3060 = vld [vmem:[#allocation2] sm:$0xff]
          %v3061 = vld [vmem:[#allocation2 + $0x8] sm:$0xff]
          %v3062 = vld [vmem:[#allocation2 + $0x10] sm:$0xff]
          %v3063 = vld [vmem:[#allocation2 + $0x18] sm:$0xff]
          %v3064 = vld [vmem:[#allocation2 + $0x20] sm:$0xff]
          %v3065 = vld [vmem:[#allocation2 + $0x28] sm:$0xff]
          %v3066 = vld [vmem:[#allocation2 + $0x30] sm:$0xff]
          %v3067 = vld [vmem:[#allocation2 + $0x38] sm:$0xff]
          %v3068 = vld [vmem:[#allocation2 + $0x40] sm:$0xff]
          %v3069 = vld [vmem:[#allocation2 + $0x48] sm:$0xff]
          %v3070 = vld [vmem:[#allocation2 + $0x50] sm:$0xff]
          %v3071 = vld [vmem:[#allocation2 + $0x58] sm:$0xff]
          %v3072 = vld [vmem:[#allocation2 + $0x60] sm:$0xff]
          %v3073 = vld [vmem:[#allocation2 + $0x68] sm:$0xff]
          %v3074 = vld [vmem:[#allocation2 + $0x70] sm:$0xff]
          %v3075 = vld [vmem:[#allocation2 + $0x78] sm:$0xff]
          %v3076 = vld [vmem:[#allocation2 + $0x80] sm:$0xff]
          %v3077 = vld [vmem:[#allocation2 + $0x88] sm:$0xff]
          %v3078 = vld [vmem:[#allocation2 + $0x90] sm:$0xff]
          %v3079 = vld [vmem:[#allocation2 + $0x98] sm:$0xff]
          %v3080 = vld [vmem:[#allocation2 + $0xa0] sm:$0xff]
          %v3081 = vld [vmem:[#allocation2 + $0xa8] sm:$0xff]
          %v3082 = vld [vmem:[#allocation2 + $0xb0] sm:$0xff]
          %v3083 = vld [vmem:[#allocation2 + $0xb8] sm:$0xff]
          %v3084 = vld [vmem:[#allocation2 + $0xc0] sm:$0xff]
          %v3085 = vld [vmem:[#allocation2 + $0xc8] sm:$0xff]
          %v3086 = vld [vmem:[#allocation2 + $0xd0] sm:$0xff]
          %v3087 = vld [vmem:[#allocation2 + $0xd8] sm:$0xff]
          %v3088 = vld [vmem:[#allocation2 + $0xe0] sm:$0xff]
          %v3089 = vld [vmem:[#allocation2 + $0xe8] sm:$0xff]
          %v3090 = vld [vmem:[#allocation2 + $0xf0] sm:$0xff]
          %v3091 = vld [vmem:[#allocation2 + $0xf8] sm:$0xff]
          %v3092 = vld [vmem:[#allocation2 + $0x100] sm:$0xff]
          %v3093 = vld [vmem:[#allocation2 + $0x108] sm:$0xff]
          %v3094 = vld [vmem:[#allocation2 + $0x110] sm:$0xff]
          %v3095 = vld [vmem:[#allocation2 + $0x118] sm:$0xff]
          %v3096 = vld [vmem:[#allocation2 + $0x120] sm:$0xff]
          %v3097 = vld [vmem:[#allocation2 + $0x128] sm:$0xff]
          %v3098 = vld [vmem:[#allocation2 + $0x130] sm:$0xff]
          %v3099 = vld [vmem:[#allocation2 + $0x138] sm:$0xff]
          %v3100 = vld [vmem:[#allocation2 + $0x140] sm:$0xff]
          %v3101 = vld [vmem:[#allocation2 + $0x148] sm:$0xff]
          %v3102 = vld [vmem:[#allocation2 + $0x150] sm:$0xff]
          %v3103 = vld [vmem:[#allocation2 + $0x158] sm:$0xff]
          %v3104 = vld [vmem:[#allocation2 + $0x160] sm:$0xff]
          %v3105 = vld [vmem:[#allocation2 + $0x168] sm:$0xff]
          %v3106 = vld [vmem:[#allocation2 + $0x170] sm:$0xff]
          %v3107 = vld [vmem:[#allocation2 + $0x178] sm:$0xff]
          %v3108 = vld [vmem:[#allocation2 + $0x180] sm:$0xff]
          %v3109 = vld [vmem:[#allocation2 + $0x188] sm:$0xff]
          %v3110 = vld [vmem:[#allocation2 + $0x190] sm:$0xff]
          %v3111 = vld [vmem:[#allocation2 + $0x198] sm:$0xff]
          %v3112 = vld [vmem:[#allocation2 + $0x1a0] sm:$0xff]
          %v3113 = vld [vmem:[#allocation2 + $0x1a8] sm:$0xff]
          %v3114 = vld [vmem:[#allocation2 + $0x1b0] sm:$0xff]
          %v3115 = vld [vmem:[#allocation2 + $0x1b8] sm:$0xff]
          %v3116 = vld [vmem:[#allocation2 + $0x1c0] sm:$0xff]
          %v3117 = vld [vmem:[#allocation2 + $0x1c8] sm:$0xff]
          %v3118 = vld [vmem:[#allocation2 + $0x1d0] sm:$0xff]
          %v3119 = vld [vmem:[#allocation2 + $0x1d8] sm:$0xff]
          %v3120 = vld [vmem:[#allocation2 + $0x1e0] sm:$0xff]
          %v3121 = vld [vmem:[#allocation2 + $0x1e8] sm:$0xff]
          %v3122 = vld [vmem:[#allocation2 + $0x1f0] sm:$0xff]
          %v3123 = vld [vmem:[#allocation2 + $0x1f8] sm:$0xff]
          %3125 = vset.pattern.permute.xlu0 0
          %3126 = vperm.xlu0 %3125, %v2753
          %v3127 = vpop.permute.xlu0 %3126
          %3130 = vset.pattern.permute.xlu0 0
          %3131 = vperm.xlu0 %3130, %v2772
          %v3132 = vpop.permute.xlu0 %3131
          %3135 = vset.pattern.permute.xlu0 0
          %3136 = vperm.xlu0 %3135, %v2791
          %v3137 = vpop.permute.xlu0 %3136
          %3140 = vset.pattern.permute.xlu0 0
          %3141 = vperm.xlu0 %3140, %v2810
          %v3142 = vpop.permute.xlu0 %3141
          %3145 = vset.pattern.permute.xlu0 0
          %3146 = vperm.xlu0 %3145, %v2829
          %v3147 = vpop.permute.xlu0 %3146
          %3150 = vset.pattern.permute.xlu0 0
          %3151 = vperm.xlu0 %3150, %v2848
          %v3152 = vpop.permute.xlu0 %3151
          %3155 = vset.pattern.permute.xlu0 0
          %3156 = vperm.xlu0 %3155, %v2867
          %v3157 = vpop.permute.xlu0 %3156
          %3160 = vset.pattern.permute.xlu0 0
          %3161 = vperm.xlu0 %3160, %v2886
          %v3162 = vpop.permute.xlu0 %3161
          %3165 = vset.pattern.permute.xlu0 0
          %3166 = vperm.xlu0 %3165, %v2905
          %v3167 = vpop.permute.xlu0 %3166
          %3170 = vset.pattern.permute.xlu0 0
          %3171 = vperm.xlu0 %3170, %v2924
          %v3172 = vpop.permute.xlu0 %3171
          %3175 = vset.pattern.permute.xlu0 0
          %3176 = vperm.xlu0 %3175, %v2943
          %v3177 = vpop.permute.xlu0 %3176
          %3180 = vset.pattern.permute.xlu0 0
          %3181 = vperm.xlu0 %3180, %v2962
          %v3182 = vpop.permute.xlu0 %3181
          %3185 = vset.pattern.permute.xlu0 0
          %3186 = vperm.xlu0 %3185, %v2981
          %v3187 = vpop.permute.xlu0 %3186
          %3190 = vset.pattern.permute.xlu0 0
          %3191 = vperm.xlu0 %3190, %v3000
          %v3192 = vpop.permute.xlu0 %3191
          %3195 = vset.pattern.permute.xlu0 0
          %3196 = vperm.xlu0 %3195, %v3019
          %v3197 = vpop.permute.xlu0 %3196
          %3200 = vset.pattern.permute.xlu0 0
          %3201 = vperm.xlu0 %3200, %v3038
          %v3202 = vpop.permute.xlu0 %3201
          %v3204 = vmul.f32 %v3127, %v3060
          %v3205 = vmul.f32 %v3127, %v3061
          %v3206 = vmul.f32 %v3127, %v3062
          %v3207 = vmul.f32 %v3127, %v3063
          %v3208 = vmul.f32 %v3132, %v3064
          %v3209 = vmul.f32 %v3132, %v3065
          %v3210 = vmul.f32 %v3132, %v3066
          %v3211 = vmul.f32 %v3132, %v3067
          %v3212 = vmul.f32 %v3137, %v3068
          %v3213 = vmul.f32 %v3137, %v3069
          %v3214 = vmul.f32 %v3137, %v3070
          %v3215 = vmul.f32 %v3137, %v3071
          %v3216 = vmul.f32 %v3142, %v3072
          %v3217 = vmul.f32 %v3142, %v3073
          %v3218 = vmul.f32 %v3142, %v3074
          %v3219 = vmul.f32 %v3142, %v3075
          %v3220 = vmul.f32 %v3147, %v3076
          %v3221 = vmul.f32 %v3147, %v3077
          %v3222 = vmul.f32 %v3147, %v3078
          %v3223 = vmul.f32 %v3147, %v3079
          %v3224 = vmul.f32 %v3152, %v3080
          %v3225 = vmul.f32 %v3152, %v3081
          %v3226 = vmul.f32 %v3152, %v3082
          %v3227 = vmul.f32 %v3152, %v3083
          %v3228 = vmul.f32 %v3157, %v3084
          %v3229 = vmul.f32 %v3157, %v3085
          %v3230 = vmul.f32 %v3157, %v3086
          %v3231 = vmul.f32 %v3157, %v3087
          %v3232 = vmul.f32 %v3162, %v3088
          %v3233 = vmul.f32 %v3162, %v3089
          %v3234 = vmul.f32 %v3162, %v3090
          %v3235 = vmul.f32 %v3162, %v3091
          %v3236 = vmul.f32 %v3167, %v3092
          %v3237 = vmul.f32 %v3167, %v3093
          %v3238 = vmul.f32 %v3167, %v3094
          %v3239 = vmul.f32 %v3167, %v3095
          %v3240 = vmul.f32 %v3172, %v3096
          %v3241 = vmul.f32 %v3172, %v3097
          %v3242 = vmul.f32 %v3172, %v3098
          %v3243 = vmul.f32 %v3172, %v3099
          %v3244 = vmul.f32 %v3177, %v3100
          %v3245 = vmul.f32 %v3177, %v3101
          %v3246 = vmul.f32 %v3177, %v3102
          %v3247 = vmul.f32 %v3177, %v3103
          %v3248 = vmul.f32 %v3182, %v3104
          %v3249 = vmul.f32 %v3182, %v3105
          %v3250 = vmul.f32 %v3182, %v3106
          %v3251 = vmul.f32 %v3182, %v3107
          %v3252 = vmul.f32 %v3187, %v3108
          %v3253 = vmul.f32 %v3187, %v3109
          %v3254 = vmul.f32 %v3187, %v3110
          %v3255 = vmul.f32 %v3187, %v3111
          %v3256 = vmul.f32 %v3192, %v3112
          %v3257 = vmul.f32 %v3192, %v3113
          %v3258 = vmul.f32 %v3192, %v3114
          %v3259 = vmul.f32 %v3192, %v3115
          %v3260 = vmul.f32 %v3197, %v3116
          %v3261 = vmul.f32 %v3197, %v3117
          %v3262 = vmul.f32 %v3197, %v3118
          %v3263 = vmul.f32 %v3197, %v3119
          %v3264 = vmul.f32 %v3202, %v3120
          %v3265 = vmul.f32 %v3202, %v3121
          %v3266 = vmul.f32 %v3202, %v3122
          %v3267 = vmul.f32 %v3202, %v3123
          %3268 = vmatpush.msra.mxu0 %v3264
          %3269 = vmatpush.msra.mxu0 %v3260
          %3270 = vmatpush.msra.mxu0 %v3256
          %3271 = vmatpush.msra.mxu0 %v3252
          %3272 = vmatpush.msra.mxu0 %v3248
          %3273 = vmatpush.msra.mxu0 %v3244
          %3274 = vmatpush.msra.mxu0 %v3240
          %3275 = vmatpush.msra.mxu0 %v3236
          %3276 = vmatpush.msra.mxu0 %v3232
          %3277 = vmatpush.msra.mxu0 %v3228
          %3278 = vmatpush.msra.mxu0 %v3224
          %3279 = vmatpush.msra.mxu0 %v3220
          %3280 = vmatpush.msra.mxu0 %v3216
          %3281 = vmatpush.msra.mxu0 %v3212
          %3282 = vmatpush.msra.mxu0 %v3208
          %3283 = vmatpush.msra.mxu0 %v3204
          %3284 = vmatmul.f32.gmra.mxu0 %v3058
          %v3285 = vpop.f32.mrf.mxu0
          %v3286 = vadd.f32 0.0, %v3285
          %3287 = vmatmul.f32.gmra.mxu0 %v3059
          %v3288 = vpop.f32.mrf.mxu0
          %v3289 = vadd.f32 0.0, %v3288
          %3290 = vdwg.mxu0
          %3291 = vmatpush.msra.mxu0 %v3265
          %3292 = vmatpush.msra.mxu0 %v3261
          %3293 = vmatpush.msra.mxu0 %v3257
          %3294 = vmatpush.msra.mxu0 %v3253
          %3295 = vmatpush.msra.mxu0 %v3249
          %3296 = vmatpush.msra.mxu0 %v3245
          %3297 = vmatpush.msra.mxu0 %v3241
          %3298 = vmatpush.msra.mxu0 %v3237
          %3299 = vmatpush.msra.mxu0 %v3233
          %3300 = vmatpush.msra.mxu0 %v3229
          %3301 = vmatpush.msra.mxu0 %v3225
          %3302 = vmatpush.msra.mxu0 %v3221
          %3303 = vmatpush.msra.mxu0 %v3217
          %3304 = vmatpush.msra.mxu0 %v3213
          %3305 = vmatpush.msra.mxu0 %v3209
          %3306 = vmatpush.msra.mxu0 %v3205
          %3307 = vmatmul.f32.gmra.mxu0 %v3058
          %v3308 = vpop.f32.mrf.mxu0
          %v3309 = vadd.f32 0.0, %v3308
          %3310 = vmatmul.f32.gmra.mxu0 %v3059
          %v3311 = vpop.f32.mrf.mxu0
          %v3312 = vadd.f32 0.0, %v3311
          %3313 = vdwg.mxu0
          %3314 = vmatpush.msra.mxu0 %v3266
          %3315 = vmatpush.msra.mxu0 %v3262
          %3316 = vmatpush.msra.mxu0 %v3258
          %3317 = vmatpush.msra.mxu0 %v3254
          %3318 = vmatpush.msra.mxu0 %v3250
          %3319 = vmatpush.msra.mxu0 %v3246
          %3320 = vmatpush.msra.mxu0 %v3242
          %3321 = vmatpush.msra.mxu0 %v3238
          %3322 = vmatpush.msra.mxu0 %v3234
          %3323 = vmatpush.msra.mxu0 %v3230
          %3324 = vmatpush.msra.mxu0 %v3226
          %3325 = vmatpush.msra.mxu0 %v3222
          %3326 = vmatpush.msra.mxu0 %v3218
          %3327 = vmatpush.msra.mxu0 %v3214
          %3328 = vmatpush.msra.mxu0 %v3210
          %3329 = vmatpush.msra.mxu0 %v3206
          %3330 = vmatmul.f32.gmra.mxu0 %v3058
          %v3331 = vpop.f32.mrf.mxu0
          %v3332 = vadd.f32 0.0, %v3331
          %3333 = vmatmul.f32.gmra.mxu0 %v3059
          %v3334 = vpop.f32.mrf.mxu0
          %v3335 = vadd.f32 0.0, %v3334
          %3336 = vdwg.mxu0
          %3337 = vmatpush.msra.mxu0 %v3267
          %3338 = vmatpush.msra.mxu0 %v3263
          %3339 = vmatpush.msra.mxu0 %v3259
          %3340 = vmatpush.msra.mxu0 %v3255
          %3341 = vmatpush.msra.mxu0 %v3251
          %3342 = vmatpush.msra.mxu0 %v3247
          %3343 = vmatpush.msra.mxu0 %v3243
          %3344 = vmatpush.msra.mxu0 %v3239
          %3345 = vmatpush.msra.mxu0 %v3235
          %3346 = vmatpush.msra.mxu0 %v3231
          %3347 = vmatpush.msra.mxu0 %v3227
          %3348 = vmatpush.msra.mxu0 %v3223
          %3349 = vmatpush.msra.mxu0 %v3219
          %3350 = vmatpush.msra.mxu0 %v3215
          %3351 = vmatpush.msra.mxu0 %v3211
          %3352 = vmatpush.msra.mxu0 %v3207
          %3353 = vmatmul.f32.gmra.mxu0 %v3058
          %v3354 = vpop.f32.mrf.mxu0
          %v3355 = vadd.f32 0.0, %v3354
          %3356 = vmatmul.f32.gmra.mxu0 %v3059
          %v3357 = vpop.f32.mrf.mxu0
          %v3358 = vadd.f32 0.0, %v3357
          %3359 = vdwg.mxu0
          %v3360 = vmul.f32 %v3286, %v3286
          %v3361 = vmul.f32 %v3289, %v3289
          %3362 = vadd.xlane.f32.xlu0 %v3360
          %v3363 = vpop.xlane.xlu0 %3362
          %3364 = vadd.xlane.f32.xlu0 %v3361
          %v3365 = vpop.xlane.xlu0 %3364
          %v3366 = vmul.f32 %v3309, %v3309
          %v3367 = vmul.f32 %v3312, %v3312
          %3368 = vadd.xlane.f32.xlu0 %v3366
          %v3369 = vpop.xlane.xlu0 %3368
          %3370 = vadd.xlane.f32.xlu0 %v3367
          %v3371 = vpop.xlane.xlu0 %3370
          %v3372 = vmul.f32 %v3332, %v3332
          %v3373 = vmul.f32 %v3335, %v3335
          %3374 = vadd.xlane.f32.xlu0 %v3372
          %v3375 = vpop.xlane.xlu0 %3374
          %3376 = vadd.xlane.f32.xlu0 %v3373
          %v3377 = vpop.xlane.xlu0 %3376
          %v3378 = vmul.f32 %v3355, %v3355
          %v3379 = vmul.f32 %v3358, %v3358
          %3380 = vadd.xlane.f32.xlu0 %v3378
          %v3381 = vpop.xlane.xlu0 %3380
          %3382 = vadd.xlane.f32.xlu0 %v3379
          %v3383 = vpop.xlane.xlu0 %3382
          %v3384 = vmax.f32 %v3363, 1e-24
          %v3385 = vmax.f32 %v3365, 1e-24
          %v3386 = vrsqrt.pop %v3384
          %v3387 = vmul.f32 %v3386, %v3384
          %v3388 = vmul.f32 %v3387, %v3386
          %v3389 = vmul.f32 0.5, %v3388
          %v3390 = vsub.f32 1.5, %v3389
          %v3391 = vmul.f32 %v3386, %v3390
          %vm3392 = vweird.f32 %v3384
          %vm3393 = vweird.f32 %v3386
          %vm3394 = vmor %vm3392, %vm3393
          %v3395 = vsel %vm3394, %v3386, %v3391
          %v3396 = vrsqrt.pop %v3385
          %v3397 = vmul.f32 %v3396, %v3385
          %v3398 = vmul.f32 %v3397, %v3396
          %v3399 = vmul.f32 0.5, %v3398
          %v3400 = vsub.f32 1.5, %v3399
          %v3401 = vmul.f32 %v3396, %v3400
          %vm3402 = vweird.f32 %v3385
          %vm3403 = vweird.f32 %v3396
          %vm3404 = vmor %vm3402, %vm3403
          %v3405 = vsel %vm3404, %v3396, %v3401
          %v3406 = vmax.f32 %v3369, 1e-24
          %v3407 = vmax.f32 %v3371, 1e-24
          %v3408 = vrsqrt.pop %v3406
          %v3409 = vmul.f32 %v3408, %v3406
          %v3410 = vmul.f32 %v3409, %v3408
          %v3411 = vmul.f32 0.5, %v3410
          %v3412 = vsub.f32 1.5, %v3411
          %v3413 = vmul.f32 %v3408, %v3412
          %vm3414 = vweird.f32 %v3406
          %vm3415 = vweird.f32 %v3408
          %vm3416 = vmor %vm3414, %vm3415
          %v3417 = vsel %vm3416, %v3408, %v3413
          %v3418 = vrsqrt.pop %v3407
          %v3419 = vmul.f32 %v3418, %v3407
          %v3420 = vmul.f32 %v3419, %v3418
          %v3421 = vmul.f32 0.5, %v3420
          %v3422 = vsub.f32 1.5, %v3421
          %v3423 = vmul.f32 %v3418, %v3422
          %vm3424 = vweird.f32 %v3407
          %vm3425 = vweird.f32 %v3418
          %vm3426 = vmor %vm3424, %vm3425
          %v3427 = vsel %vm3426, %v3418, %v3423
          %v3428 = vmax.f32 %v3375, 1e-24
          %v3429 = vmax.f32 %v3377, 1e-24
          %v3430 = vrsqrt.pop %v3428
          %v3431 = vmul.f32 %v3430, %v3428
          %v3432 = vmul.f32 %v3431, %v3430
          %v3433 = vmul.f32 0.5, %v3432
          %v3434 = vsub.f32 1.5, %v3433
          %v3435 = vmul.f32 %v3430, %v3434
          %vm3436 = vweird.f32 %v3428
          %vm3437 = vweird.f32 %v3430
          %vm3438 = vmor %vm3436, %vm3437
          %v3439 = vsel %vm3438, %v3430, %v3435
          %v3440 = vrsqrt.pop %v3429
          %v3441 = vmul.f32 %v3440, %v3429
          %v3442 = vmul.f32 %v3441, %v3440
          %v3443 = vmul.f32 0.5, %v3442
          %v3444 = vsub.f32 1.5, %v3443
          %v3445 = vmul.f32 %v3440, %v3444
          %vm3446 = vweird.f32 %v3429
          %vm3447 = vweird.f32 %v3440
          %vm3448 = vmor %vm3446, %vm3447
          %v3449 = vsel %vm3448, %v3440, %v3445
          %v3450 = vmax.f32 %v3381, 1e-24
          %v3451 = vmax.f32 %v3383, 1e-24
          %v3452 = vrsqrt.pop %v3450
          %v3453 = vmul.f32 %v3452, %v3450
          %v3454 = vmul.f32 %v3453, %v3452
          %v3455 = vmul.f32 0.5, %v3454
          %v3456 = vsub.f32 1.5, %v3455
          %v3457 = vmul.f32 %v3452, %v3456
          %vm3458 = vweird.f32 %v3450
          %vm3459 = vweird.f32 %v3452
          %vm3460 = vmor %vm3458, %vm3459
          %v3461 = vsel %vm3460, %v3452, %v3457
          %v3462 = vrsqrt.pop %v3451
          %v3463 = vmul.f32 %v3462, %v3451
          %v3464 = vmul.f32 %v3463, %v3462
          %v3465 = vmul.f32 0.5, %v3464
          %v3466 = vsub.f32 1.5, %v3465
          %v3467 = vmul.f32 %v3462, %v3466
          %vm3468 = vweird.f32 %v3451
          %vm3469 = vweird.f32 %v3462
          %vm3470 = vmor %vm3468, %vm3469
          %v3471 = vsel %vm3470, %v3462, %v3467
          %v3472 = vmul.f32 %v3363, %v3395
          %v3473 = vmul.f32 %v3365, %v3405
          %v3474 = vmul.f32 %v3472, %v3395
          %v3475 = vmul.f32 %v3473, %v3405
          %v3476 = vmul.f32 %v3369, %v3417
          %v3477 = vmul.f32 %v3371, %v3427
          %v3478 = vmul.f32 %v3476, %v3417
          %v3479 = vmul.f32 %v3477, %v3427
          %v3480 = vadd.f32 %v3474, %v3478
          %v3481 = vadd.f32 %v3475, %v3479
          %v3482 = vmul.f32 %v3375, %v3439
          %v3483 = vmul.f32 %v3377, %v3449
          %v3484 = vmul.f32 %v3482, %v3439
          %v3485 = vmul.f32 %v3483, %v3449
          %v3486 = vadd.f32 %v3480, %v3484
          %v3487 = vadd.f32 %v3481, %v3485
          %v3488 = vmul.f32 %v3381, %v3461
          %v3489 = vmul.f32 %v3383, %v3471
          %v3490 = vmul.f32 %v3488, %v3461
          %v3491 = vmul.f32 %v3489, %v3471
          %v3492 = vadd.f32 %v3486, %v3490
          %v3493 = vadd.f32 %v3487, %v3491
          %v3494 = vmax.f32 %v3492, 1e-24
          %v3495 = vmax.f32 %v3493, 1e-24
          %v3496 = vrsqrt.pop %v3494
          %v3497 = vmul.f32 %v3496, %v3494
          %v3498 = vmul.f32 %v3497, %v3496
          %v3499 = vmul.f32 0.5, %v3498
          %v3500 = vsub.f32 1.5, %v3499
          %v3501 = vmul.f32 %v3496, %v3500
          %vm3502 = vweird.f32 %v3494
          %vm3503 = vweird.f32 %v3496
          %vm3504 = vmor %vm3502, %vm3503
          %v3505 = vsel %vm3504, %v3496, %v3501
          %v3506 = vrsqrt.pop %v3495
          %v3507 = vmul.f32 %v3506, %v3495
          %v3508 = vmul.f32 %v3507, %v3506
          %v3509 = vmul.f32 0.5, %v3508
          %v3510 = vsub.f32 1.5, %v3509
          %v3511 = vmul.f32 %v3506, %v3510
          %vm3512 = vweird.f32 %v3495
          %vm3513 = vweird.f32 %v3506
          %vm3514 = vmor %vm3512, %vm3513
          %v3515 = vsel %vm3514, %v3506, %v3511
          %v3516 = vmul.f32 %v3395, %v3505
          %v3517 = vmul.f32 %v3405, %v3515
          %v3518 = vmul.f32 %v3286, %v3516
          %v3519 = vmul.f32 %v3289, %v3517
          %3520 = vst [vmem:[%s408] sm:$0xff] %v3518
          %3521 = vst [vmem:[%s408 + $0x20] sm:$0xff] %v3519
          %v3522 = vmul.f32 %v3417, %v3505
          %v3523 = vmul.f32 %v3427, %v3515
          %v3524 = vmul.f32 %v3309, %v3522
          %v3525 = vmul.f32 %v3312, %v3523
          %3526 = vst [vmem:[%s408 + $0x8] sm:$0xff] %v3524
          %3527 = vst [vmem:[%s408 + $0x28] sm:$0xff] %v3525
          %v3528 = vmul.f32 %v3439, %v3505
          %v3529 = vmul.f32 %v3449, %v3515
          %v3530 = vmul.f32 %v3332, %v3528
          %v3531 = vmul.f32 %v3335, %v3529
          %3532 = vst [vmem:[%s408 + $0x10] sm:$0xff] %v3530
          %3533 = vst [vmem:[%s408 + $0x30] sm:$0xff] %v3531
          %v3534 = vmul.f32 %v3461, %v3505
          %v3535 = vmul.f32 %v3471, %v3515
          %v3536 = vmul.f32 %v3355, %v3534
          %v3537 = vmul.f32 %v3358, %v3535
          %3538 = vst [vmem:[%s408 + $0x18] sm:$0xff] %v3536
          %3539 = vst [vmem:[%s408 + $0x38] sm:$0xff] %v3537
        $region68: #{tpu_custom_call.1} parent=51 // pred_fallthru
          _
        %s3540 = sand.u32 %s237, 1
        %s3541 = scalar_lea.sflag [#allocation8], %s3540
        %s3542 = sand.u32 %s237, 1
        %s3543 = smul.addr %s3542, 64
        %s3544 = scalar_lea.vmem [#allocation11], %s3543
        // Predicated region
        $region69: #{tpu_custom_call.1} parent=51 // pred_check
          %p3545 = pneg %p247
        $region70: #{tpu_custom_call.1} parent=51 // pred_check_branch
          %3547 = sbr.rel (%p3545) target = $region72
        $region71: #{tpu_custom_call.1} parent=51 // pred_region
          %3549 = vsyncadd %s3541, 0
          %s3550 = smul.addr %s33, 8
          %s3551 = smul.addr %s3550, 8
          %s3552 = scalar_lea.hbm %s8, %s3551
          %s3553 = sshll.u32 %s3544, 4
          %s3554 = int_to_ptr.vmem [resolvable:$true] %s3553
          %s3555 = sshll.u32 %s3552, 4
          %s3556 = int_to_ptr.hbm [resolvable:$true] %s3555
          %3561 = dma.vmem_to_hbm [thread:$0]  %s3554, 1024, %s3556, %s3541, 512, 512, 32
        $region72: #{tpu_custom_call.1} parent=51 // pred_fallthru
          _
      $region52: #{tpu_custom_call.1} parent=5 // pred_fallthru
        _
      %p3562 = scmp.le.s32.totalorder 2, %s24
      // Predicated region
      $region73: #{tpu_custom_call.1} parent=5 // pred_check
        %p3563 = pneg %p3562
      $region74: #{tpu_custom_call.1} parent=5 // pred_check_branch
        %3565 = sbr.rel (%p3563) target = $region76
      $region75: #{tpu_custom_call.1} parent=5 // pred_region
        %s3566 = ssub.s32 %s24, 2
        // Predicated region
        $region77: #{tpu_custom_call.1} parent=75 // pred_check
          %p3567 = pneg %p253
        $region78: #{tpu_custom_call.1} parent=75 // pred_check_branch
          %3569 = sbr.rel (%p3567) target = $region80
        $region79: #{tpu_custom_call.1} parent=75 // pred_region
          %s3570 = sand.u32 %s238, 1
          %s3571 = scalar_lea.sflag [#allocation8], %s3570
          %s3572 = sand.u32 %s238, 1
          %s3573 = smul.addr %s3572, 64
          %s3574 = scalar_lea.vmem [#allocation11], %s3573
          %3576 = dma.done %s3571, 1024
        $region80: #{tpu_custom_call.1} parent=75 // pred_fallthru
          _
      $region76: #{tpu_custom_call.1} parent=5 // pred_fallthru
        _
    $region6: #{tpu_custom_call.1} parent=1 // loop_footer
      %s28 = sadd.s32 1, %s24
    $region7: #{tpu_custom_call.1} parent=1 // loop_footer_branch
      %23 = sbr.rel target = $region3
    $region8: #{tpu_custom_call.1} parent=1 // loop_exit
      _
    %3577 = vsyncpa [#allocation7], 1
    %s3578 = scalar_lea.sflag [#allocation7], 1
    %3579 = vsyncpa %s3578, 1
    %3580 = vsyncpa [#allocation10], 1
    %s3581 = scalar_lea.sflag [#allocation10], 1
    %3582 = vsyncpa %s3581, 1
    %3583 = vsyncpa [#allocation8], 1
    %s3584 = scalar_lea.sflag [#allocation8], 1
    %3585 = vsyncpa %s3584, 1

</llo_original>
